<compile_context>
chip_gen: v7x
topology: tpu7x:2x2x1
jax: 0.10.0
libtpu: 0.0.40
codegen_flags: <defaults>
</compile_context>

<pallas_src>
import functools

import jax
import jax.numpy as jnp
from jax.experimental import pallas as pl
from jax.experimental.pallas import tpu as pltpu


# ----------------------------------------------------------------------------- kernel


def _fused_cnn_kernel(*refs, hw, inv_hw, t_hw, needs_mask, has_logits):
    if has_logits:
        (x_ref, bbw_ref, bbb_ref, embw_ref, scale_ref, shift_ref,
         logw_ref, logb_ref, emb_ref, logit_ref, acc_ref) = refs
    else:
        (x_ref, bbw_ref, bbb_ref, embw_ref, scale_ref, shift_ref,
         emb_ref, acc_ref) = refs

    h = pl.program_id(1)

    @pl.when(h == 0)
    def _init():
        acc_ref[...] = jnp.zeros_like(acc_ref)

    # ---- backbone tile: 1x1 conv over C on the MXU, bias + ReLU + partial pool -----
    x = x_ref[0]                                             # [t_hw, C]
    y = jnp.dot(x.astype(jnp.bfloat16), bbw_ref[...],        # bf16 MXU, f32 accumulate
                preferred_element_type=jnp.float32)           # [t_hw, F]
    y = jnp.maximum(y + bbb_ref[...], 0.0)                    # conv bias + ReLU
    if needs_mask:
        # zero out the zero-padded tail rows (only emitted when HW % t_hw != 0)
        row = h * t_hw + jax.lax.broadcasted_iota(jnp.int32, (t_hw, 1), 0)
        y = jnp.where(row < hw, y, 0.0)
    # grouped, sublane-aligned partial pool -> [8, F] accumulator (no per-tile XLU reduce)
    acc_ref[...] += jnp.sum(y.reshape(t_hw // 8, 8, y.shape[-1]), axis=0)

    # ---- head (only at the last spatial tile) --------------------------------------
    @pl.when(h == pl.num_programs(1) - 1)
    def _head():
        feat = jnp.sum(acc_ref[...], axis=0, keepdims=True) * inv_hw     # [1, F] (f32)
        # embedding = BatchNorm1d(Linear(feat)) in eval mode, BN folded into scale/shift
        emb = jnp.dot(feat, embw_ref[...].astype(jnp.float32),
                      preferred_element_type=jnp.float32)                 # [1, E]
        emb = emb * scale_ref[...] + shift_ref[...]
        emb_ref[0] = emb
        if has_logits:
            # logits = Linear(ReLU(Dropout(emb))); dropout = identity in eval
            z = jnp.maximum(emb, 0.0)
            logit_ref[0] = (jnp.dot(z, logw_ref[...],
                                    preferred_element_type=jnp.float32)
                            + logb_ref[...])


# ----------------------------------------------------------------------------- wrapper


def cnn_forward(params, x_nchw, *, bn_eps=1e-5):
    B, C, H, W = x_nchw.shape
    HW = H * W
    F = params["bb_w"].shape[1]
    E = params["emb_w"].shape[1]
    has_logits = "log_w" in params

    # Spatial tile: sublane-aligned, capped at 512 so the [t_hw, F] f32 intermediate
    # plus double-buffered weights also fit comfortably in v7x's 64 MiB VMEM.
    t_hw = min(512, -(-HW // 8) * 8)
    n_h = -(-HW // t_hw)
    hw_pad = n_h * t_hw
    needs_mask = hw_pad != HW

    # Fold eval-mode BN into per-feature scale/shift applied after feat @ W:
    #   emb = (feat @ W + b - mean) * gamma / sqrt(var + eps) + beta
    inv_std = jax.lax.rsqrt(params["bn_var"] + bn_eps)
    scale = (params["bn_gamma"] * inv_std).reshape(1, E)
    shift = ((params["emb_b"] - params["bn_mean"]) * params["bn_gamma"] * inv_std
             + params["bn_beta"]).reshape(1, E)

    # NCHW -> [B, HW, C] (spatial on sublanes, C on the MXU contraction); zero-pad tail.
    x3 = jnp.transpose(x_nchw.reshape(B, C, HW), (0, 2, 1))
    if needs_mask:
        x3 = jnp.pad(x3, ((0, 0), (0, hw_pad - HW), (0, 0)))

    bb_w = params["bb_w"].astype(jnp.bfloat16)                # [C, F] for the MXU
    bb_b = params["bb_b"].reshape(1, F)
    emb_w = params["emb_w"].astype(jnp.bfloat16)               # [F, E]

    def _const(arr):
        nd = arr.ndim
        return pl.BlockSpec(arr.shape, lambda b, h, _nd=nd: (0,) * _nd)

    in_specs = [
        pl.BlockSpec((1, t_hw, C), lambda b, h: (b, h, 0)),
        _const(bb_w), _const(bb_b), _const(emb_w), _const(scale), _const(shift),
    ]
    inputs = [x3, bb_w, bb_b, emb_w, scale, shift]

    if has_logits:
        n_cls = params["log_w"].shape[1]
        n_pad = -(-n_cls // 128) * 128                        # lane-dense logits slab
        log_w = jnp.zeros((E, n_pad), jnp.float32).at[:, :n_cls].set(params["log_w"])
        log_b = jnp.zeros((1, n_pad), jnp.float32).at[0, :n_cls].set(params["log_b"])
        in_specs += [_const(log_w), _const(log_b)]
        inputs += [log_w, log_b]
        out_shape = (jax.ShapeDtypeStruct((B, 1, E), jnp.float32),
                     jax.ShapeDtypeStruct((B, 1, n_pad), jnp.float32))
        out_specs = (pl.BlockSpec((1, 1, E), lambda b, h: (b, 0, 0)),
                     pl.BlockSpec((1, 1, n_pad), lambda b, h: (b, 0, 0)))
    else:
        out_shape = jax.ShapeDtypeStruct((B, 1, E), jnp.float32)
        out_specs = pl.BlockSpec((1, 1, E), lambda b, h: (b, 0, 0))

    kernel = functools.partial(_fused_cnn_kernel, hw=HW, inv_hw=1.0 / HW,
                               t_hw=t_hw, needs_mask=needs_mask,
                               has_logits=has_logits)

    out = pl.pallas_call(
        kernel,
        out_shape=out_shape,
        grid=(B, n_h),
        in_specs=in_specs,
        out_specs=out_specs,
        scratch_shapes=[pltpu.VMEM((8, F), jnp.float32)],     # sublane-aligned pool acc
        compiler_params=pltpu.CompilerParams(
            dimension_semantics=("parallel", "arbitrary"),
            vmem_limit_bytes=48 * 1024 * 1024),
    )(*inputs)

    if has_logits:
        emb, logit_pad = out
        return emb[:, 0, :], logit_pad[:, 0, :n_cls]
    return out[:, 0, :]


# ----------------------------------------------------------------------------- params


def init_params(key, c_in=4, feat_dim=2048, emb_dim=256, num_classes=8):
    ks = jax.random.split(key, 10)
    p = {
        # backbone stand-in: 1x1 conv C_in -> 2048
        "bb_w": jax.random.normal(ks[0], (c_in, feat_dim), jnp.float32) * 0.05,
        "bb_b": jax.random.normal(ks[1], (feat_dim,), jnp.float32) * 0.05,
        # embedding: Linear(2048, emb_dim) + BatchNorm1d(emb_dim) (eval / running stats)
        "emb_w": (jax.random.normal(ks[2], (feat_dim, emb_dim), jnp.float32)
                  * 0.02).astype(jnp.bfloat16),
        "emb_b": jax.random.normal(ks[3], (emb_dim,), jnp.float32) * 0.02,
        "bn_gamma": 1.0 + 0.1 * jax.random.normal(ks[4], (emb_dim,), jnp.float32),
        "bn_beta": 0.1 * jax.random.normal(ks[5], (emb_dim,), jnp.float32),
        "bn_mean": 0.1 * jax.random.normal(ks[6], (emb_dim,), jnp.float32),
        "bn_var": 1.0 + jnp.abs(jax.random.normal(ks[7], (emb_dim,), jnp.float32)) * 0.1,
    }
    if num_classes is not None:
        p["log_w"] = jax.random.normal(ks[8], (emb_dim, num_classes), jnp.float32) * 0.02
        p["log_b"] = jax.random.normal(ks[9], (num_classes,), jnp.float32) * 0.02
    return p


def _reference(params, x, bn_eps=1e-5):
    """Pure-JAX reference of the same forward pass (for a sanity check)."""
    B, C, H, W = x.shape
    xr = x.reshape(B, C, H * W)
    y = jnp.einsum("bcp,cf->bpf", xr, params["bb_w"]) + params["bb_b"]
    feat = jnp.mean(jnp.maximum(y, 0.0), axis=1)
    emb = feat @ params["emb_w"].astype(jnp.float32) + params["emb_b"]
    emb = ((emb - params["bn_mean"]) * jax.lax.rsqrt(params["bn_var"] + bn_eps)
           * params["bn_gamma"] + params["bn_beta"])
    logit = jnp.maximum(emb, 0.0) @ params["log_w"] + params["log_b"]
    return emb, logit


# ----------------------------------------------------------------------------- main

if __name__ == "__main__":
    key = jax.random.PRNGKey(0)
    k_param, k_x = jax.random.split(key)

    B, C, H, W = 2, 4, 16, 16
    emb_dim, num_classes = 256, 8

    params = init_params(k_param, c_in=C, feat_dim=2048,
                         emb_dim=emb_dim, num_classes=num_classes)
    x = jax.random.normal(k_x, (B, C, H, W), jnp.float32)

    emb, logit = jax.jit(cnn_forward)(params, x)
    jax.block_until_ready((emb, logit))

    assert emb.shape == (B, emb_dim) and logit.shape == (B, num_classes)
    assert bool(jnp.all(jnp.isfinite(emb))) and bool(jnp.all(jnp.isfinite(logit)))

    emb_ref, logit_ref = _reference(params, x)
    assert bool(jnp.allclose(emb, emb_ref, rtol=5e-2, atol=5e-2))
    assert bool(jnp.allclose(logit, logit_ref, rtol=5e-2, atol=5e-2))

    print("KERNEL_OK")
</pallas_src>

<mosaic_0001>
module attributes {stable_mosaic.version = 11 : i64} {
  func.func @_fused_cnn_kernel(%arg0: i32, %arg1: i32, %arg2: memref<1x256x4xf32, #tpu.memory_space<vmem>>, %arg3: memref<4x2048xbf16, #tpu.memory_space<vmem>>, %arg4: memref<1x2048xf32, #tpu.memory_space<vmem>>, %arg5: memref<2048x256xbf16, #tpu.memory_space<vmem>>, %arg6: memref<1x256xf32, #tpu.memory_space<vmem>>, %arg7: memref<1x256xf32, #tpu.memory_space<vmem>>, %arg8: memref<256x128xf32, #tpu.memory_space<vmem>>, %arg9: memref<1x128xf32, #tpu.memory_space<vmem>>, %arg10: memref<1x1x256xf32, #tpu.memory_space<vmem>>, %arg11: memref<1x1x128xf32, #tpu.memory_space<vmem>>, %arg12: memref<8x2048xf32, #tpu.memory_space<vmem>>) attributes {dimension_semantics = [#tpu.dimension_semantics<parallel>, #tpu.dimension_semantics<arbitrary>], iteration_bounds = array<i64: 2, 1>, scalar_prefetch = 0 : i64, scratch_operands = 1 : i64, tpu.core_type = #tpu.core_type<tc>, window_params = [{transform_indices = @transform_0, window_bounds = array<i64: 1, 256, 4>}, {pipeline_mode = #tpu.pipeline_mode<synchronous>, transform_indices = @transform_1, window_bounds = array<i64: 4, 2048>}, {pipeline_mode = #tpu.pipeline_mode<synchronous>, transform_indices = @transform_2, window_bounds = array<i64: 1, 2048>}, {pipeline_mode = #tpu.pipeline_mode<synchronous>, transform_indices = @transform_3, window_bounds = array<i64: 2048, 256>}, {pipeline_mode = #tpu.pipeline_mode<synchronous>, transform_indices = @transform_4, window_bounds = array<i64: 1, 256>}, {pipeline_mode = #tpu.pipeline_mode<synchronous>, transform_indices = @transform_5, window_bounds = array<i64: 1, 256>}, {pipeline_mode = #tpu.pipeline_mode<synchronous>, transform_indices = @transform_6, window_bounds = array<i64: 256, 128>}, {pipeline_mode = #tpu.pipeline_mode<synchronous>, transform_indices = @transform_7, window_bounds = array<i64: 1, 128>}, {transform_indices = @transform_8, window_bounds = array<i64: 1, 1, 256>}, {transform_indices = @transform_9, window_bounds = array<i64: 1, 1, 128>}]} {
    %c0_i32 = arith.constant 0 : i32
    %0 = arith.cmpi eq, %arg1, %c0_i32 : i32
    %1 = arith.extui %0 : i1 to i32
    %c0_i32_0 = arith.constant 0 : i32
    %2 = arith.cmpi ne, %1, %c0_i32_0 : i32
    scf.if %2 {
      %cst_15 = arith.constant 0.000000e+00 : f32
      %21 = vector.broadcast %cst_15 : f32 to vector<8x2048xf32>
      %c0_16 = arith.constant 0 : index
      %c0_17 = arith.constant 0 : index
      %22 = vector.load %arg12[%c0_16, %c0_17] : memref<8x2048xf32, #tpu.memory_space<vmem>>, vector<8x2048xf32>
      tpu.vector_store %arg12[%c0_16, %c0_17], %21 {strides = array<i32>} : memref<8x2048xf32, #tpu.memory_space<vmem>>, vector<8x2048xf32>,
    } else {
    }
    %c0 = arith.constant 0 : index
    %c0_1 = arith.constant 0 : index
    %c0_2 = arith.constant 0 : index
    %3 = vector.load %arg2[%c0, %c0_1, %c0_2] : memref<1x256x4xf32, #tpu.memory_space<vmem>>, vector<1x256x4xf32>
    %4 = vector.shape_cast %3 : vector<1x256x4xf32> to vector<256x4xf32>
    %5 = arith.truncf %4 : vector<256x4xf32> to vector<256x4xbf16>
    %c0_3 = arith.constant 0 : index
    %c0_4 = arith.constant 0 : index
    %6 = vector.load %arg3[%c0_3, %c0_4] : memref<4x2048xbf16, #tpu.memory_space<vmem>>, vector<4x2048xbf16>
    %cst = arith.constant dense<0.000000e+00> : vector<256x2048xf32>
    %7 = tpu.matmul %5, %6, %cst {dimension_numbers = #tpu.dot_dimension_numbers<[1], [0], [0], [1], [0, 0, 1, 1], [], []>} : vector<256x4xbf16>, vector<4x2048xbf16>, vector<256x2048xf32> -> vector<256x2048xf32>
    %c0_5 = arith.constant 0 : index
    %c0_6 = arith.constant 0 : index
    %8 = vector.load %arg4[%c0_5, %c0_6] : memref<1x2048xf32, #tpu.memory_space<vmem>>, vector<1x2048xf32>
    %9 = vector.broadcast %8 : vector<1x2048xf32> to vector<256x2048xf32>
    %10 = arith.addf %7, %9 : vector<256x2048xf32>
    %cst_7 = arith.constant 0.000000e+00 : f32
    %11 = vector.broadcast %cst_7 : f32 to vector<256x2048xf32>
    %12 = arith.maximumf %10, %11 : vector<256x2048xf32>
    %c0_8 = arith.constant 0 : index
    %c0_9 = arith.constant 0 : index
    %13 = vector.load %arg12[%c0_8, %c0_9] : memref<8x2048xf32, #tpu.memory_space<vmem>>, vector<8x2048xf32>
    %14 = vector.shape_cast %12 : vector<256x2048xf32> to vector<32x8x2048xf32>
    %cst_10 = arith.constant dense<0.000000e+00> : vector<8x2048xf32>
    %15 = vector.multi_reduction <add>, %14, %cst_10 [0] : vector<32x8x2048xf32> to vector<8x2048xf32>
    %16 = arith.addf %13, %15 : vector<8x2048xf32>
    %c0_11 = arith.constant 0 : index
    %c0_12 = arith.constant 0 : index
    %17 = vector.load %arg12[%c0_11, %c0_12] : memref<8x2048xf32, #tpu.memory_space<vmem>>, vector<8x2048xf32>
    tpu.vector_store %arg12[%c0_11, %c0_12], %16 {strides = array<i32>} : memref<8x2048xf32, #tpu.memory_space<vmem>>, vector<8x2048xf32>,
    %c0_i32_13 = arith.constant 0 : i32
    %18 = arith.cmpi eq, %arg1, %c0_i32_13 : i32
    %19 = arith.extui %18 : i1 to i32
    %c0_i32_14 = arith.constant 0 : i32
    %20 = arith.cmpi ne, %19, %c0_i32_14 : i32
    scf.if %20 {
      %c0_15 = arith.constant 0 : index
      %c0_16 = arith.constant 0 : index
      %21 = vector.load %arg12[%c0_15, %c0_16] : memref<8x2048xf32, #tpu.memory_space<vmem>>, vector<8x2048xf32>
      %cst_17 = arith.constant dense<0.000000e+00> : vector<2048xf32>
      %22 = vector.multi_reduction <add>, %21, %cst_17 [0] : vector<8x2048xf32> to vector<2048xf32>
      %23 = vector.shape_cast %22 : vector<2048xf32> to vector<1x2048xf32>
      %cst_18 = arith.constant 3.906250e-03 : f32
      %24 = vector.broadcast %cst_18 : f32 to vector<1x2048xf32>
      %25 = arith.mulf %23, %24 : vector<1x2048xf32>
      %c0_19 = arith.constant 0 : index
      %c0_20 = arith.constant 0 : index
      %26 = vector.load %arg5[%c0_19, %c0_20] : memref<2048x256xbf16, #tpu.memory_space<vmem>>, vector<2048x256xbf16>
      %27 = arith.extf %26 : vector<2048x256xbf16> to vector<2048x256xf32>
      %cst_21 = arith.constant dense<0.000000e+00> : vector<1x256xf32>
      %28 = tpu.matmul %25, %27, %cst_21 {dimension_numbers = #tpu.dot_dimension_numbers<[1], [0], [0], [1], [0, 0, 1, 1], [], []>} : vector<1x2048xf32>, vector<2048x256xf32>, vector<1x256xf32> -> vector<1x256xf32>
      %c0_22 = arith.constant 0 : index
      %c0_23 = arith.constant 0 : index
      %29 = vector.load %arg6[%c0_22, %c0_23] : memref<1x256xf32, #tpu.memory_space<vmem>>, vector<1x256xf32>
      %30 = arith.mulf %28, %29 : vector<1x256xf32>
      %c0_24 = arith.constant 0 : index
      %c0_25 = arith.constant 0 : index
      %31 = vector.load %arg7[%c0_24, %c0_25] : memref<1x256xf32, #tpu.memory_space<vmem>>, vector<1x256xf32>
      %32 = arith.addf %30, %31 : vector<1x256xf32>
      %c0_26 = arith.constant 0 : index
      %c0_27 = arith.constant 0 : index
      %c0_28 = arith.constant 0 : index
      %33 = vector.load %arg10[%c0_26, %c0_27, %c0_28] : memref<1x1x256xf32, #tpu.memory_space<vmem>>, vector<1x1x256xf32>
      %34 = vector.shape_cast %33 : vector<1x1x256xf32> to vector<1x256xf32>
      %35 = vector.shape_cast %32 : vector<1x256xf32> to vector<1x1x256xf32>
      tpu.vector_store %arg10[%c0_26, %c0_27, %c0_28], %35 {strides = array<i32>} : memref<1x1x256xf32, #tpu.memory_space<vmem>>, vector<1x1x256xf32>,
      %cst_29 = arith.constant 0.000000e+00 : f32
      %36 = vector.broadcast %cst_29 : f32 to vector<1x256xf32>
      %37 = arith.maximumf %32, %36 : vector<1x256xf32>
      %c0_30 = arith.constant 0 : index
      %c0_31 = arith.constant 0 : index
      %38 = vector.load %arg8[%c0_30, %c0_31] : memref<256x128xf32, #tpu.memory_space<vmem>>, vector<256x128xf32>
      %cst_32 = arith.constant dense<0.000000e+00> : vector<1x128xf32>
      %39 = tpu.matmul %37, %38, %cst_32 {dimension_numbers = #tpu.dot_dimension_numbers<[1], [0], [0], [1], [0, 0, 1, 1], [], []>} : vector<1x256xf32>, vector<256x128xf32>, vector<1x128xf32> -> vector<1x128xf32>
      %c0_33 = arith.constant 0 : index
      %c0_34 = arith.constant 0 : index
      %40 = vector.load %arg9[%c0_33, %c0_34] : memref<1x128xf32, #tpu.memory_space<vmem>>, vector<1x128xf32>
      %41 = arith.addf %39, %40 : vector<1x128xf32>
      %c0_35 = arith.constant 0 : index
      %c0_36 = arith.constant 0 : index
      %c0_37 = arith.constant 0 : index
      %42 = vector.load %arg11[%c0_35, %c0_36, %c0_37] : memref<1x1x128xf32, #tpu.memory_space<vmem>>, vector<1x1x128xf32>
      %43 = vector.shape_cast %42 : vector<1x1x128xf32> to vector<1x128xf32>
      %44 = vector.shape_cast %41 : vector<1x128xf32> to vector<1x1x128xf32>
      tpu.vector_store %arg11[%c0_35, %c0_36, %c0_37], %44 {strides = array<i32>} : memref<1x1x128xf32, #tpu.memory_space<vmem>>, vector<1x1x128xf32>,
    } else {
    }
    return
  }
  func.func @transform_0(%arg0: i32, %arg1: i32) -> (i32, i32, i32) {
    %c0_i32 = arith.constant 0 : i32
    %c0_i32_0 = arith.constant 0 : i32
    return %arg0, %arg1, %c0_i32 : i32, i32, i32
  }
  func.func @transform_1(%arg0: i32, %arg1: i32) -> (i32, i32) {
    %c0_i32 = arith.constant 0 : i32
    %c0_i32_0 = arith.constant 0 : i32
    %c0_i32_1 = arith.constant 0 : i32
    return %c0_i32, %c0_i32_0 : i32, i32
  }
  func.func @transform_2(%arg0: i32, %arg1: i32) -> (i32, i32) {
    %c0_i32 = arith.constant 0 : i32
    %c0_i32_0 = arith.constant 0 : i32
    %c0_i32_1 = arith.constant 0 : i32
    return %c0_i32, %c0_i32_0 : i32, i32
  }
  func.func @transform_3(%arg0: i32, %arg1: i32) -> (i32, i32) {
    %c0_i32 = arith.constant 0 : i32
    %c0_i32_0 = arith.constant 0 : i32
    %c0_i32_1 = arith.constant 0 : i32
    return %c0_i32, %c0_i32_0 : i32, i32
  }
  func.func @transform_4(%arg0: i32, %arg1: i32) -> (i32, i32) {
    %c0_i32 = arith.constant 0 : i32
    %c0_i32_0 = arith.constant 0 : i32
    %c0_i32_1 = arith.constant 0 : i32
    return %c0_i32, %c0_i32_0 : i32, i32
  }
  func.func @transform_5(%arg0: i32, %arg1: i32) -> (i32, i32) {
    %c0_i32 = arith.constant 0 : i32
    %c0_i32_0 = arith.constant 0 : i32
    %c0_i32_1 = arith.constant 0 : i32
    return %c0_i32, %c0_i32_0 : i32, i32
  }
  func.func @transform_6(%arg0: i32, %arg1: i32) -> (i32, i32) {
    %c0_i32 = arith.constant 0 : i32
    %c0_i32_0 = arith.constant 0 : i32
    %c0_i32_1 = arith.constant 0 : i32
    return %c0_i32, %c0_i32_0 : i32, i32
  }
  func.func @transform_7(%arg0: i32, %arg1: i32) -> (i32, i32) {
    %c0_i32 = arith.constant 0 : i32
    %c0_i32_0 = arith.constant 0 : i32
    %c0_i32_1 = arith.constant 0 : i32
    return %c0_i32, %c0_i32_0 : i32, i32
  }
  func.func @transform_8(%arg0: i32, %arg1: i32) -> (i32, i32, i32) {
    %c0_i32 = arith.constant 0 : i32
    %c0_i32_0 = arith.constant 0 : i32
    %c0_i32_1 = arith.constant 0 : i32
    return %arg0, %c0_i32, %c0_i32_0 : i32, i32, i32
  }
  func.func @transform_9(%arg0: i32, %arg1: i32) -> (i32, i32, i32) {
    %c0_i32 = arith.constant 0 : i32
    %c0_i32_0 = arith.constant 0 : i32
    %c0_i32_1 = arith.constant 0 : i32
    return %arg0, %c0_i32, %c0_i32_0 : i32, i32, i32
  }
}

</mosaic_0001>

<llo_original>
// kernel: cnn_forward.1
$region0: #{cnn_forward.1}
  #allocation0 [shape = 'u32[]', space=smem, size = 0x4, offset = 0x4, fixed_abs, tag = 'smem constant byte address 0x4 - core index']
  #allocation1 [shape = 'u32[144,128]{1,0:T(1,128)}', space=vmem, size = 0x12000, scoped, tag = 'internal scratch']
  #allocation2 [shape = 'f32[8,2048]{1,0:T(8,128)}', space=vmem, size = 0x10000, scoped, tag = 'scratch operand']
  %s0 = inlined_call_operand.vmem [shape: f32[2,256,4], index: 0, kind: input, shape index: {}]
  %s1 = inlined_call_operand.vmem [shape: bf16[4,2048], index: 1, kind: input, shape index: {}]
  %s2 = inlined_call_operand.vmem [shape: f32[1,2048], index: 2, kind: input, shape index: {}]
  %s3 = inlined_call_operand.vmem [shape: bf16[2048,256], index: 3, kind: input, shape index: {}]
  %s4 = inlined_call_operand.vmem [shape: f32[1,256], index: 4, kind: input, shape index: {}]
  %s5 = inlined_call_operand.vmem [shape: f32[1,256], index: 5, kind: input, shape index: {}]
  %s6 = inlined_call_operand.vmem [shape: f32[256,128], index: 6, kind: input, shape index: {}]
  %s7 = inlined_call_operand.vmem [shape: f32[1,128], index: 7, kind: input, shape index: {}]
  %s8 = inlined_call_operand.vmem [shape: f32[2,1,256], index: 8, kind: output, shape index: {0}]
  %s9 = inlined_call_operand.hbm [shape: f32[2,1,128], index: 9, kind: output, shape index: {1}]
  %10 = xla_tuple %s8, %s9
  %s11 = sld [smem:[#allocation0]]
  $region81: #{cnn_forward.1} parent=0
    _
  %s13 = ssub.s32 1, %s11
  %s14 = scalar_select 0, %s13, %s11
  $region1: #{cnn_forward.1} parent=0
    #allocation3 [shape = 'u8[1024]{0}', space=vmem, size = 0x400, scoped, tag = 'output window, operand 1']
    #allocation4 [shape = 's32[2]{0}', space=sflag, size = 0x8, scoped, tag = 'scoped memory for cnn_forward.1']
    %15 = vsyncpa [#allocation4], 0
    %s16 = scalar_lea.sflag [#allocation4], 1
    %17 = vsyncpa %s16, 0
    loop: start=0, step=1, limit=4
    $region2: #{cnn_forward.1} parent=1 // loop_pre_header
      _
    $region3: #{cnn_forward.1} parent=1 // loop_header
      %s19 = sphi 0, %s23
      %p20 = scmp.ge.s32.totalorder %s19, 4
      %s26 = sphi 0, %s38
      %s27 = sphi 0, %s34
      %s28 = sphi 0, %s26
      %s29 = sphi 0, %s27
      %s30 = sphi 0, %s28
      %s31 = sphi 0, %s29
      %s43 = sphi 0, %s45
      %s46 = sphi 0, %s43
      %s47 = sphi 0, %s46
      %s63 = sphi 0, %s47
      %s67 = sphi 0, %s67
      %s69 = sphi 0, %s67
      %s70 = sphi 0, %s69
      %s84 = sphi 0, %s70
      %s88 = sphi 0, %s88
      %s90 = sphi 0, %s88
      %s91 = sphi 0, %s90
      %s105 = sphi 0, %s91
      %s109 = sphi 0, %s109
      %s111 = sphi 0, %s109
      %s112 = sphi 0, %s111
      %s126 = sphi 0, %s112
      %s130 = sphi 0, %s130
      %s132 = sphi 0, %s130
      %s133 = sphi 0, %s132
      %s147 = sphi 0, %s133
      %s151 = sphi 0, %s151
      %s153 = sphi 0, %s151
      %s154 = sphi 0, %s153
      %s168 = sphi 0, %s154
      %s172 = sphi 0, %s172
      %s174 = sphi 0, %s172
      %s175 = sphi 0, %s174
      %s189 = sphi 0, %s175
      %s193 = sphi 0, %s193
      %s195 = sphi 0, %s193
      %s196 = sphi 0, %s195
      %s210 = sphi 0, %s196
      %s216 = sphi 0, %s218
      %s219 = sphi 0, %s216
      %s220 = sphi 0, %s219
      %s236 = sphi 0, %s220
      %s242 = sphi 0, %s244
      %s245 = sphi 0, %s242
      %s246 = sphi 0, %s245
      %s262 = sphi 0, %s246
    $region4: #{cnn_forward.1} parent=1 // loop_header_branch
      %22 = sbr.rel (%p20) target = $region8
    $region5: #{cnn_forward.1} parent=1 // loop_body
      %s24 = ssub.s32 %s19, 1
      %s25 = ssub.s32 %s19, 2
      %s32 = sadd.s32 1, %s27
      %p33 = scmp.ge.s32.totalorder %s32, 1
      %s34 = scalar_select %p33, 0, %s32
      %s35 = sadd.s32 1, %s26
      %s36 = scalar_select %p33, %s35, %s26
      %p37 = scmp.ge.s32.totalorder %s36, 2
      %s38 = scalar_select %p37, 0, %s36
      %s39 = ssub.s32 %s26, %s38
      %s40 = ssub.s32 %s27, %s34
      %s41 = sor.u32 %s39, %s40
      %p42 = scmp.eq.s32.totalorder %s41, 0
      %s44 = sadd.s32 %s43, 1
      %s45 = scalar_select %p42, %s43, %s44
      %p48 = pneg %p42
      %p49 = scmp.eq.s32.totalorder %s19, 1
      %p50 = por %p48, %p49
      %p51 = scmp.ne.s32.totalorder %s43, %s46
      %p52 = scmp.eq.s32.totalorder %s19, 0
      %p53 = por %p51, %p52
      %p54 = scmp.ne.s32.totalorder %s43, %s46
      %p55 = scmp.eq.s32.totalorder %s24, 1
      %p56 = por %p54, %p55
      %p57 = scmp.ne.s32.totalorder %s46, %s47
      %p58 = scmp.eq.s32.totalorder %s24, 0
      %p59 = por %p57, %p58
      %p60 = scmp.ne.s32.totalorder %s46, %s47
      %p61 = scmp.eq.s32.totalorder %s25, 1
      %p62 = por %p60, %p61
      %p64 = scmp.ne.s32.totalorder %s47, %s63
      %p65 = scmp.eq.s32.totalorder %s25, 0
      %p66 = por %p64, %p65
      %s68 = sadd.s32 %s67, 1
      %p71 = scmp.eq.s32.totalorder %s19, 1
      %p72 = scmp.ne.s32.totalorder %s67, %s69
      %p73 = scmp.eq.s32.totalorder %s19, 0
      %p74 = por %p72, %p73
      %p75 = scmp.ne.s32.totalorder %s67, %s69
      %p76 = scmp.eq.s32.totalorder %s24, 1
      %p77 = por %p75, %p76
      %p78 = scmp.ne.s32.totalorder %s69, %s70
      %p79 = scmp.eq.s32.totalorder %s24, 0
      %p80 = por %p78, %p79
      %p81 = scmp.ne.s32.totalorder %s69, %s70
      %p82 = scmp.eq.s32.totalorder %s25, 1
      %p83 = por %p81, %p82
      %p85 = scmp.ne.s32.totalorder %s70, %s84
      %p86 = scmp.eq.s32.totalorder %s25, 0
      %p87 = por %p85, %p86
      %s89 = sadd.s32 %s88, 1
      %p92 = scmp.eq.s32.totalorder %s19, 1
      %p93 = scmp.ne.s32.totalorder %s88, %s90
      %p94 = scmp.eq.s32.totalorder %s19, 0
      %p95 = por %p93, %p94
      %p96 = scmp.ne.s32.totalorder %s88, %s90
      %p97 = scmp.eq.s32.totalorder %s24, 1
      %p98 = por %p96, %p97
      %p99 = scmp.ne.s32.totalorder %s90, %s91
      %p100 = scmp.eq.s32.totalorder %s24, 0
      %p101 = por %p99, %p100
      %p102 = scmp.ne.s32.totalorder %s90, %s91
      %p103 = scmp.eq.s32.totalorder %s25, 1
      %p104 = por %p102, %p103
      %p106 = scmp.ne.s32.totalorder %s91, %s105
      %p107 = scmp.eq.s32.totalorder %s25, 0
      %p108 = por %p106, %p107
      %s110 = sadd.s32 %s109, 1
      %p113 = scmp.eq.s32.totalorder %s19, 1
      %p114 = scmp.ne.s32.totalorder %s109, %s111
      %p115 = scmp.eq.s32.totalorder %s19, 0
      %p116 = por %p114, %p115
      %p117 = scmp.ne.s32.totalorder %s109, %s111
      %p118 = scmp.eq.s32.totalorder %s24, 1
      %p119 = por %p117, %p118
      %p120 = scmp.ne.s32.totalorder %s111, %s112
      %p121 = scmp.eq.s32.totalorder %s24, 0
      %p122 = por %p120, %p121
      %p123 = scmp.ne.s32.totalorder %s111, %s112
      %p124 = scmp.eq.s32.totalorder %s25, 1
      %p125 = por %p123, %p124
      %p127 = scmp.ne.s32.totalorder %s112, %s126
      %p128 = scmp.eq.s32.totalorder %s25, 0
      %p129 = por %p127, %p128
      %s131 = sadd.s32 %s130, 1
      %p134 = scmp.eq.s32.totalorder %s19, 1
      %p135 = scmp.ne.s32.totalorder %s130, %s132
      %p136 = scmp.eq.s32.totalorder %s19, 0
      %p137 = por %p135, %p136
      %p138 = scmp.ne.s32.totalorder %s130, %s132
      %p139 = scmp.eq.s32.totalorder %s24, 1
      %p140 = por %p138, %p139
      %p141 = scmp.ne.s32.totalorder %s132, %s133
      %p142 = scmp.eq.s32.totalorder %s24, 0
      %p143 = por %p141, %p142
      %p144 = scmp.ne.s32.totalorder %s132, %s133
      %p145 = scmp.eq.s32.totalorder %s25, 1
      %p146 = por %p144, %p145
      %p148 = scmp.ne.s32.totalorder %s133, %s147
      %p149 = scmp.eq.s32.totalorder %s25, 0
      %p150 = por %p148, %p149
      %s152 = sadd.s32 %s151, 1
      %p155 = scmp.eq.s32.totalorder %s19, 1
      %p156 = scmp.ne.s32.totalorder %s151, %s153
      %p157 = scmp.eq.s32.totalorder %s19, 0
      %p158 = por %p156, %p157
      %p159 = scmp.ne.s32.totalorder %s151, %s153
      %p160 = scmp.eq.s32.totalorder %s24, 1
      %p161 = por %p159, %p160
      %p162 = scmp.ne.s32.totalorder %s153, %s154
      %p163 = scmp.eq.s32.totalorder %s24, 0
      %p164 = por %p162, %p163
      %p165 = scmp.ne.s32.totalorder %s153, %s154
      %p166 = scmp.eq.s32.totalorder %s25, 1
      %p167 = por %p165, %p166
      %p169 = scmp.ne.s32.totalorder %s154, %s168
      %p170 = scmp.eq.s32.totalorder %s25, 0
      %p171 = por %p169, %p170
      %s173 = sadd.s32 %s172, 1
      %p176 = scmp.eq.s32.totalorder %s19, 1
      %p177 = scmp.ne.s32.totalorder %s172, %s174
      %p178 = scmp.eq.s32.totalorder %s19, 0
      %p179 = por %p177, %p178
      %p180 = scmp.ne.s32.totalorder %s172, %s174
      %p181 = scmp.eq.s32.totalorder %s24, 1
      %p182 = por %p180, %p181
      %p183 = scmp.ne.s32.totalorder %s174, %s175
      %p184 = scmp.eq.s32.totalorder %s24, 0
      %p185 = por %p183, %p184
      %p186 = scmp.ne.s32.totalorder %s174, %s175
      %p187 = scmp.eq.s32.totalorder %s25, 1
      %p188 = por %p186, %p187
      %p190 = scmp.ne.s32.totalorder %s175, %s189
      %p191 = scmp.eq.s32.totalorder %s25, 0
      %p192 = por %p190, %p191
      %s194 = sadd.s32 %s193, 1
      %p197 = scmp.eq.s32.totalorder %s19, 1
      %p198 = scmp.ne.s32.totalorder %s193, %s195
      %p199 = scmp.eq.s32.totalorder %s19, 0
      %p200 = por %p198, %p199
      %p201 = scmp.ne.s32.totalorder %s193, %s195
      %p202 = scmp.eq.s32.totalorder %s24, 1
      %p203 = por %p201, %p202
      %p204 = scmp.ne.s32.totalorder %s195, %s196
      %p205 = scmp.eq.s32.totalorder %s24, 0
      %p206 = por %p204, %p205
      %p207 = scmp.ne.s32.totalorder %s195, %s196
      %p208 = scmp.eq.s32.totalorder %s25, 1
      %p209 = por %p207, %p208
      %p211 = scmp.ne.s32.totalorder %s196, %s210
      %p212 = scmp.eq.s32.totalorder %s25, 0
      %p213 = por %p211, %p212
      %s214 = ssub.s32 %s26, %s38
      %p215 = scmp.eq.s32.totalorder %s214, 0
      %s217 = sadd.s32 %s216, 1
      %s218 = scalar_select %p215, %s216, %s217
      %p221 = pneg %p215
      %p222 = scmp.eq.s32.totalorder %s19, 1
      %p223 = por %p221, %p222
      %p224 = scmp.ne.s32.totalorder %s216, %s219
      %p225 = scmp.eq.s32.totalorder %s19, 0
      %p226 = por %p224, %p225
      %p227 = scmp.ne.s32.totalorder %s216, %s219
      %p228 = scmp.eq.s32.totalorder %s24, 1
      %p229 = por %p227, %p228
      %p230 = scmp.ne.s32.totalorder %s219, %s220
      %p231 = scmp.eq.s32.totalorder %s24, 0
      %p232 = por %p230, %p231
      %p233 = scmp.ne.s32.totalorder %s219, %s220
      %p234 = scmp.eq.s32.totalorder %s25, 1
      %p235 = por %p233, %p234
      %p237 = scmp.ne.s32.totalorder %s220, %s236
      %p238 = scmp.eq.s32.totalorder %s25, 0
      %p239 = por %p237, %p238
      %s240 = ssub.s32 %s26, %s38
      %p241 = scmp.eq.s32.totalorder %s240, 0
      %s243 = sadd.s32 %s242, 1
      %s244 = scalar_select %p241, %s242, %s243
      %p247 = pneg %p241
      %p248 = scmp.eq.s32.totalorder %s19, 1
      %p249 = por %p247, %p248
      %p250 = scmp.ne.s32.totalorder %s242, %s245
      %p251 = scmp.eq.s32.totalorder %s19, 0
      %p252 = por %p250, %p251
      %p253 = scmp.ne.s32.totalorder %s242, %s245
      %p254 = scmp.eq.s32.totalorder %s24, 1
      %p255 = por %p253, %p254
      %p256 = scmp.ne.s32.totalorder %s245, %s246
      %p257 = scmp.eq.s32.totalorder %s24, 0
      %p258 = por %p256, %p257
      %p259 = scmp.ne.s32.totalorder %s245, %s246
      %p260 = scmp.eq.s32.totalorder %s25, 1
      %p261 = por %p259, %p260
      %p263 = scmp.ne.s32.totalorder %s246, %s262
      %p264 = scmp.eq.s32.totalorder %s25, 0
      %p265 = por %p263, %p264
      %p266 = scmp.le.s32.totalorder 1, %s19
      %p267 = scmp.lt.s32.totalorder %s19, 3
      %p268 = pnand %p266, %p267
      %p269 = pneg %p268
      // Predicated region
      $region9: #{cnn_forward.1} parent=5 // pred_check
        _
      $region10: #{cnn_forward.1} parent=5 // pred_check_branch
        %271 = sbr.rel (%p268) target = $region12
      $region11: #{cnn_forward.1} parent=5 // pred_region
        %s272 = ssub.s32 %s19, 1
        // Predicated region
        $region13: #{cnn_forward.1} parent=11 // pred_check
          %p273 = pneg %p80
        $region14: #{cnn_forward.1} parent=11 // pred_check_branch
          %275 = sbr.rel (%p273) target = $region16
        $region15: #{cnn_forward.1} parent=11 // pred_region
          _
        $region16: #{cnn_forward.1} parent=11 // pred_fallthru
          _
        // Predicated region
        $region17: #{cnn_forward.1} parent=11 // pred_check
          %p276 = pneg %p101
        $region18: #{cnn_forward.1} parent=11 // pred_check_branch
          %278 = sbr.rel (%p276) target = $region20
        $region19: #{cnn_forward.1} parent=11 // pred_region
          _
        $region20: #{cnn_forward.1} parent=11 // pred_fallthru
          _
        // Predicated region
        $region21: #{cnn_forward.1} parent=11 // pred_check
          %p279 = pneg %p122
        $region22: #{cnn_forward.1} parent=11 // pred_check_branch
          %281 = sbr.rel (%p279) target = $region24
        $region23: #{cnn_forward.1} parent=11 // pred_region
          _
        $region24: #{cnn_forward.1} parent=11 // pred_fallthru
          _
        // Predicated region
        $region25: #{cnn_forward.1} parent=11 // pred_check
          %p282 = pneg %p143
        $region26: #{cnn_forward.1} parent=11 // pred_check_branch
          %284 = sbr.rel (%p282) target = $region28
        $region27: #{cnn_forward.1} parent=11 // pred_region
          _
        $region28: #{cnn_forward.1} parent=11 // pred_fallthru
          _
        // Predicated region
        $region29: #{cnn_forward.1} parent=11 // pred_check
          %p285 = pneg %p164
        $region30: #{cnn_forward.1} parent=11 // pred_check_branch
          %287 = sbr.rel (%p285) target = $region32
        $region31: #{cnn_forward.1} parent=11 // pred_region
          _
        $region32: #{cnn_forward.1} parent=11 // pred_fallthru
          _
        // Predicated region
        $region33: #{cnn_forward.1} parent=11 // pred_check
          %p288 = pneg %p185
        $region34: #{cnn_forward.1} parent=11 // pred_check_branch
          %290 = sbr.rel (%p288) target = $region36
        $region35: #{cnn_forward.1} parent=11 // pred_region
          _
        $region36: #{cnn_forward.1} parent=11 // pred_fallthru
          _
        // Predicated region
        $region37: #{cnn_forward.1} parent=11 // pred_check
          %p291 = pneg %p206
        $region38: #{cnn_forward.1} parent=11 // pred_check_branch
          %293 = sbr.rel (%p291) target = $region40
        $region39: #{cnn_forward.1} parent=11 // pred_region
          _
        $region40: #{cnn_forward.1} parent=11 // pred_fallthru
          _
      $region12: #{cnn_forward.1} parent=5 // pred_fallthru
        _
      %p294 = scmp.lt.s32.totalorder %s19, 2
      // Predicated region
      $region41: #{cnn_forward.1} parent=5 // pred_check
        %p295 = pneg %p294
      $region42: #{cnn_forward.1} parent=5 // pred_check_branch
        %297 = sbr.rel (%p295) target = $region44
      $region43: #{cnn_forward.1} parent=5 // pred_region
        // Predicated region
        $region45: #{cnn_forward.1} parent=43 // pred_check
          %p298 = pneg %p53
        $region46: #{cnn_forward.1} parent=43 // pred_check_branch
          %300 = sbr.rel (%p298) target = $region48
        $region47: #{cnn_forward.1} parent=43 // pred_region
          %s301 = smul.u32 32, %s27
          %p302 = scmp.lt.s32.totalorder %s26, 1
          %s303 = scalar_select %p302, %s26, 1
          %p304 = scmp.lt.s32.totalorder %s301, 31
          %s305 = scalar_select %p304, %s301, 31
          %s306 = smul.addr %s303, 32
          %s307 = sadd.s32 %s305, %s306
          %s308 = smul.addr %s307, 8
          %s309 = scalar_lea.vmem %s0, %s308
          %s310 = smul.u32 32, %s27
        $region48: #{cnn_forward.1} parent=43 // pred_fallthru
          _
      $region44: #{cnn_forward.1} parent=5 // pred_fallthru
        _
      %p311 = scmp.le.s32.totalorder 1, %s19
      %p312 = scmp.lt.s32.totalorder %s19, 3
      %p313 = pnand %p311, %p312
      %p314 = pneg %p313
      // Predicated region
      $region49: #{cnn_forward.1} parent=5 // pred_check
        _
      $region50: #{cnn_forward.1} parent=5 // pred_check_branch
        %316 = sbr.rel (%p313) target = $region52
      $region51: #{cnn_forward.1} parent=5 // pred_region
        %s317 = ssub.s32 %s19, 1
        %s318 = smul.u32 32, %s29
        %p319 = scmp.lt.s32.totalorder %s28, 1
        %s320 = scalar_select %p319, %s28, 1
        %p321 = scmp.lt.s32.totalorder %s318, 31
        %s322 = scalar_select %p321, %s318, 31
        %s323 = smul.addr %s320, 32
        %s324 = sadd.s32 %s322, %s323
        %s325 = smul.addr %s324, 8
        %s326 = scalar_lea.vmem %s0, %s325
        %p327 = pneg %p59
        %p328 = pneg %p56
        %p329 = pneg %p80
        %p330 = pneg %p77
        %p331 = pneg %p101
        %p332 = pneg %p98
        %p333 = pneg %p122
        %p334 = pneg %p119
        %p335 = pneg %p143
        %p336 = pneg %p140
        %p337 = pneg %p164
        %p338 = pneg %p161
        %p339 = pneg %p185
        %p340 = pneg %p182
        %p341 = pneg %p206
        %p342 = pneg %p203
        %p343 = pneg %p232
        %p344 = pneg %p229
        %p345 = scmp.lt.s32.totalorder %s28, 1
        %s346 = scalar_select %p345, %s28, 1
        %s347 = smul.addr %s346, 2
        %s348 = scalar_lea.vmem %s8, %s347
        %p349 = pneg %p258
        %p350 = pneg %p255
        %s351 = sand.u32 %s245, 1
        %s352 = scalar_lea.sflag [#allocation4], %s351
        %s353 = sand.u32 %s245, 1
        %s354 = scalar_lea.vmem [#allocation3], %s353
        %s355 = smul.u32 32, %s29
        %p356 = scmp.lt.s32.totalorder %s28, 1
        %s357 = scalar_select %p356, %s28, 1
        %p358 = scmp.lt.s32.totalorder %s355, 31
        %s359 = scalar_select %p358, %s355, 31
        %s360 = smul.addr %s357, 32
        %s361 = sadd.s32 %s359, %s360
        %s362 = smul.addr %s361, 8
        %s363 = scalar_lea.vmem %s0, %s362
        %s364 = smul.u32 32, %s29
        %p365 = scmp.lt.s32.totalorder %s28, 1
        %s366 = scalar_select %p365, %s28, 1
        %s367 = smul.addr %s366, 2
        %s368 = scalar_lea.vmem %s8, %s367
        %p370 = scmp.eq.s32.totalorder %s29, 0
        // Predicated region
        $region53: #{cnn_forward.1} parent=51 // pred_check
          %p371 = pneg %p370
        $region54: #{cnn_forward.1} parent=51 // pred_check_branch
          %373 = sbr.rel (%p371) target = $region56
        $region55: #{cnn_forward.1} parent=51 // pred_region
          %374 = vst [vmem:[#allocation2] sm:$0xff] 0.0
          %375 = vst [vmem:[#allocation2 + $0x8] sm:$0xff] 0.0
          %376 = vst [vmem:[#allocation2 + $0x10] sm:$0xff] 0.0
          %377 = vst [vmem:[#allocation2 + $0x18] sm:$0xff] 0.0
          %378 = vst [vmem:[#allocation2 + $0x20] sm:$0xff] 0.0
          %379 = vst [vmem:[#allocation2 + $0x28] sm:$0xff] 0.0
          %380 = vst [vmem:[#allocation2 + $0x30] sm:$0xff] 0.0
          %381 = vst [vmem:[#allocation2 + $0x38] sm:$0xff] 0.0
          %382 = vst [vmem:[#allocation2 + $0x40] sm:$0xff] 0.0
          %383 = vst [vmem:[#allocation2 + $0x48] sm:$0xff] 0.0
          %384 = vst [vmem:[#allocation2 + $0x50] sm:$0xff] 0.0
          %385 = vst [vmem:[#allocation2 + $0x58] sm:$0xff] 0.0
          %386 = vst [vmem:[#allocation2 + $0x60] sm:$0xff] 0.0
          %387 = vst [vmem:[#allocation2 + $0x68] sm:$0xff] 0.0
          %388 = vst [vmem:[#allocation2 + $0x70] sm:$0xff] 0.0
          %389 = vst [vmem:[#allocation2 + $0x78] sm:$0xff] 0.0
        $region56: #{cnn_forward.1} parent=51 // pred_fallthru
          _
        %v390 = vld [vmem:[%s363] sm:$0xff]
        %v391 = vld [vmem:[%s363 + $0x8] sm:$0xff]
        %v392 = vld [vmem:[%s363 + $0x10] sm:$0xff]
        %v393 = vld [vmem:[%s363 + $0x18] sm:$0xff]
        %v394 = vld [vmem:[%s363 + $0x20] sm:$0xff]
        %v395 = vld [vmem:[%s363 + $0x28] sm:$0xff]
        %v396 = vld [vmem:[%s363 + $0x30] sm:$0xff]
        %v397 = vld [vmem:[%s363 + $0x38] sm:$0xff]
        %v398 = vld [vmem:[%s363 + $0x40] sm:$0xff]
        %v399 = vld [vmem:[%s363 + $0x48] sm:$0xff]
        %v400 = vld [vmem:[%s363 + $0x50] sm:$0xff]
        %v401 = vld [vmem:[%s363 + $0x58] sm:$0xff]
        %v402 = vld [vmem:[%s363 + $0x60] sm:$0xff]
        %v403 = vld [vmem:[%s363 + $0x68] sm:$0xff]
        %v404 = vld [vmem:[%s363 + $0x70] sm:$0xff]
        %v405 = vld [vmem:[%s363 + $0x78] sm:$0xff]
        %v406 = vld [vmem:[%s363 + $0x80] sm:$0xff]
        %v407 = vld [vmem:[%s363 + $0x88] sm:$0xff]
        %v408 = vld [vmem:[%s363 + $0x90] sm:$0xff]
        %v409 = vld [vmem:[%s363 + $0x98] sm:$0xff]
        %v410 = vld [vmem:[%s363 + $0xa0] sm:$0xff]
        %v411 = vld [vmem:[%s363 + $0xa8] sm:$0xff]
        %v412 = vld [vmem:[%s363 + $0xb0] sm:$0xff]
        %v413 = vld [vmem:[%s363 + $0xb8] sm:$0xff]
        %v414 = vld [vmem:[%s363 + $0xc0] sm:$0xff]
        %v415 = vld [vmem:[%s363 + $0xc8] sm:$0xff]
        %v416 = vld [vmem:[%s363 + $0xd0] sm:$0xff]
        %v417 = vld [vmem:[%s363 + $0xd8] sm:$0xff]
        %v418 = vld [vmem:[%s363 + $0xe0] sm:$0xff]
        %v419 = vld [vmem:[%s363 + $0xe8] sm:$0xff]
        %v420 = vld [vmem:[%s363 + $0xf0] sm:$0xff]
        %v421 = vld [vmem:[%s363 + $0xf8] sm:$0xff]
        %v422 = vpack.c.bf16 %v391, %v390
        %v423 = vpack.c.bf16 %v393, %v392
        %v424 = vpack.c.bf16 %v395, %v394
        %v425 = vpack.c.bf16 %v397, %v396
        %v426 = vpack.c.bf16 %v399, %v398
        %v427 = vpack.c.bf16 %v401, %v400
        %v428 = vpack.c.bf16 %v403, %v402
        %v429 = vpack.c.bf16 %v405, %v404
        %v430 = vpack.c.bf16 %v407, %v406
        %v431 = vpack.c.bf16 %v409, %v408
        %v432 = vpack.c.bf16 %v411, %v410
        %v433 = vpack.c.bf16 %v413, %v412
        %v434 = vpack.c.bf16 %v415, %v414
        %v435 = vpack.c.bf16 %v417, %v416
        %v436 = vpack.c.bf16 %v419, %v418
        %v437 = vpack.c.bf16 %v421, %v420
        %v438 = vld [vmem:[%s1] sm:$0xff]
        %v439 = vld [vmem:[%s1 + $0x8] sm:$0xff]
        %v440 = vld [vmem:[%s1 + $0x10] sm:$0xff]
        %v441 = vld [vmem:[%s1 + $0x18] sm:$0xff]
        %v442 = vld [vmem:[%s2] sm:$0xff]
        %v443 = vld [vmem:[%s2 + $0x8] sm:$0xff]
        %v446 = vlaneseq
        %v447 = vshrl.u32 %v446, 7
        %v448 = vsub.s32 0, %v447
        %v449 = vrot.slane %v442, %v448
        %v450 = vlaneseq
        %v451 = vshrl.u32 %v450, 7
        %v452 = vsub.s32 1, %v451
        %v453 = vrot.slane %v442, %v452
        %v454 = vlaneseq
        %v455 = vshrl.u32 %v454, 7
        %v456 = vsub.s32 2, %v455
        %v457 = vrot.slane %v442, %v456
        %v458 = vlaneseq
        %v459 = vshrl.u32 %v458, 7
        %v460 = vsub.s32 3, %v459
        %v461 = vrot.slane %v442, %v460
        %v462 = vlaneseq
        %v463 = vshrl.u32 %v462, 7
        %v464 = vsub.s32 4, %v463
        %v465 = vrot.slane %v442, %v464
        %v466 = vlaneseq
        %v467 = vshrl.u32 %v466, 7
        %v468 = vsub.s32 5, %v467
        %v469 = vrot.slane %v442, %v468
        %v470 = vlaneseq
        %v471 = vshrl.u32 %v470, 7
        %v472 = vsub.s32 6, %v471
        %v473 = vrot.slane %v442, %v472
        %v474 = vlaneseq
        %v475 = vshrl.u32 %v474, 7
        %v476 = vsub.s32 7, %v475
        %v477 = vrot.slane %v442, %v476
        %v478 = vlaneseq
        %v479 = vshrl.u32 %v478, 7
        %v480 = vsub.s32 0, %v479
        %v481 = vrot.slane %v443, %v480
        %v482 = vlaneseq
        %v483 = vshrl.u32 %v482, 7
        %v484 = vsub.s32 1, %v483
        %v485 = vrot.slane %v443, %v484
        %v486 = vlaneseq
        %v487 = vshrl.u32 %v486, 7
        %v488 = vsub.s32 2, %v487
        %v489 = vrot.slane %v443, %v488
        %v490 = vlaneseq
        %v491 = vshrl.u32 %v490, 7
        %v492 = vsub.s32 3, %v491
        %v493 = vrot.slane %v443, %v492
        %v494 = vlaneseq
        %v495 = vshrl.u32 %v494, 7
        %v496 = vsub.s32 4, %v495
        %v497 = vrot.slane %v443, %v496
        %v498 = vlaneseq
        %v499 = vshrl.u32 %v498, 7
        %v500 = vsub.s32 5, %v499
        %v501 = vrot.slane %v443, %v500
        %v502 = vlaneseq
        %v503 = vshrl.u32 %v502, 7
        %v504 = vsub.s32 6, %v503
        %v505 = vrot.slane %v443, %v504
        %v506 = vlaneseq
        %v507 = vshrl.u32 %v506, 7
        %v508 = vsub.s32 7, %v507
        %v509 = vrot.slane %v443, %v508
        %v530 = vcombine.high %v438, %v438
        %v532 = vunpack.c.l.s4 1983009808
        %v533 = vunpack.c.0.s8 %v532
        %v534 = vlaneseq
        %v535 = vshrl.u32 %v534, 7
        %v536 = vsub.s32 %v533, %v535
        %v537 = vrot.slane %v438, %v536
        %v539 = vunpack.c.l.s4 1983009808
        %v540 = vunpack.c.0.s8 %v539
        %v541 = vlaneseq
        %v542 = vshrl.u32 %v541, 7
        %v543 = vsub.s32 %v540, %v542
        %v544 = vrot.slane %v530, %v543
        %v545 = vcombine.high %v537, %v537
        %v546 = vcombine.high %v544, %v544
        %v547 = vcombine.high %v439, %v439
        %v549 = vunpack.c.l.s4 1983009808
        %v550 = vunpack.c.0.s8 %v549
        %v551 = vlaneseq
        %v552 = vshrl.u32 %v551, 7
        %v553 = vsub.s32 %v550, %v552
        %v554 = vrot.slane %v439, %v553
        %v556 = vunpack.c.l.s4 1983009808
        %v557 = vunpack.c.0.s8 %v556
        %v558 = vlaneseq
        %v559 = vshrl.u32 %v558, 7
        %v560 = vsub.s32 %v557, %v559
        %v561 = vrot.slane %v547, %v560
        %v562 = vcombine.high %v554, %v554
        %v563 = vcombine.high %v561, %v561
        %v564 = vcombine.high %v440, %v440
        %v566 = vunpack.c.l.s4 1983009808
        %v567 = vunpack.c.0.s8 %v566
        %v568 = vlaneseq
        %v569 = vshrl.u32 %v568, 7
        %v570 = vsub.s32 %v567, %v569
        %v571 = vrot.slane %v440, %v570
        %v573 = vunpack.c.l.s4 1983009808
        %v574 = vunpack.c.0.s8 %v573
        %v575 = vlaneseq
        %v576 = vshrl.u32 %v575, 7
        %v577 = vsub.s32 %v574, %v576
        %v578 = vrot.slane %v564, %v577
        %v579 = vcombine.high %v571, %v571
        %v580 = vcombine.high %v578, %v578
        %v581 = vcombine.high %v441, %v441
        %v583 = vunpack.c.l.s4 1983009808
        %v584 = vunpack.c.0.s8 %v583
        %v585 = vlaneseq
        %v586 = vshrl.u32 %v585, 7
        %v587 = vsub.s32 %v584, %v586
        %v588 = vrot.slane %v441, %v587
        %v590 = vunpack.c.l.s4 1983009808
        %v591 = vunpack.c.0.s8 %v590
        %v592 = vlaneseq
        %v593 = vshrl.u32 %v592, 7
        %v594 = vsub.s32 %v591, %v593
        %v595 = vrot.slane %v581, %v594
        %v596 = vcombine.high %v588, %v588
        %v597 = vcombine.high %v595, %v595
        %vm598 = vcmask 31744
        %v600 = vsel %vm598, %v422, 0
        %v603 = vsel %vm598, %v423, 0
        %v606 = vsel %vm598, %v424, 0
        %v609 = vsel %vm598, %v425, 0
        %v612 = vsel %vm598, %v426, 0
        %v615 = vsel %vm598, %v427, 0
        %v618 = vsel %vm598, %v428, 0
        %v621 = vsel %vm598, %v429, 0
        %v624 = vsel %vm598, %v430, 0
        %v627 = vsel %vm598, %v431, 0
        %v630 = vsel %vm598, %v432, 0
        %v633 = vsel %vm598, %v433, 0
        %v636 = vsel %vm598, %v434, 0
        %v639 = vsel %vm598, %v435, 0
        %v642 = vsel %vm598, %v436, 0
        %v645 = vsel %vm598, %v437, 0
        %vm647 = vcmask 1041408
        %v649 = vsel %vm647, %v537, 0
        %v652 = vsel %vm647, %v545, 0
        %v655 = vsel %vm647, %v544, 0
        %v658 = vsel %vm647, %v546, 0
        %v661 = vsel %vm647, %v554, 0
        %v664 = vsel %vm647, %v562, 0
        %v667 = vsel %vm647, %v561, 0
        %v670 = vsel %vm647, %v563, 0
        %v673 = vsel %vm647, %v571, 0
        %v676 = vsel %vm647, %v579, 0
        %v679 = vsel %vm647, %v578, 0
        %v682 = vsel %vm647, %v580, 0
        %v685 = vsel %vm647, %v588, 0
        %v688 = vsel %vm647, %v596, 0
        %v691 = vsel %vm647, %v595, 0
        %v694 = vsel %vm647, %v597, 0
        %696 = vmatprep.subr.bf16.mxu0 %v652
        %697 = vmatpush1.bf16.msra.mxu0 %v649
        %698 = vmatprep.subr.bf16.mxu0 0
        %699 = vmatpush1.bf16.msra.mxu0 0
        %700 = vmatprep.subr.bf16.mxu0 0
        %701 = vmatpush1.bf16.msra.mxu0 0
        %702 = vmatprep.subr.bf16.mxu0 0
        %703 = vmatpush1.bf16.msra.mxu0 0
        %704 = vmatprep.subr.bf16.mxu0 0
        %705 = vmatpush1.bf16.msra.mxu0 0
        %706 = vmatprep.subr.bf16.mxu0 0
        %707 = vmatpush1.bf16.msra.mxu0 0
        %708 = vmatprep.subr.bf16.mxu0 0
        %709 = vmatpush1.bf16.msra.mxu0 0
        %710 = vmatprep.subr.bf16.mxu0 0
        %711 = vmatpush1.bf16.msra.mxu0 0
        %712 = vmatprep.subr.bf16.mxu0 0
        %713 = vmatpush1.bf16.msra.mxu0 0
        %714 = vmatprep.subr.bf16.mxu0 0
        %715 = vmatpush1.bf16.msra.mxu0 0
        %716 = vmatprep.subr.bf16.mxu0 0
        %717 = vmatpush1.bf16.msra.mxu0 0
        %718 = vmatprep.subr.bf16.mxu0 0
        %719 = vmatpush1.bf16.msra.mxu0 0
        %720 = vmatprep.subr.bf16.mxu0 0
        %721 = vmatpush1.bf16.msra.mxu0 0
        %722 = vmatprep.subr.bf16.mxu0 0
        %723 = vmatpush1.bf16.msra.mxu0 0
        %724 = vmatprep.subr.bf16.mxu0 0
        %725 = vmatpush1.bf16.msra.mxu0 0
        %726 = vmatprep.subr.bf16.mxu0 0
        %727 = vmatpush1.bf16.msra.mxu0 0
        %728 = vmatprep.mubr.bf16.mxu0 0
        %729 = vmatmul.mubr.bf16.gmra.mrb[0].mxu0 %v600
        %v730 = vpop.f32.mrb[0].mxu0
        %v731 = vadd.f32 %v449, %v730
        %v732 = vpop.f32.mrb[0].mxu0
        %v733 = vadd.f32 %v453, %v732
        %v734 = vpop.f32.mrb[0].mxu0
        %v735 = vadd.f32 %v449, %v734
        %v736 = vpop.f32.mrb[0].mxu0
        %v737 = vadd.f32 %v453, %v736
        %738 = vmatprep.mubr.bf16.mxu0 0
        %739 = vmatmul.mubr.bf16.gmra.mrb[0].mxu0 %v603
        %v740 = vpop.f32.mrb[0].mxu0
        %v741 = vadd.f32 %v449, %v740
        %v742 = vpop.f32.mrb[0].mxu0
        %v743 = vadd.f32 %v453, %v742
        %v744 = vpop.f32.mrb[0].mxu0
        %v745 = vadd.f32 %v449, %v744
        %v746 = vpop.f32.mrb[0].mxu0
        %v747 = vadd.f32 %v453, %v746
        %748 = vmatprep.mubr.bf16.mxu0 0
        %749 = vmatmul.mubr.bf16.gmra.mrb[0].mxu0 %v606
        %v750 = vpop.f32.mrb[0].mxu0
        %v751 = vadd.f32 %v449, %v750
        %v752 = vpop.f32.mrb[0].mxu0
        %v753 = vadd.f32 %v453, %v752
        %v754 = vpop.f32.mrb[0].mxu0
        %v755 = vadd.f32 %v449, %v754
        %v756 = vpop.f32.mrb[0].mxu0
        %v757 = vadd.f32 %v453, %v756
        %758 = vmatprep.mubr.bf16.mxu0 0
        %759 = vmatmul.mubr.bf16.gmra.mrb[0].mxu0 %v609
        %v760 = vpop.f32.mrb[0].mxu0
        %v761 = vadd.f32 %v449, %v760
        %v762 = vpop.f32.mrb[0].mxu0
        %v763 = vadd.f32 %v453, %v762
        %v764 = vpop.f32.mrb[0].mxu0
        %v765 = vadd.f32 %v449, %v764
        %v766 = vpop.f32.mrb[0].mxu0
        %v767 = vadd.f32 %v453, %v766
        %768 = vmatprep.mubr.bf16.mxu0 0
        %769 = vmatmul.mubr.bf16.gmra.mrb[0].mxu0 %v612
        %v770 = vpop.f32.mrb[0].mxu0
        %v771 = vadd.f32 %v449, %v770
        %v772 = vpop.f32.mrb[0].mxu0
        %v773 = vadd.f32 %v453, %v772
        %v774 = vpop.f32.mrb[0].mxu0
        %v775 = vadd.f32 %v449, %v774
        %v776 = vpop.f32.mrb[0].mxu0
        %v777 = vadd.f32 %v453, %v776
        %778 = vmatprep.mubr.bf16.mxu0 0
        %779 = vmatmul.mubr.bf16.gmra.mrb[0].mxu0 %v615
        %v780 = vpop.f32.mrb[0].mxu0
        %v781 = vadd.f32 %v449, %v780
        %v782 = vpop.f32.mrb[0].mxu0
        %v783 = vadd.f32 %v453, %v782
        %v784 = vpop.f32.mrb[0].mxu0
        %v785 = vadd.f32 %v449, %v784
        %v786 = vpop.f32.mrb[0].mxu0
        %v787 = vadd.f32 %v453, %v786
        %788 = vmatprep.mubr.bf16.mxu0 0
        %789 = vmatmul.mubr.bf16.gmra.mrb[0].mxu0 %v618
        %v790 = vpop.f32.mrb[0].mxu0
        %v791 = vadd.f32 %v449, %v790
        %v792 = vpop.f32.mrb[0].mxu0
        %v793 = vadd.f32 %v453, %v792
        %v794 = vpop.f32.mrb[0].mxu0
        %v795 = vadd.f32 %v449, %v794
        %v796 = vpop.f32.mrb[0].mxu0
        %v797 = vadd.f32 %v453, %v796
        %798 = vmatprep.mubr.bf16.mxu0 0
        %799 = vmatmul.mubr.bf16.gmra.mrb[0].mxu0 %v621
        %v800 = vpop.f32.mrb[0].mxu0
        %v801 = vadd.f32 %v449, %v800
        %v802 = vpop.f32.mrb[0].mxu0
        %v803 = vadd.f32 %v453, %v802
        %v804 = vpop.f32.mrb[0].mxu0
        %v805 = vadd.f32 %v449, %v804
        %v806 = vpop.f32.mrb[0].mxu0
        %v807 = vadd.f32 %v453, %v806
        %808 = vmatprep.mubr.bf16.mxu0 0
        %809 = vmatmul.mubr.bf16.gmra.mrb[0].mxu0 %v624
        %v810 = vpop.f32.mrb[0].mxu0
        %v811 = vadd.f32 %v449, %v810
        %v812 = vpop.f32.mrb[0].mxu0
        %v813 = vadd.f32 %v453, %v812
        %v814 = vpop.f32.mrb[0].mxu0
        %v815 = vadd.f32 %v449, %v814
        %v816 = vpop.f32.mrb[0].mxu0
        %v817 = vadd.f32 %v453, %v816
        %818 = vmatprep.mubr.bf16.mxu0 0
        %819 = vmatmul.mubr.bf16.gmra.mrb[0].mxu0 %v627
        %v820 = vpop.f32.mrb[0].mxu0
        %v821 = vadd.f32 %v449, %v820
        %v822 = vpop.f32.mrb[0].mxu0
        %v823 = vadd.f32 %v453, %v822
        %v824 = vpop.f32.mrb[0].mxu0
        %v825 = vadd.f32 %v449, %v824
        %v826 = vpop.f32.mrb[0].mxu0
        %v827 = vadd.f32 %v453, %v826
        %828 = vmatprep.mubr.bf16.mxu0 0
        %829 = vmatmul.mubr.bf16.gmra.mrb[0].mxu0 %v630
        %v830 = vpop.f32.mrb[0].mxu0
        %v831 = vadd.f32 %v449, %v830
        %v832 = vpop.f32.mrb[0].mxu0
        %v833 = vadd.f32 %v453, %v832
        %v834 = vpop.f32.mrb[0].mxu0
        %v835 = vadd.f32 %v449, %v834
        %v836 = vpop.f32.mrb[0].mxu0
        %v837 = vadd.f32 %v453, %v836
        %838 = vmatprep.mubr.bf16.mxu0 0
        %839 = vmatmul.mubr.bf16.gmra.mrb[0].mxu0 %v633
        %v840 = vpop.f32.mrb[0].mxu0
        %v841 = vadd.f32 %v449, %v840
        %v842 = vpop.f32.mrb[0].mxu0
        %v843 = vadd.f32 %v453, %v842
        %v844 = vpop.f32.mrb[0].mxu0
        %v845 = vadd.f32 %v449, %v844
        %v846 = vpop.f32.mrb[0].mxu0
        %v847 = vadd.f32 %v453, %v846
        %848 = vmatprep.mubr.bf16.mxu0 0
        %849 = vmatmul.mubr.bf16.gmra.mrb[0].mxu0 %v636
        %v850 = vpop.f32.mrb[0].mxu0
        %v851 = vadd.f32 %v449, %v850
        %v852 = vpop.f32.mrb[0].mxu0
        %v853 = vadd.f32 %v453, %v852
        %v854 = vpop.f32.mrb[0].mxu0
        %v855 = vadd.f32 %v449, %v854
        %v856 = vpop.f32.mrb[0].mxu0
        %v857 = vadd.f32 %v453, %v856
        %858 = vmatprep.mubr.bf16.mxu0 0
        %859 = vmatmul.mubr.bf16.gmra.mrb[0].mxu0 %v639
        %v860 = vpop.f32.mrb[0].mxu0
        %v861 = vadd.f32 %v449, %v860
        %v862 = vpop.f32.mrb[0].mxu0
        %v863 = vadd.f32 %v453, %v862
        %v864 = vpop.f32.mrb[0].mxu0
        %v865 = vadd.f32 %v449, %v864
        %v866 = vpop.f32.mrb[0].mxu0
        %v867 = vadd.f32 %v453, %v866
        %868 = vmatprep.mubr.bf16.mxu0 0
        %869 = vmatmul.mubr.bf16.gmra.mrb[0].mxu0 %v642
        %v870 = vpop.f32.mrb[0].mxu0
        %v871 = vadd.f32 %v449, %v870
        %v872 = vpop.f32.mrb[0].mxu0
        %v873 = vadd.f32 %v453, %v872
        %v874 = vpop.f32.mrb[0].mxu0
        %v875 = vadd.f32 %v449, %v874
        %v876 = vpop.f32.mrb[0].mxu0
        %v877 = vadd.f32 %v453, %v876
        %878 = vmatprep.mubr.bf16.mxu0 0
        %879 = vmatmul.mubr.bf16.gmra.mrb[0].mxu0 %v645
        %v880 = vpop.f32.mrb[0].mxu0
        %v881 = vadd.f32 %v449, %v880
        %v882 = vpop.f32.mrb[0].mxu0
        %v883 = vadd.f32 %v453, %v882
        %v884 = vpop.f32.mrb[0].mxu0
        %v885 = vadd.f32 %v449, %v884
        %v886 = vpop.f32.mrb[0].mxu0
        %v887 = vadd.f32 %v453, %v886
        %888 = vdwg.mxu0
        %889 = vmatprep.subr.bf16.mxu0 %v658
        %890 = vmatpush1.bf16.msra.mxu0 %v655
        %891 = vmatprep.subr.bf16.mxu0 0
        %892 = vmatpush1.bf16.msra.mxu0 0
        %893 = vmatprep.subr.bf16.mxu0 0
        %894 = vmatpush1.bf16.msra.mxu0 0
        %895 = vmatprep.subr.bf16.mxu0 0
        %896 = vmatpush1.bf16.msra.mxu0 0
        %897 = vmatprep.subr.bf16.mxu0 0
        %898 = vmatpush1.bf16.msra.mxu0 0
        %899 = vmatprep.subr.bf16.mxu0 0
        %900 = vmatpush1.bf16.msra.mxu0 0
        %901 = vmatprep.subr.bf16.mxu0 0
        %902 = vmatpush1.bf16.msra.mxu0 0
        %903 = vmatprep.subr.bf16.mxu0 0
        %904 = vmatpush1.bf16.msra.mxu0 0
        %905 = vmatprep.subr.bf16.mxu0 0
        %906 = vmatpush1.bf16.msra.mxu0 0
        %907 = vmatprep.subr.bf16.mxu0 0
        %908 = vmatpush1.bf16.msra.mxu0 0
        %909 = vmatprep.subr.bf16.mxu0 0
        %910 = vmatpush1.bf16.msra.mxu0 0
        %911 = vmatprep.subr.bf16.mxu0 0
        %912 = vmatpush1.bf16.msra.mxu0 0
        %913 = vmatprep.subr.bf16.mxu0 0
        %914 = vmatpush1.bf16.msra.mxu0 0
        %915 = vmatprep.subr.bf16.mxu0 0
        %916 = vmatpush1.bf16.msra.mxu0 0
        %917 = vmatprep.subr.bf16.mxu0 0
        %918 = vmatpush1.bf16.msra.mxu0 0
        %919 = vmatprep.subr.bf16.mxu0 0
        %920 = vmatpush1.bf16.msra.mxu0 0
        %921 = vmatprep.mubr.bf16.mxu0 0
        %922 = vmatmul.mubr.bf16.gmra.mrb[0].mxu0 %v600
        %v923 = vpop.f32.mrb[0].mxu0
        %v924 = vadd.f32 %v457, %v923
        %v925 = vpop.f32.mrb[0].mxu0
        %v926 = vadd.f32 %v461, %v925
        %v927 = vpop.f32.mrb[0].mxu0
        %v928 = vadd.f32 %v457, %v927
        %v929 = vpop.f32.mrb[0].mxu0
        %v930 = vadd.f32 %v461, %v929
        %931 = vmatprep.mubr.bf16.mxu0 0
        %932 = vmatmul.mubr.bf16.gmra.mrb[0].mxu0 %v603
        %v933 = vpop.f32.mrb[0].mxu0
        %v934 = vadd.f32 %v457, %v933
        %v935 = vpop.f32.mrb[0].mxu0
        %v936 = vadd.f32 %v461, %v935
        %v937 = vpop.f32.mrb[0].mxu0
        %v938 = vadd.f32 %v457, %v937
        %v939 = vpop.f32.mrb[0].mxu0
        %v940 = vadd.f32 %v461, %v939
        %941 = vmatprep.mubr.bf16.mxu0 0
        %942 = vmatmul.mubr.bf16.gmra.mrb[0].mxu0 %v606
        %v943 = vpop.f32.mrb[0].mxu0
        %v944 = vadd.f32 %v457, %v943
        %v945 = vpop.f32.mrb[0].mxu0
        %v946 = vadd.f32 %v461, %v945
        %v947 = vpop.f32.mrb[0].mxu0
        %v948 = vadd.f32 %v457, %v947
        %v949 = vpop.f32.mrb[0].mxu0
        %v950 = vadd.f32 %v461, %v949
        %951 = vmatprep.mubr.bf16.mxu0 0
        %952 = vmatmul.mubr.bf16.gmra.mrb[0].mxu0 %v609
        %v953 = vpop.f32.mrb[0].mxu0
        %v954 = vadd.f32 %v457, %v953
        %v955 = vpop.f32.mrb[0].mxu0
        %v956 = vadd.f32 %v461, %v955
        %v957 = vpop.f32.mrb[0].mxu0
        %v958 = vadd.f32 %v457, %v957
        %v959 = vpop.f32.mrb[0].mxu0
        %v960 = vadd.f32 %v461, %v959
        %961 = vmatprep.mubr.bf16.mxu0 0
        %962 = vmatmul.mubr.bf16.gmra.mrb[0].mxu0 %v612
        %v963 = vpop.f32.mrb[0].mxu0
        %v964 = vadd.f32 %v457, %v963
        %v965 = vpop.f32.mrb[0].mxu0
        %v966 = vadd.f32 %v461, %v965
        %v967 = vpop.f32.mrb[0].mxu0
        %v968 = vadd.f32 %v457, %v967
        %v969 = vpop.f32.mrb[0].mxu0
        %v970 = vadd.f32 %v461, %v969
        %971 = vmatprep.mubr.bf16.mxu0 0
        %972 = vmatmul.mubr.bf16.gmra.mrb[0].mxu0 %v615
        %v973 = vpop.f32.mrb[0].mxu0
        %v974 = vadd.f32 %v457, %v973
        %v975 = vpop.f32.mrb[0].mxu0
        %v976 = vadd.f32 %v461, %v975
        %v977 = vpop.f32.mrb[0].mxu0
        %v978 = vadd.f32 %v457, %v977
        %v979 = vpop.f32.mrb[0].mxu0
        %v980 = vadd.f32 %v461, %v979
        %981 = vmatprep.mubr.bf16.mxu0 0
        %982 = vmatmul.mubr.bf16.gmra.mrb[0].mxu0 %v618
        %v983 = vpop.f32.mrb[0].mxu0
        %v984 = vadd.f32 %v457, %v983
        %v985 = vpop.f32.mrb[0].mxu0
        %v986 = vadd.f32 %v461, %v985
        %v987 = vpop.f32.mrb[0].mxu0
        %v988 = vadd.f32 %v457, %v987
        %v989 = vpop.f32.mrb[0].mxu0
        %v990 = vadd.f32 %v461, %v989
        %991 = vmatprep.mubr.bf16.mxu0 0
        %992 = vmatmul.mubr.bf16.gmra.mrb[0].mxu0 %v621
        %v993 = vpop.f32.mrb[0].mxu0
        %v994 = vadd.f32 %v457, %v993
        %v995 = vpop.f32.mrb[0].mxu0
        %v996 = vadd.f32 %v461, %v995
        %v997 = vpop.f32.mrb[0].mxu0
        %v998 = vadd.f32 %v457, %v997
        %v999 = vpop.f32.mrb[0].mxu0
        %v1000 = vadd.f32 %v461, %v999
        %1001 = vmatprep.mubr.bf16.mxu0 0
        %1002 = vmatmul.mubr.bf16.gmra.mrb[0].mxu0 %v624
        %v1003 = vpop.f32.mrb[0].mxu0
        %v1004 = vadd.f32 %v457, %v1003
        %v1005 = vpop.f32.mrb[0].mxu0
        %v1006 = vadd.f32 %v461, %v1005
        %v1007 = vpop.f32.mrb[0].mxu0
        %v1008 = vadd.f32 %v457, %v1007
        %v1009 = vpop.f32.mrb[0].mxu0
        %v1010 = vadd.f32 %v461, %v1009
        %1011 = vmatprep.mubr.bf16.mxu0 0
        %1012 = vmatmul.mubr.bf16.gmra.mrb[0].mxu0 %v627
        %v1013 = vpop.f32.mrb[0].mxu0
        %v1014 = vadd.f32 %v457, %v1013
        %v1015 = vpop.f32.mrb[0].mxu0
        %v1016 = vadd.f32 %v461, %v1015
        %v1017 = vpop.f32.mrb[0].mxu0
        %v1018 = vadd.f32 %v457, %v1017
        %v1019 = vpop.f32.mrb[0].mxu0
        %v1020 = vadd.f32 %v461, %v1019
        %1021 = vmatprep.mubr.bf16.mxu0 0
        %1022 = vmatmul.mubr.bf16.gmra.mrb[0].mxu0 %v630
        %v1023 = vpop.f32.mrb[0].mxu0
        %v1024 = vadd.f32 %v457, %v1023
        %v1025 = vpop.f32.mrb[0].mxu0
        %v1026 = vadd.f32 %v461, %v1025
        %v1027 = vpop.f32.mrb[0].mxu0
        %v1028 = vadd.f32 %v457, %v1027
        %v1029 = vpop.f32.mrb[0].mxu0
        %v1030 = vadd.f32 %v461, %v1029
        %1031 = vmatprep.mubr.bf16.mxu0 0
        %1032 = vmatmul.mubr.bf16.gmra.mrb[0].mxu0 %v633
        %v1033 = vpop.f32.mrb[0].mxu0
        %v1034 = vadd.f32 %v457, %v1033
        %v1035 = vpop.f32.mrb[0].mxu0
        %v1036 = vadd.f32 %v461, %v1035
        %v1037 = vpop.f32.mrb[0].mxu0
        %v1038 = vadd.f32 %v457, %v1037
        %v1039 = vpop.f32.mrb[0].mxu0
        %v1040 = vadd.f32 %v461, %v1039
        %1041 = vmatprep.mubr.bf16.mxu0 0
        %1042 = vmatmul.mubr.bf16.gmra.mrb[0].mxu0 %v636
        %v1043 = vpop.f32.mrb[0].mxu0
        %v1044 = vadd.f32 %v457, %v1043
        %v1045 = vpop.f32.mrb[0].mxu0
        %v1046 = vadd.f32 %v461, %v1045
        %v1047 = vpop.f32.mrb[0].mxu0
        %v1048 = vadd.f32 %v457, %v1047
        %v1049 = vpop.f32.mrb[0].mxu0
        %v1050 = vadd.f32 %v461, %v1049
        %1051 = vmatprep.mubr.bf16.mxu0 0
        %1052 = vmatmul.mubr.bf16.gmra.mrb[0].mxu0 %v639
        %v1053 = vpop.f32.mrb[0].mxu0
        %v1054 = vadd.f32 %v457, %v1053
        %v1055 = vpop.f32.mrb[0].mxu0
        %v1056 = vadd.f32 %v461, %v1055
        %v1057 = vpop.f32.mrb[0].mxu0
        %v1058 = vadd.f32 %v457, %v1057
        %v1059 = vpop.f32.mrb[0].mxu0
        %v1060 = vadd.f32 %v461, %v1059
        %1061 = vmatprep.mubr.bf16.mxu0 0
        %1062 = vmatmul.mubr.bf16.gmra.mrb[0].mxu0 %v642
        %v1063 = vpop.f32.mrb[0].mxu0
        %v1064 = vadd.f32 %v457, %v1063
        %v1065 = vpop.f32.mrb[0].mxu0
        %v1066 = vadd.f32 %v461, %v1065
        %v1067 = vpop.f32.mrb[0].mxu0
        %v1068 = vadd.f32 %v457, %v1067
        %v1069 = vpop.f32.mrb[0].mxu0
        %v1070 = vadd.f32 %v461, %v1069
        %1071 = vmatprep.mubr.bf16.mxu0 0
        %1072 = vmatmul.mubr.bf16.gmra.mrb[0].mxu0 %v645
        %v1073 = vpop.f32.mrb[0].mxu0
        %v1074 = vadd.f32 %v457, %v1073
        %v1075 = vpop.f32.mrb[0].mxu0
        %v1076 = vadd.f32 %v461, %v1075
        %v1077 = vpop.f32.mrb[0].mxu0
        %v1078 = vadd.f32 %v457, %v1077
        %v1079 = vpop.f32.mrb[0].mxu0
        %v1080 = vadd.f32 %v461, %v1079
        %1081 = vdwg.mxu0
        %1082 = vmatprep.subr.bf16.mxu0 %v664
        %1083 = vmatpush1.bf16.msra.mxu0 %v661
        %1084 = vmatprep.subr.bf16.mxu0 0
        %1085 = vmatpush1.bf16.msra.mxu0 0
        %1086 = vmatprep.subr.bf16.mxu0 0
        %1087 = vmatpush1.bf16.msra.mxu0 0
        %1088 = vmatprep.subr.bf16.mxu0 0
        %1089 = vmatpush1.bf16.msra.mxu0 0
        %1090 = vmatprep.subr.bf16.mxu0 0
        %1091 = vmatpush1.bf16.msra.mxu0 0
        %1092 = vmatprep.subr.bf16.mxu0 0
        %1093 = vmatpush1.bf16.msra.mxu0 0
        %1094 = vmatprep.subr.bf16.mxu0 0
        %1095 = vmatpush1.bf16.msra.mxu0 0
        %1096 = vmatprep.subr.bf16.mxu0 0
        %1097 = vmatpush1.bf16.msra.mxu0 0
        %1098 = vmatprep.subr.bf16.mxu0 0
        %1099 = vmatpush1.bf16.msra.mxu0 0
        %1100 = vmatprep.subr.bf16.mxu0 0
        %1101 = vmatpush1.bf16.msra.mxu0 0
        %1102 = vmatprep.subr.bf16.mxu0 0
        %1103 = vmatpush1.bf16.msra.mxu0 0
        %1104 = vmatprep.subr.bf16.mxu0 0
        %1105 = vmatpush1.bf16.msra.mxu0 0
        %1106 = vmatprep.subr.bf16.mxu0 0
        %1107 = vmatpush1.bf16.msra.mxu0 0
        %1108 = vmatprep.subr.bf16.mxu0 0
        %1109 = vmatpush1.bf16.msra.mxu0 0
        %1110 = vmatprep.subr.bf16.mxu0 0
        %1111 = vmatpush1.bf16.msra.mxu0 0
        %1112 = vmatprep.subr.bf16.mxu0 0
        %1113 = vmatpush1.bf16.msra.mxu0 0
        %1114 = vmatprep.mubr.bf16.mxu0 0
        %1115 = vmatmul.mubr.bf16.gmra.mrb[0].mxu0 %v600
        %v1116 = vpop.f32.mrb[0].mxu0
        %v1117 = vadd.f32 %v465, %v1116
        %v1118 = vpop.f32.mrb[0].mxu0
        %v1119 = vadd.f32 %v469, %v1118
        %v1120 = vpop.f32.mrb[0].mxu0
        %v1121 = vadd.f32 %v465, %v1120
        %v1122 = vpop.f32.mrb[0].mxu0
        %v1123 = vadd.f32 %v469, %v1122
        %1124 = vmatprep.mubr.bf16.mxu0 0
        %1125 = vmatmul.mubr.bf16.gmra.mrb[0].mxu0 %v603
        %v1126 = vpop.f32.mrb[0].mxu0
        %v1127 = vadd.f32 %v465, %v1126
        %v1128 = vpop.f32.mrb[0].mxu0
        %v1129 = vadd.f32 %v469, %v1128
        %v1130 = vpop.f32.mrb[0].mxu0
        %v1131 = vadd.f32 %v465, %v1130
        %v1132 = vpop.f32.mrb[0].mxu0
        %v1133 = vadd.f32 %v469, %v1132
        %1134 = vmatprep.mubr.bf16.mxu0 0
        %1135 = vmatmul.mubr.bf16.gmra.mrb[0].mxu0 %v606
        %v1136 = vpop.f32.mrb[0].mxu0
        %v1137 = vadd.f32 %v465, %v1136
        %v1138 = vpop.f32.mrb[0].mxu0
        %v1139 = vadd.f32 %v469, %v1138
        %v1140 = vpop.f32.mrb[0].mxu0
        %v1141 = vadd.f32 %v465, %v1140
        %v1142 = vpop.f32.mrb[0].mxu0
        %v1143 = vadd.f32 %v469, %v1142
        %1144 = vmatprep.mubr.bf16.mxu0 0
        %1145 = vmatmul.mubr.bf16.gmra.mrb[0].mxu0 %v609
        %v1146 = vpop.f32.mrb[0].mxu0
        %v1147 = vadd.f32 %v465, %v1146
        %v1148 = vpop.f32.mrb[0].mxu0
        %v1149 = vadd.f32 %v469, %v1148
        %v1150 = vpop.f32.mrb[0].mxu0
        %v1151 = vadd.f32 %v465, %v1150
        %v1152 = vpop.f32.mrb[0].mxu0
        %v1153 = vadd.f32 %v469, %v1152
        %1154 = vmatprep.mubr.bf16.mxu0 0
        %1155 = vmatmul.mubr.bf16.gmra.mrb[0].mxu0 %v612
        %v1156 = vpop.f32.mrb[0].mxu0
        %v1157 = vadd.f32 %v465, %v1156
        %v1158 = vpop.f32.mrb[0].mxu0
        %v1159 = vadd.f32 %v469, %v1158
        %v1160 = vpop.f32.mrb[0].mxu0
        %v1161 = vadd.f32 %v465, %v1160
        %v1162 = vpop.f32.mrb[0].mxu0
        %v1163 = vadd.f32 %v469, %v1162
        %1164 = vmatprep.mubr.bf16.mxu0 0
        %1165 = vmatmul.mubr.bf16.gmra.mrb[0].mxu0 %v615
        %v1166 = vpop.f32.mrb[0].mxu0
        %v1167 = vadd.f32 %v465, %v1166
        %v1168 = vpop.f32.mrb[0].mxu0
        %v1169 = vadd.f32 %v469, %v1168
        %v1170 = vpop.f32.mrb[0].mxu0
        %v1171 = vadd.f32 %v465, %v1170
        %v1172 = vpop.f32.mrb[0].mxu0
        %v1173 = vadd.f32 %v469, %v1172
        %1174 = vmatprep.mubr.bf16.mxu0 0
        %1175 = vmatmul.mubr.bf16.gmra.mrb[0].mxu0 %v618
        %v1176 = vpop.f32.mrb[0].mxu0
        %v1177 = vadd.f32 %v465, %v1176
        %v1178 = vpop.f32.mrb[0].mxu0
        %v1179 = vadd.f32 %v469, %v1178
        %v1180 = vpop.f32.mrb[0].mxu0
        %v1181 = vadd.f32 %v465, %v1180
        %v1182 = vpop.f32.mrb[0].mxu0
        %v1183 = vadd.f32 %v469, %v1182
        %1184 = vmatprep.mubr.bf16.mxu0 0
        %1185 = vmatmul.mubr.bf16.gmra.mrb[0].mxu0 %v621
        %v1186 = vpop.f32.mrb[0].mxu0
        %v1187 = vadd.f32 %v465, %v1186
        %v1188 = vpop.f32.mrb[0].mxu0
        %v1189 = vadd.f32 %v469, %v1188
        %v1190 = vpop.f32.mrb[0].mxu0
        %v1191 = vadd.f32 %v465, %v1190
        %v1192 = vpop.f32.mrb[0].mxu0
        %v1193 = vadd.f32 %v469, %v1192
        %1194 = vmatprep.mubr.bf16.mxu0 0
        %1195 = vmatmul.mubr.bf16.gmra.mrb[0].mxu0 %v624
        %v1196 = vpop.f32.mrb[0].mxu0
        %v1197 = vadd.f32 %v465, %v1196
        %v1198 = vpop.f32.mrb[0].mxu0
        %v1199 = vadd.f32 %v469, %v1198
        %v1200 = vpop.f32.mrb[0].mxu0
        %v1201 = vadd.f32 %v465, %v1200
        %v1202 = vpop.f32.mrb[0].mxu0
        %v1203 = vadd.f32 %v469, %v1202
        %1204 = vmatprep.mubr.bf16.mxu0 0
        %1205 = vmatmul.mubr.bf16.gmra.mrb[0].mxu0 %v627
        %v1206 = vpop.f32.mrb[0].mxu0
        %v1207 = vadd.f32 %v465, %v1206
        %v1208 = vpop.f32.mrb[0].mxu0
        %v1209 = vadd.f32 %v469, %v1208
        %v1210 = vpop.f32.mrb[0].mxu0
        %v1211 = vadd.f32 %v465, %v1210
        %v1212 = vpop.f32.mrb[0].mxu0
        %v1213 = vadd.f32 %v469, %v1212
        %1214 = vmatprep.mubr.bf16.mxu0 0
        %1215 = vmatmul.mubr.bf16.gmra.mrb[0].mxu0 %v630
        %v1216 = vpop.f32.mrb[0].mxu0
        %v1217 = vadd.f32 %v465, %v1216
        %v1218 = vpop.f32.mrb[0].mxu0
        %v1219 = vadd.f32 %v469, %v1218
        %v1220 = vpop.f32.mrb[0].mxu0
        %v1221 = vadd.f32 %v465, %v1220
        %v1222 = vpop.f32.mrb[0].mxu0
        %v1223 = vadd.f32 %v469, %v1222
        %1224 = vmatprep.mubr.bf16.mxu0 0
        %1225 = vmatmul.mubr.bf16.gmra.mrb[0].mxu0 %v633
        %v1226 = vpop.f32.mrb[0].mxu0
        %v1227 = vadd.f32 %v465, %v1226
        %v1228 = vpop.f32.mrb[0].mxu0
        %v1229 = vadd.f32 %v469, %v1228
        %v1230 = vpop.f32.mrb[0].mxu0
        %v1231 = vadd.f32 %v465, %v1230
        %v1232 = vpop.f32.mrb[0].mxu0
        %v1233 = vadd.f32 %v469, %v1232
        %1234 = vmatprep.mubr.bf16.mxu0 0
        %1235 = vmatmul.mubr.bf16.gmra.mrb[0].mxu0 %v636
        %v1236 = vpop.f32.mrb[0].mxu0
        %v1237 = vadd.f32 %v465, %v1236
        %v1238 = vpop.f32.mrb[0].mxu0
        %v1239 = vadd.f32 %v469, %v1238
        %v1240 = vpop.f32.mrb[0].mxu0
        %v1241 = vadd.f32 %v465, %v1240
        %v1242 = vpop.f32.mrb[0].mxu0
        %v1243 = vadd.f32 %v469, %v1242
        %1244 = vmatprep.mubr.bf16.mxu0 0
        %1245 = vmatmul.mubr.bf16.gmra.mrb[0].mxu0 %v639
        %v1246 = vpop.f32.mrb[0].mxu0
        %v1247 = vadd.f32 %v465, %v1246
        %v1248 = vpop.f32.mrb[0].mxu0
        %v1249 = vadd.f32 %v469, %v1248
        %v1250 = vpop.f32.mrb[0].mxu0
        %v1251 = vadd.f32 %v465, %v1250
        %v1252 = vpop.f32.mrb[0].mxu0
        %v1253 = vadd.f32 %v469, %v1252
        %1254 = vmatprep.mubr.bf16.mxu0 0
        %1255 = vmatmul.mubr.bf16.gmra.mrb[0].mxu0 %v642
        %v1256 = vpop.f32.mrb[0].mxu0
        %v1257 = vadd.f32 %v465, %v1256
        %v1258 = vpop.f32.mrb[0].mxu0
        %v1259 = vadd.f32 %v469, %v1258
        %v1260 = vpop.f32.mrb[0].mxu0
        %v1261 = vadd.f32 %v465, %v1260
        %v1262 = vpop.f32.mrb[0].mxu0
        %v1263 = vadd.f32 %v469, %v1262
        %1264 = vmatprep.mubr.bf16.mxu0 0
        %1265 = vmatmul.mubr.bf16.gmra.mrb[0].mxu0 %v645
        %v1266 = vpop.f32.mrb[0].mxu0
        %v1267 = vadd.f32 %v465, %v1266
        %v1268 = vpop.f32.mrb[0].mxu0
        %v1269 = vadd.f32 %v469, %v1268
        %v1270 = vpop.f32.mrb[0].mxu0
        %v1271 = vadd.f32 %v465, %v1270
        %v1272 = vpop.f32.mrb[0].mxu0
        %v1273 = vadd.f32 %v469, %v1272
        %1274 = vdwg.mxu0
        %1275 = vmatprep.subr.bf16.mxu0 %v670
        %1276 = vmatpush1.bf16.msra.mxu0 %v667
        %1277 = vmatprep.subr.bf16.mxu0 0
        %1278 = vmatpush1.bf16.msra.mxu0 0
        %1279 = vmatprep.subr.bf16.mxu0 0
        %1280 = vmatpush1.bf16.msra.mxu0 0
        %1281 = vmatprep.subr.bf16.mxu0 0
        %1282 = vmatpush1.bf16.msra.mxu0 0
        %1283 = vmatprep.subr.bf16.mxu0 0
        %1284 = vmatpush1.bf16.msra.mxu0 0
        %1285 = vmatprep.subr.bf16.mxu0 0
        %1286 = vmatpush1.bf16.msra.mxu0 0
        %1287 = vmatprep.subr.bf16.mxu0 0
        %1288 = vmatpush1.bf16.msra.mxu0 0
        %1289 = vmatprep.subr.bf16.mxu0 0
        %1290 = vmatpush1.bf16.msra.mxu0 0
        %1291 = vmatprep.subr.bf16.mxu0 0
        %1292 = vmatpush1.bf16.msra.mxu0 0
        %1293 = vmatprep.subr.bf16.mxu0 0
        %1294 = vmatpush1.bf16.msra.mxu0 0
        %1295 = vmatprep.subr.bf16.mxu0 0
        %1296 = vmatpush1.bf16.msra.mxu0 0
        %1297 = vmatprep.subr.bf16.mxu0 0
        %1298 = vmatpush1.bf16.msra.mxu0 0
        %1299 = vmatprep.subr.bf16.mxu0 0
        %1300 = vmatpush1.bf16.msra.mxu0 0
        %1301 = vmatprep.subr.bf16.mxu0 0
        %1302 = vmatpush1.bf16.msra.mxu0 0
        %1303 = vmatprep.subr.bf16.mxu0 0
        %1304 = vmatpush1.bf16.msra.mxu0 0
        %1305 = vmatprep.subr.bf16.mxu0 0
        %1306 = vmatpush1.bf16.msra.mxu0 0
        %1307 = vmatprep.mubr.bf16.mxu0 0
        %1308 = vmatmul.mubr.bf16.gmra.mrb[0].mxu0 %v600
        %v1309 = vpop.f32.mrb[0].mxu0
        %v1310 = vadd.f32 %v473, %v1309
        %v1311 = vpop.f32.mrb[0].mxu0
        %v1312 = vadd.f32 %v477, %v1311
        %v1313 = vpop.f32.mrb[0].mxu0
        %v1314 = vadd.f32 %v473, %v1313
        %v1315 = vpop.f32.mrb[0].mxu0
        %v1316 = vadd.f32 %v477, %v1315
        %1317 = vmatprep.mubr.bf16.mxu0 0
        %1318 = vmatmul.mubr.bf16.gmra.mrb[0].mxu0 %v603
        %v1319 = vpop.f32.mrb[0].mxu0
        %v1320 = vadd.f32 %v473, %v1319
        %v1321 = vpop.f32.mrb[0].mxu0
        %v1322 = vadd.f32 %v477, %v1321
        %v1323 = vpop.f32.mrb[0].mxu0
        %v1324 = vadd.f32 %v473, %v1323
        %v1325 = vpop.f32.mrb[0].mxu0
        %v1326 = vadd.f32 %v477, %v1325
        %1327 = vmatprep.mubr.bf16.mxu0 0
        %1328 = vmatmul.mubr.bf16.gmra.mrb[0].mxu0 %v606
        %v1329 = vpop.f32.mrb[0].mxu0
        %v1330 = vadd.f32 %v473, %v1329
        %v1331 = vpop.f32.mrb[0].mxu0
        %v1332 = vadd.f32 %v477, %v1331
        %v1333 = vpop.f32.mrb[0].mxu0
        %v1334 = vadd.f32 %v473, %v1333
        %v1335 = vpop.f32.mrb[0].mxu0
        %v1336 = vadd.f32 %v477, %v1335
        %1337 = vmatprep.mubr.bf16.mxu0 0
        %1338 = vmatmul.mubr.bf16.gmra.mrb[0].mxu0 %v609
        %v1339 = vpop.f32.mrb[0].mxu0
        %v1340 = vadd.f32 %v473, %v1339
        %v1341 = vpop.f32.mrb[0].mxu0
        %v1342 = vadd.f32 %v477, %v1341
        %v1343 = vpop.f32.mrb[0].mxu0
        %v1344 = vadd.f32 %v473, %v1343
        %v1345 = vpop.f32.mrb[0].mxu0
        %v1346 = vadd.f32 %v477, %v1345
        %1347 = vmatprep.mubr.bf16.mxu0 0
        %1348 = vmatmul.mubr.bf16.gmra.mrb[0].mxu0 %v612
        %v1349 = vpop.f32.mrb[0].mxu0
        %v1350 = vadd.f32 %v473, %v1349
        %v1351 = vpop.f32.mrb[0].mxu0
        %v1352 = vadd.f32 %v477, %v1351
        %v1353 = vpop.f32.mrb[0].mxu0
        %v1354 = vadd.f32 %v473, %v1353
        %v1355 = vpop.f32.mrb[0].mxu0
        %v1356 = vadd.f32 %v477, %v1355
        %1357 = vmatprep.mubr.bf16.mxu0 0
        %1358 = vmatmul.mubr.bf16.gmra.mrb[0].mxu0 %v615
        %v1359 = vpop.f32.mrb[0].mxu0
        %v1360 = vadd.f32 %v473, %v1359
        %v1361 = vpop.f32.mrb[0].mxu0
        %v1362 = vadd.f32 %v477, %v1361
        %v1363 = vpop.f32.mrb[0].mxu0
        %v1364 = vadd.f32 %v473, %v1363
        %v1365 = vpop.f32.mrb[0].mxu0
        %v1366 = vadd.f32 %v477, %v1365
        %1367 = vmatprep.mubr.bf16.mxu0 0
        %1368 = vmatmul.mubr.bf16.gmra.mrb[0].mxu0 %v618
        %v1369 = vpop.f32.mrb[0].mxu0
        %v1370 = vadd.f32 %v473, %v1369
        %v1371 = vpop.f32.mrb[0].mxu0
        %v1372 = vadd.f32 %v477, %v1371
        %v1373 = vpop.f32.mrb[0].mxu0
        %v1374 = vadd.f32 %v473, %v1373
        %v1375 = vpop.f32.mrb[0].mxu0
        %v1376 = vadd.f32 %v477, %v1375
        %1377 = vmatprep.mubr.bf16.mxu0 0
        %1378 = vmatmul.mubr.bf16.gmra.mrb[0].mxu0 %v621
        %v1379 = vpop.f32.mrb[0].mxu0
        %v1380 = vadd.f32 %v473, %v1379
        %v1381 = vpop.f32.mrb[0].mxu0
        %v1382 = vadd.f32 %v477, %v1381
        %v1383 = vpop.f32.mrb[0].mxu0
        %v1384 = vadd.f32 %v473, %v1383
        %v1385 = vpop.f32.mrb[0].mxu0
        %v1386 = vadd.f32 %v477, %v1385
        %1387 = vmatprep.mubr.bf16.mxu0 0
        %1388 = vmatmul.mubr.bf16.gmra.mrb[0].mxu0 %v624
        %v1389 = vpop.f32.mrb[0].mxu0
        %v1390 = vadd.f32 %v473, %v1389
        %v1391 = vpop.f32.mrb[0].mxu0
        %v1392 = vadd.f32 %v477, %v1391
        %v1393 = vpop.f32.mrb[0].mxu0
        %v1394 = vadd.f32 %v473, %v1393
        %v1395 = vpop.f32.mrb[0].mxu0
        %v1396 = vadd.f32 %v477, %v1395
        %1397 = vmatprep.mubr.bf16.mxu0 0
        %1398 = vmatmul.mubr.bf16.gmra.mrb[0].mxu0 %v627
        %v1399 = vpop.f32.mrb[0].mxu0
        %v1400 = vadd.f32 %v473, %v1399
        %v1401 = vpop.f32.mrb[0].mxu0
        %v1402 = vadd.f32 %v477, %v1401
        %v1403 = vpop.f32.mrb[0].mxu0
        %v1404 = vadd.f32 %v473, %v1403
        %v1405 = vpop.f32.mrb[0].mxu0
        %v1406 = vadd.f32 %v477, %v1405
        %1407 = vmatprep.mubr.bf16.mxu0 0
        %1408 = vmatmul.mubr.bf16.gmra.mrb[0].mxu0 %v630
        %v1409 = vpop.f32.mrb[0].mxu0
        %v1410 = vadd.f32 %v473, %v1409
        %v1411 = vpop.f32.mrb[0].mxu0
        %v1412 = vadd.f32 %v477, %v1411
        %v1413 = vpop.f32.mrb[0].mxu0
        %v1414 = vadd.f32 %v473, %v1413
        %v1415 = vpop.f32.mrb[0].mxu0
        %v1416 = vadd.f32 %v477, %v1415
        %1417 = vmatprep.mubr.bf16.mxu0 0
        %1418 = vmatmul.mubr.bf16.gmra.mrb[0].mxu0 %v633
        %v1419 = vpop.f32.mrb[0].mxu0
        %v1420 = vadd.f32 %v473, %v1419
        %v1421 = vpop.f32.mrb[0].mxu0
        %v1422 = vadd.f32 %v477, %v1421
        %v1423 = vpop.f32.mrb[0].mxu0
        %v1424 = vadd.f32 %v473, %v1423
        %v1425 = vpop.f32.mrb[0].mxu0
        %v1426 = vadd.f32 %v477, %v1425
        %1427 = vmatprep.mubr.bf16.mxu0 0
        %1428 = vmatmul.mubr.bf16.gmra.mrb[0].mxu0 %v636
        %v1429 = vpop.f32.mrb[0].mxu0
        %v1430 = vadd.f32 %v473, %v1429
        %v1431 = vpop.f32.mrb[0].mxu0
        %v1432 = vadd.f32 %v477, %v1431
        %v1433 = vpop.f32.mrb[0].mxu0
        %v1434 = vadd.f32 %v473, %v1433
        %v1435 = vpop.f32.mrb[0].mxu0
        %v1436 = vadd.f32 %v477, %v1435
        %1437 = vmatprep.mubr.bf16.mxu0 0
        %1438 = vmatmul.mubr.bf16.gmra.mrb[0].mxu0 %v639
        %v1439 = vpop.f32.mrb[0].mxu0
        %v1440 = vadd.f32 %v473, %v1439
        %v1441 = vpop.f32.mrb[0].mxu0
        %v1442 = vadd.f32 %v477, %v1441
        %v1443 = vpop.f32.mrb[0].mxu0
        %v1444 = vadd.f32 %v473, %v1443
        %v1445 = vpop.f32.mrb[0].mxu0
        %v1446 = vadd.f32 %v477, %v1445
        %1447 = vmatprep.mubr.bf16.mxu0 0
        %1448 = vmatmul.mubr.bf16.gmra.mrb[0].mxu0 %v642
        %v1449 = vpop.f32.mrb[0].mxu0
        %v1450 = vadd.f32 %v473, %v1449
        %v1451 = vpop.f32.mrb[0].mxu0
        %v1452 = vadd.f32 %v477, %v1451
        %v1453 = vpop.f32.mrb[0].mxu0
        %v1454 = vadd.f32 %v473, %v1453
        %v1455 = vpop.f32.mrb[0].mxu0
        %v1456 = vadd.f32 %v477, %v1455
        %1457 = vmatprep.mubr.bf16.mxu0 0
        %1458 = vmatmul.mubr.bf16.gmra.mrb[0].mxu0 %v645
        %v1459 = vpop.f32.mrb[0].mxu0
        %v1460 = vadd.f32 %v473, %v1459
        %v1461 = vpop.f32.mrb[0].mxu0
        %v1462 = vadd.f32 %v477, %v1461
        %v1463 = vpop.f32.mrb[0].mxu0
        %v1464 = vadd.f32 %v473, %v1463
        %v1465 = vpop.f32.mrb[0].mxu0
        %v1466 = vadd.f32 %v477, %v1465
        %1467 = vdwg.mxu0
        %1468 = vmatprep.subr.bf16.mxu0 %v676
        %1469 = vmatpush1.bf16.msra.mxu0 %v673
        %1470 = vmatprep.subr.bf16.mxu0 0
        %1471 = vmatpush1.bf16.msra.mxu0 0
        %1472 = vmatprep.subr.bf16.mxu0 0
        %1473 = vmatpush1.bf16.msra.mxu0 0
        %1474 = vmatprep.subr.bf16.mxu0 0
        %1475 = vmatpush1.bf16.msra.mxu0 0
        %1476 = vmatprep.subr.bf16.mxu0 0
        %1477 = vmatpush1.bf16.msra.mxu0 0
        %1478 = vmatprep.subr.bf16.mxu0 0
        %1479 = vmatpush1.bf16.msra.mxu0 0
        %1480 = vmatprep.subr.bf16.mxu0 0
        %1481 = vmatpush1.bf16.msra.mxu0 0
        %1482 = vmatprep.subr.bf16.mxu0 0
        %1483 = vmatpush1.bf16.msra.mxu0 0
        %1484 = vmatprep.subr.bf16.mxu0 0
        %1485 = vmatpush1.bf16.msra.mxu0 0
        %1486 = vmatprep.subr.bf16.mxu0 0
        %1487 = vmatpush1.bf16.msra.mxu0 0
        %1488 = vmatprep.subr.bf16.mxu0 0
        %1489 = vmatpush1.bf16.msra.mxu0 0
        %1490 = vmatprep.subr.bf16.mxu0 0
        %1491 = vmatpush1.bf16.msra.mxu0 0
        %1492 = vmatprep.subr.bf16.mxu0 0
        %1493 = vmatpush1.bf16.msra.mxu0 0
        %1494 = vmatprep.subr.bf16.mxu0 0
        %1495 = vmatpush1.bf16.msra.mxu0 0
        %1496 = vmatprep.subr.bf16.mxu0 0
        %1497 = vmatpush1.bf16.msra.mxu0 0
        %1498 = vmatprep.subr.bf16.mxu0 0
        %1499 = vmatpush1.bf16.msra.mxu0 0
        %1500 = vmatprep.mubr.bf16.mxu0 0
        %1501 = vmatmul.mubr.bf16.gmra.mrb[0].mxu0 %v600
        %v1502 = vpop.f32.mrb[0].mxu0
        %v1503 = vadd.f32 %v481, %v1502
        %v1504 = vpop.f32.mrb[0].mxu0
        %v1505 = vadd.f32 %v485, %v1504
        %v1506 = vpop.f32.mrb[0].mxu0
        %v1507 = vadd.f32 %v481, %v1506
        %v1508 = vpop.f32.mrb[0].mxu0
        %v1509 = vadd.f32 %v485, %v1508
        %1510 = vmatprep.mubr.bf16.mxu0 0
        %1511 = vmatmul.mubr.bf16.gmra.mrb[0].mxu0 %v603
        %v1512 = vpop.f32.mrb[0].mxu0
        %v1513 = vadd.f32 %v481, %v1512
        %v1514 = vpop.f32.mrb[0].mxu0
        %v1515 = vadd.f32 %v485, %v1514
        %v1516 = vpop.f32.mrb[0].mxu0
        %v1517 = vadd.f32 %v481, %v1516
        %v1518 = vpop.f32.mrb[0].mxu0
        %v1519 = vadd.f32 %v485, %v1518
        %1520 = vmatprep.mubr.bf16.mxu0 0
        %1521 = vmatmul.mubr.bf16.gmra.mrb[0].mxu0 %v606
        %v1522 = vpop.f32.mrb[0].mxu0
        %v1523 = vadd.f32 %v481, %v1522
        %v1524 = vpop.f32.mrb[0].mxu0
        %v1525 = vadd.f32 %v485, %v1524
        %v1526 = vpop.f32.mrb[0].mxu0
        %v1527 = vadd.f32 %v481, %v1526
        %v1528 = vpop.f32.mrb[0].mxu0
        %v1529 = vadd.f32 %v485, %v1528
        %1530 = vmatprep.mubr.bf16.mxu0 0
        %1531 = vmatmul.mubr.bf16.gmra.mrb[0].mxu0 %v609
        %v1532 = vpop.f32.mrb[0].mxu0
        %v1533 = vadd.f32 %v481, %v1532
        %v1534 = vpop.f32.mrb[0].mxu0
        %v1535 = vadd.f32 %v485, %v1534
        %v1536 = vpop.f32.mrb[0].mxu0
        %v1537 = vadd.f32 %v481, %v1536
        %v1538 = vpop.f32.mrb[0].mxu0
        %v1539 = vadd.f32 %v485, %v1538
        %1540 = vmatprep.mubr.bf16.mxu0 0
        %1541 = vmatmul.mubr.bf16.gmra.mrb[0].mxu0 %v612
        %v1542 = vpop.f32.mrb[0].mxu0
        %v1543 = vadd.f32 %v481, %v1542
        %v1544 = vpop.f32.mrb[0].mxu0
        %v1545 = vadd.f32 %v485, %v1544
        %v1546 = vpop.f32.mrb[0].mxu0
        %v1547 = vadd.f32 %v481, %v1546
        %v1548 = vpop.f32.mrb[0].mxu0
        %v1549 = vadd.f32 %v485, %v1548
        %1550 = vmatprep.mubr.bf16.mxu0 0
        %1551 = vmatmul.mubr.bf16.gmra.mrb[0].mxu0 %v615
        %v1552 = vpop.f32.mrb[0].mxu0
        %v1553 = vadd.f32 %v481, %v1552
        %v1554 = vpop.f32.mrb[0].mxu0
        %v1555 = vadd.f32 %v485, %v1554
        %v1556 = vpop.f32.mrb[0].mxu0
        %v1557 = vadd.f32 %v481, %v1556
        %v1558 = vpop.f32.mrb[0].mxu0
        %v1559 = vadd.f32 %v485, %v1558
        %1560 = vmatprep.mubr.bf16.mxu0 0
        %1561 = vmatmul.mubr.bf16.gmra.mrb[0].mxu0 %v618
        %v1562 = vpop.f32.mrb[0].mxu0
        %v1563 = vadd.f32 %v481, %v1562
        %v1564 = vpop.f32.mrb[0].mxu0
        %v1565 = vadd.f32 %v485, %v1564
        %v1566 = vpop.f32.mrb[0].mxu0
        %v1567 = vadd.f32 %v481, %v1566
        %v1568 = vpop.f32.mrb[0].mxu0
        %v1569 = vadd.f32 %v485, %v1568
        %1570 = vmatprep.mubr.bf16.mxu0 0
        %1571 = vmatmul.mubr.bf16.gmra.mrb[0].mxu0 %v621
        %v1572 = vpop.f32.mrb[0].mxu0
        %v1573 = vadd.f32 %v481, %v1572
        %v1574 = vpop.f32.mrb[0].mxu0
        %v1575 = vadd.f32 %v485, %v1574
        %v1576 = vpop.f32.mrb[0].mxu0
        %v1577 = vadd.f32 %v481, %v1576
        %v1578 = vpop.f32.mrb[0].mxu0
        %v1579 = vadd.f32 %v485, %v1578
        %1580 = vmatprep.mubr.bf16.mxu0 0
        %1581 = vmatmul.mubr.bf16.gmra.mrb[0].mxu0 %v624
        %v1582 = vpop.f32.mrb[0].mxu0
        %v1583 = vadd.f32 %v481, %v1582
        %v1584 = vpop.f32.mrb[0].mxu0
        %v1585 = vadd.f32 %v485, %v1584
        %v1586 = vpop.f32.mrb[0].mxu0
        %v1587 = vadd.f32 %v481, %v1586
        %v1588 = vpop.f32.mrb[0].mxu0
        %v1589 = vadd.f32 %v485, %v1588
        %1590 = vmatprep.mubr.bf16.mxu0 0
        %1591 = vmatmul.mubr.bf16.gmra.mrb[0].mxu0 %v627
        %v1592 = vpop.f32.mrb[0].mxu0
        %v1593 = vadd.f32 %v481, %v1592
        %v1594 = vpop.f32.mrb[0].mxu0
        %v1595 = vadd.f32 %v485, %v1594
        %v1596 = vpop.f32.mrb[0].mxu0
        %v1597 = vadd.f32 %v481, %v1596
        %v1598 = vpop.f32.mrb[0].mxu0
        %v1599 = vadd.f32 %v485, %v1598
        %1600 = vmatprep.mubr.bf16.mxu0 0
        %1601 = vmatmul.mubr.bf16.gmra.mrb[0].mxu0 %v630
        %v1602 = vpop.f32.mrb[0].mxu0
        %v1603 = vadd.f32 %v481, %v1602
        %v1604 = vpop.f32.mrb[0].mxu0
        %v1605 = vadd.f32 %v485, %v1604
        %v1606 = vpop.f32.mrb[0].mxu0
        %v1607 = vadd.f32 %v481, %v1606
        %v1608 = vpop.f32.mrb[0].mxu0
        %v1609 = vadd.f32 %v485, %v1608
        %1610 = vmatprep.mubr.bf16.mxu0 0
        %1611 = vmatmul.mubr.bf16.gmra.mrb[0].mxu0 %v633
        %v1612 = vpop.f32.mrb[0].mxu0
        %v1613 = vadd.f32 %v481, %v1612
        %v1614 = vpop.f32.mrb[0].mxu0
        %v1615 = vadd.f32 %v485, %v1614
        %v1616 = vpop.f32.mrb[0].mxu0
        %v1617 = vadd.f32 %v481, %v1616
        %v1618 = vpop.f32.mrb[0].mxu0
        %v1619 = vadd.f32 %v485, %v1618
        %1620 = vmatprep.mubr.bf16.mxu0 0
        %1621 = vmatmul.mubr.bf16.gmra.mrb[0].mxu0 %v636
        %v1622 = vpop.f32.mrb[0].mxu0
        %v1623 = vadd.f32 %v481, %v1622
        %v1624 = vpop.f32.mrb[0].mxu0
        %v1625 = vadd.f32 %v485, %v1624
        %v1626 = vpop.f32.mrb[0].mxu0
        %v1627 = vadd.f32 %v481, %v1626
        %v1628 = vpop.f32.mrb[0].mxu0
        %v1629 = vadd.f32 %v485, %v1628
        %1630 = vmatprep.mubr.bf16.mxu0 0
        %1631 = vmatmul.mubr.bf16.gmra.mrb[0].mxu0 %v639
        %v1632 = vpop.f32.mrb[0].mxu0
        %v1633 = vadd.f32 %v481, %v1632
        %v1634 = vpop.f32.mrb[0].mxu0
        %v1635 = vadd.f32 %v485, %v1634
        %v1636 = vpop.f32.mrb[0].mxu0
        %v1637 = vadd.f32 %v481, %v1636
        %v1638 = vpop.f32.mrb[0].mxu0
        %v1639 = vadd.f32 %v485, %v1638
        %1640 = vmatprep.mubr.bf16.mxu0 0
        %1641 = vmatmul.mubr.bf16.gmra.mrb[0].mxu0 %v642
        %v1642 = vpop.f32.mrb[0].mxu0
        %v1643 = vadd.f32 %v481, %v1642
        %v1644 = vpop.f32.mrb[0].mxu0
        %v1645 = vadd.f32 %v485, %v1644
        %v1646 = vpop.f32.mrb[0].mxu0
        %v1647 = vadd.f32 %v481, %v1646
        %v1648 = vpop.f32.mrb[0].mxu0
        %v1649 = vadd.f32 %v485, %v1648
        %1650 = vmatprep.mubr.bf16.mxu0 0
        %1651 = vmatmul.mubr.bf16.gmra.mrb[0].mxu0 %v645
        %v1652 = vpop.f32.mrb[0].mxu0
        %v1653 = vadd.f32 %v481, %v1652
        %v1654 = vpop.f32.mrb[0].mxu0
        %v1655 = vadd.f32 %v485, %v1654
        %v1656 = vpop.f32.mrb[0].mxu0
        %v1657 = vadd.f32 %v481, %v1656
        %v1658 = vpop.f32.mrb[0].mxu0
        %v1659 = vadd.f32 %v485, %v1658
        %1660 = vdwg.mxu0
        %1661 = vmatprep.subr.bf16.mxu0 %v682
        %1662 = vmatpush1.bf16.msra.mxu0 %v679
        %1663 = vmatprep.subr.bf16.mxu0 0
        %1664 = vmatpush1.bf16.msra.mxu0 0
        %1665 = vmatprep.subr.bf16.mxu0 0
        %1666 = vmatpush1.bf16.msra.mxu0 0
        %1667 = vmatprep.subr.bf16.mxu0 0
        %1668 = vmatpush1.bf16.msra.mxu0 0
        %1669 = vmatprep.subr.bf16.mxu0 0
        %1670 = vmatpush1.bf16.msra.mxu0 0
        %1671 = vmatprep.subr.bf16.mxu0 0
        %1672 = vmatpush1.bf16.msra.mxu0 0
        %1673 = vmatprep.subr.bf16.mxu0 0
        %1674 = vmatpush1.bf16.msra.mxu0 0
        %1675 = vmatprep.subr.bf16.mxu0 0
        %1676 = vmatpush1.bf16.msra.mxu0 0
        %1677 = vmatprep.subr.bf16.mxu0 0
        %1678 = vmatpush1.bf16.msra.mxu0 0
        %1679 = vmatprep.subr.bf16.mxu0 0
        %1680 = vmatpush1.bf16.msra.mxu0 0
        %1681 = vmatprep.subr.bf16.mxu0 0
        %1682 = vmatpush1.bf16.msra.mxu0 0
        %1683 = vmatprep.subr.bf16.mxu0 0
        %1684 = vmatpush1.bf16.msra.mxu0 0
        %1685 = vmatprep.subr.bf16.mxu0 0
        %1686 = vmatpush1.bf16.msra.mxu0 0
        %1687 = vmatprep.subr.bf16.mxu0 0
        %1688 = vmatpush1.bf16.msra.mxu0 0
        %1689 = vmatprep.subr.bf16.mxu0 0
        %1690 = vmatpush1.bf16.msra.mxu0 0
        %1691 = vmatprep.subr.bf16.mxu0 0
        %1692 = vmatpush1.bf16.msra.mxu0 0
        %1693 = vmatprep.mubr.bf16.mxu0 0
        %1694 = vmatmul.mubr.bf16.gmra.mrb[0].mxu0 %v600
        %v1695 = vpop.f32.mrb[0].mxu0
        %v1696 = vadd.f32 %v489, %v1695
        %v1697 = vpop.f32.mrb[0].mxu0
        %v1698 = vadd.f32 %v493, %v1697
        %v1699 = vpop.f32.mrb[0].mxu0
        %v1700 = vadd.f32 %v489, %v1699
        %v1701 = vpop.f32.mrb[0].mxu0
        %v1702 = vadd.f32 %v493, %v1701
        %1703 = vmatprep.mubr.bf16.mxu0 0
        %1704 = vmatmul.mubr.bf16.gmra.mrb[0].mxu0 %v603
        %v1705 = vpop.f32.mrb[0].mxu0
        %v1706 = vadd.f32 %v489, %v1705
        %v1707 = vpop.f32.mrb[0].mxu0
        %v1708 = vadd.f32 %v493, %v1707
        %v1709 = vpop.f32.mrb[0].mxu0
        %v1710 = vadd.f32 %v489, %v1709
        %v1711 = vpop.f32.mrb[0].mxu0
        %v1712 = vadd.f32 %v493, %v1711
        %1713 = vmatprep.mubr.bf16.mxu0 0
        %1714 = vmatmul.mubr.bf16.gmra.mrb[0].mxu0 %v606
        %v1715 = vpop.f32.mrb[0].mxu0
        %v1716 = vadd.f32 %v489, %v1715
        %v1717 = vpop.f32.mrb[0].mxu0
        %v1718 = vadd.f32 %v493, %v1717
        %v1719 = vpop.f32.mrb[0].mxu0
        %v1720 = vadd.f32 %v489, %v1719
        %v1721 = vpop.f32.mrb[0].mxu0
        %v1722 = vadd.f32 %v493, %v1721
        %1723 = vmatprep.mubr.bf16.mxu0 0
        %1724 = vmatmul.mubr.bf16.gmra.mrb[0].mxu0 %v609
        %v1725 = vpop.f32.mrb[0].mxu0
        %v1726 = vadd.f32 %v489, %v1725
        %v1727 = vpop.f32.mrb[0].mxu0
        %v1728 = vadd.f32 %v493, %v1727
        %v1729 = vpop.f32.mrb[0].mxu0
        %v1730 = vadd.f32 %v489, %v1729
        %v1731 = vpop.f32.mrb[0].mxu0
        %v1732 = vadd.f32 %v493, %v1731
        %1733 = vmatprep.mubr.bf16.mxu0 0
        %1734 = vmatmul.mubr.bf16.gmra.mrb[0].mxu0 %v612
        %v1735 = vpop.f32.mrb[0].mxu0
        %v1736 = vadd.f32 %v489, %v1735
        %v1737 = vpop.f32.mrb[0].mxu0
        %v1738 = vadd.f32 %v493, %v1737
        %v1739 = vpop.f32.mrb[0].mxu0
        %v1740 = vadd.f32 %v489, %v1739
        %v1741 = vpop.f32.mrb[0].mxu0
        %v1742 = vadd.f32 %v493, %v1741
        %1743 = vmatprep.mubr.bf16.mxu0 0
        %1744 = vmatmul.mubr.bf16.gmra.mrb[0].mxu0 %v615
        %v1745 = vpop.f32.mrb[0].mxu0
        %v1746 = vadd.f32 %v489, %v1745
        %v1747 = vpop.f32.mrb[0].mxu0
        %v1748 = vadd.f32 %v493, %v1747
        %v1749 = vpop.f32.mrb[0].mxu0
        %v1750 = vadd.f32 %v489, %v1749
        %v1751 = vpop.f32.mrb[0].mxu0
        %v1752 = vadd.f32 %v493, %v1751
        %1753 = vmatprep.mubr.bf16.mxu0 0
        %1754 = vmatmul.mubr.bf16.gmra.mrb[0].mxu0 %v618
        %v1755 = vpop.f32.mrb[0].mxu0
        %v1756 = vadd.f32 %v489, %v1755
        %v1757 = vpop.f32.mrb[0].mxu0
        %v1758 = vadd.f32 %v493, %v1757
        %v1759 = vpop.f32.mrb[0].mxu0
        %v1760 = vadd.f32 %v489, %v1759
        %v1761 = vpop.f32.mrb[0].mxu0
        %v1762 = vadd.f32 %v493, %v1761
        %1763 = vmatprep.mubr.bf16.mxu0 0
        %1764 = vmatmul.mubr.bf16.gmra.mrb[0].mxu0 %v621
        %v1765 = vpop.f32.mrb[0].mxu0
        %v1766 = vadd.f32 %v489, %v1765
        %v1767 = vpop.f32.mrb[0].mxu0
        %v1768 = vadd.f32 %v493, %v1767
        %v1769 = vpop.f32.mrb[0].mxu0
        %v1770 = vadd.f32 %v489, %v1769
        %v1771 = vpop.f32.mrb[0].mxu0
        %v1772 = vadd.f32 %v493, %v1771
        %1773 = vmatprep.mubr.bf16.mxu0 0
        %1774 = vmatmul.mubr.bf16.gmra.mrb[0].mxu0 %v624
        %v1775 = vpop.f32.mrb[0].mxu0
        %v1776 = vadd.f32 %v489, %v1775
        %v1777 = vpop.f32.mrb[0].mxu0
        %v1778 = vadd.f32 %v493, %v1777
        %v1779 = vpop.f32.mrb[0].mxu0
        %v1780 = vadd.f32 %v489, %v1779
        %v1781 = vpop.f32.mrb[0].mxu0
        %v1782 = vadd.f32 %v493, %v1781
        %1783 = vmatprep.mubr.bf16.mxu0 0
        %1784 = vmatmul.mubr.bf16.gmra.mrb[0].mxu0 %v627
        %v1785 = vpop.f32.mrb[0].mxu0
        %v1786 = vadd.f32 %v489, %v1785
        %v1787 = vpop.f32.mrb[0].mxu0
        %v1788 = vadd.f32 %v493, %v1787
        %v1789 = vpop.f32.mrb[0].mxu0
        %v1790 = vadd.f32 %v489, %v1789
        %v1791 = vpop.f32.mrb[0].mxu0
        %v1792 = vadd.f32 %v493, %v1791
        %1793 = vmatprep.mubr.bf16.mxu0 0
        %1794 = vmatmul.mubr.bf16.gmra.mrb[0].mxu0 %v630
        %v1795 = vpop.f32.mrb[0].mxu0
        %v1796 = vadd.f32 %v489, %v1795
        %v1797 = vpop.f32.mrb[0].mxu0
        %v1798 = vadd.f32 %v493, %v1797
        %v1799 = vpop.f32.mrb[0].mxu0
        %v1800 = vadd.f32 %v489, %v1799
        %v1801 = vpop.f32.mrb[0].mxu0
        %v1802 = vadd.f32 %v493, %v1801
        %1803 = vmatprep.mubr.bf16.mxu0 0
        %1804 = vmatmul.mubr.bf16.gmra.mrb[0].mxu0 %v633
        %v1805 = vpop.f32.mrb[0].mxu0
        %v1806 = vadd.f32 %v489, %v1805
        %v1807 = vpop.f32.mrb[0].mxu0
        %v1808 = vadd.f32 %v493, %v1807
        %v1809 = vpop.f32.mrb[0].mxu0
        %v1810 = vadd.f32 %v489, %v1809
        %v1811 = vpop.f32.mrb[0].mxu0
        %v1812 = vadd.f32 %v493, %v1811
        %1813 = vmatprep.mubr.bf16.mxu0 0
        %1814 = vmatmul.mubr.bf16.gmra.mrb[0].mxu0 %v636
        %v1815 = vpop.f32.mrb[0].mxu0
        %v1816 = vadd.f32 %v489, %v1815
        %v1817 = vpop.f32.mrb[0].mxu0
        %v1818 = vadd.f32 %v493, %v1817
        %v1819 = vpop.f32.mrb[0].mxu0
        %v1820 = vadd.f32 %v489, %v1819
        %v1821 = vpop.f32.mrb[0].mxu0
        %v1822 = vadd.f32 %v493, %v1821
        %1823 = vmatprep.mubr.bf16.mxu0 0
        %1824 = vmatmul.mubr.bf16.gmra.mrb[0].mxu0 %v639
        %v1825 = vpop.f32.mrb[0].mxu0
        %v1826 = vadd.f32 %v489, %v1825
        %v1827 = vpop.f32.mrb[0].mxu0
        %v1828 = vadd.f32 %v493, %v1827
        %v1829 = vpop.f32.mrb[0].mxu0
        %v1830 = vadd.f32 %v489, %v1829
        %v1831 = vpop.f32.mrb[0].mxu0
        %v1832 = vadd.f32 %v493, %v1831
        %1833 = vmatprep.mubr.bf16.mxu0 0
        %1834 = vmatmul.mubr.bf16.gmra.mrb[0].mxu0 %v642
        %v1835 = vpop.f32.mrb[0].mxu0
        %v1836 = vadd.f32 %v489, %v1835
        %v1837 = vpop.f32.mrb[0].mxu0
        %v1838 = vadd.f32 %v493, %v1837
        %v1839 = vpop.f32.mrb[0].mxu0
        %v1840 = vadd.f32 %v489, %v1839
        %v1841 = vpop.f32.mrb[0].mxu0
        %v1842 = vadd.f32 %v493, %v1841
        %1843 = vmatprep.mubr.bf16.mxu0 0
        %1844 = vmatmul.mubr.bf16.gmra.mrb[0].mxu0 %v645
        %v1845 = vpop.f32.mrb[0].mxu0
        %v1846 = vadd.f32 %v489, %v1845
        %v1847 = vpop.f32.mrb[0].mxu0
        %v1848 = vadd.f32 %v493, %v1847
        %v1849 = vpop.f32.mrb[0].mxu0
        %v1850 = vadd.f32 %v489, %v1849
        %v1851 = vpop.f32.mrb[0].mxu0
        %v1852 = vadd.f32 %v493, %v1851
        %1853 = vdwg.mxu0
        %1854 = vmatprep.subr.bf16.mxu0 %v688
        %1855 = vmatpush1.bf16.msra.mxu0 %v685
        %1856 = vmatprep.subr.bf16.mxu0 0
        %1857 = vmatpush1.bf16.msra.mxu0 0
        %1858 = vmatprep.subr.bf16.mxu0 0
        %1859 = vmatpush1.bf16.msra.mxu0 0
        %1860 = vmatprep.subr.bf16.mxu0 0
        %1861 = vmatpush1.bf16.msra.mxu0 0
        %1862 = vmatprep.subr.bf16.mxu0 0
        %1863 = vmatpush1.bf16.msra.mxu0 0
        %1864 = vmatprep.subr.bf16.mxu0 0
        %1865 = vmatpush1.bf16.msra.mxu0 0
        %1866 = vmatprep.subr.bf16.mxu0 0
        %1867 = vmatpush1.bf16.msra.mxu0 0
        %1868 = vmatprep.subr.bf16.mxu0 0
        %1869 = vmatpush1.bf16.msra.mxu0 0
        %1870 = vmatprep.subr.bf16.mxu0 0
        %1871 = vmatpush1.bf16.msra.mxu0 0
        %1872 = vmatprep.subr.bf16.mxu0 0
        %1873 = vmatpush1.bf16.msra.mxu0 0
        %1874 = vmatprep.subr.bf16.mxu0 0
        %1875 = vmatpush1.bf16.msra.mxu0 0
        %1876 = vmatprep.subr.bf16.mxu0 0
        %1877 = vmatpush1.bf16.msra.mxu0 0
        %1878 = vmatprep.subr.bf16.mxu0 0
        %1879 = vmatpush1.bf16.msra.mxu0 0
        %1880 = vmatprep.subr.bf16.mxu0 0
        %1881 = vmatpush1.bf16.msra.mxu0 0
        %1882 = vmatprep.subr.bf16.mxu0 0
        %1883 = vmatpush1.bf16.msra.mxu0 0
        %1884 = vmatprep.subr.bf16.mxu0 0
        %1885 = vmatpush1.bf16.msra.mxu0 0
        %1886 = vmatprep.mubr.bf16.mxu0 0
        %1887 = vmatmul.mubr.bf16.gmra.mrb[0].mxu0 %v600
        %v1888 = vpop.f32.mrb[0].mxu0
        %v1889 = vadd.f32 %v497, %v1888
        %v1890 = vpop.f32.mrb[0].mxu0
        %v1891 = vadd.f32 %v501, %v1890
        %v1892 = vpop.f32.mrb[0].mxu0
        %v1893 = vadd.f32 %v497, %v1892
        %v1894 = vpop.f32.mrb[0].mxu0
        %v1895 = vadd.f32 %v501, %v1894
        %1896 = vmatprep.mubr.bf16.mxu0 0
        %1897 = vmatmul.mubr.bf16.gmra.mrb[0].mxu0 %v603
        %v1898 = vpop.f32.mrb[0].mxu0
        %v1899 = vadd.f32 %v497, %v1898
        %v1900 = vpop.f32.mrb[0].mxu0
        %v1901 = vadd.f32 %v501, %v1900
        %v1902 = vpop.f32.mrb[0].mxu0
        %v1903 = vadd.f32 %v497, %v1902
        %v1904 = vpop.f32.mrb[0].mxu0
        %v1905 = vadd.f32 %v501, %v1904
        %1906 = vmatprep.mubr.bf16.mxu0 0
        %1907 = vmatmul.mubr.bf16.gmra.mrb[0].mxu0 %v606
        %v1908 = vpop.f32.mrb[0].mxu0
        %v1909 = vadd.f32 %v497, %v1908
        %v1910 = vpop.f32.mrb[0].mxu0
        %v1911 = vadd.f32 %v501, %v1910
        %v1912 = vpop.f32.mrb[0].mxu0
        %v1913 = vadd.f32 %v497, %v1912
        %v1914 = vpop.f32.mrb[0].mxu0
        %v1915 = vadd.f32 %v501, %v1914
        %1916 = vmatprep.mubr.bf16.mxu0 0
        %1917 = vmatmul.mubr.bf16.gmra.mrb[0].mxu0 %v609
        %v1918 = vpop.f32.mrb[0].mxu0
        %v1919 = vadd.f32 %v497, %v1918
        %v1920 = vpop.f32.mrb[0].mxu0
        %v1921 = vadd.f32 %v501, %v1920
        %v1922 = vpop.f32.mrb[0].mxu0
        %v1923 = vadd.f32 %v497, %v1922
        %v1924 = vpop.f32.mrb[0].mxu0
        %v1925 = vadd.f32 %v501, %v1924
        %1926 = vmatprep.mubr.bf16.mxu0 0
        %1927 = vmatmul.mubr.bf16.gmra.mrb[0].mxu0 %v612
        %v1928 = vpop.f32.mrb[0].mxu0
        %v1929 = vadd.f32 %v497, %v1928
        %v1930 = vpop.f32.mrb[0].mxu0
        %v1931 = vadd.f32 %v501, %v1930
        %v1932 = vpop.f32.mrb[0].mxu0
        %v1933 = vadd.f32 %v497, %v1932
        %v1934 = vpop.f32.mrb[0].mxu0
        %v1935 = vadd.f32 %v501, %v1934
        %1936 = vmatprep.mubr.bf16.mxu0 0
        %1937 = vmatmul.mubr.bf16.gmra.mrb[0].mxu0 %v615
        %v1938 = vpop.f32.mrb[0].mxu0
        %v1939 = vadd.f32 %v497, %v1938
        %v1940 = vpop.f32.mrb[0].mxu0
        %v1941 = vadd.f32 %v501, %v1940
        %v1942 = vpop.f32.mrb[0].mxu0
        %v1943 = vadd.f32 %v497, %v1942
        %v1944 = vpop.f32.mrb[0].mxu0
        %v1945 = vadd.f32 %v501, %v1944
        %1946 = vmatprep.mubr.bf16.mxu0 0
        %1947 = vmatmul.mubr.bf16.gmra.mrb[0].mxu0 %v618
        %v1948 = vpop.f32.mrb[0].mxu0
        %v1949 = vadd.f32 %v497, %v1948
        %v1950 = vpop.f32.mrb[0].mxu0
        %v1951 = vadd.f32 %v501, %v1950
        %v1952 = vpop.f32.mrb[0].mxu0
        %v1953 = vadd.f32 %v497, %v1952
        %v1954 = vpop.f32.mrb[0].mxu0
        %v1955 = vadd.f32 %v501, %v1954
        %1956 = vmatprep.mubr.bf16.mxu0 0
        %1957 = vmatmul.mubr.bf16.gmra.mrb[0].mxu0 %v621
        %v1958 = vpop.f32.mrb[0].mxu0
        %v1959 = vadd.f32 %v497, %v1958
        %v1960 = vpop.f32.mrb[0].mxu0
        %v1961 = vadd.f32 %v501, %v1960
        %v1962 = vpop.f32.mrb[0].mxu0
        %v1963 = vadd.f32 %v497, %v1962
        %v1964 = vpop.f32.mrb[0].mxu0
        %v1965 = vadd.f32 %v501, %v1964
        %1966 = vmatprep.mubr.bf16.mxu0 0
        %1967 = vmatmul.mubr.bf16.gmra.mrb[0].mxu0 %v624
        %v1968 = vpop.f32.mrb[0].mxu0
        %v1969 = vadd.f32 %v497, %v1968
        %v1970 = vpop.f32.mrb[0].mxu0
        %v1971 = vadd.f32 %v501, %v1970
        %v1972 = vpop.f32.mrb[0].mxu0
        %v1973 = vadd.f32 %v497, %v1972
        %v1974 = vpop.f32.mrb[0].mxu0
        %v1975 = vadd.f32 %v501, %v1974
        %1976 = vmatprep.mubr.bf16.mxu0 0
        %1977 = vmatmul.mubr.bf16.gmra.mrb[0].mxu0 %v627
        %v1978 = vpop.f32.mrb[0].mxu0
        %v1979 = vadd.f32 %v497, %v1978
        %v1980 = vpop.f32.mrb[0].mxu0
        %v1981 = vadd.f32 %v501, %v1980
        %v1982 = vpop.f32.mrb[0].mxu0
        %v1983 = vadd.f32 %v497, %v1982
        %v1984 = vpop.f32.mrb[0].mxu0
        %v1985 = vadd.f32 %v501, %v1984
        %1986 = vmatprep.mubr.bf16.mxu0 0
        %1987 = vmatmul.mubr.bf16.gmra.mrb[0].mxu0 %v630
        %v1988 = vpop.f32.mrb[0].mxu0
        %v1989 = vadd.f32 %v497, %v1988
        %v1990 = vpop.f32.mrb[0].mxu0
        %v1991 = vadd.f32 %v501, %v1990
        %v1992 = vpop.f32.mrb[0].mxu0
        %v1993 = vadd.f32 %v497, %v1992
        %v1994 = vpop.f32.mrb[0].mxu0
        %v1995 = vadd.f32 %v501, %v1994
        %1996 = vmatprep.mubr.bf16.mxu0 0
        %1997 = vmatmul.mubr.bf16.gmra.mrb[0].mxu0 %v633
        %v1998 = vpop.f32.mrb[0].mxu0
        %v1999 = vadd.f32 %v497, %v1998
        %v2000 = vpop.f32.mrb[0].mxu0
        %v2001 = vadd.f32 %v501, %v2000
        %v2002 = vpop.f32.mrb[0].mxu0
        %v2003 = vadd.f32 %v497, %v2002
        %v2004 = vpop.f32.mrb[0].mxu0
        %v2005 = vadd.f32 %v501, %v2004
        %2006 = vmatprep.mubr.bf16.mxu0 0
        %2007 = vmatmul.mubr.bf16.gmra.mrb[0].mxu0 %v636
        %v2008 = vpop.f32.mrb[0].mxu0
        %v2009 = vadd.f32 %v497, %v2008
        %v2010 = vpop.f32.mrb[0].mxu0
        %v2011 = vadd.f32 %v501, %v2010
        %v2012 = vpop.f32.mrb[0].mxu0
        %v2013 = vadd.f32 %v497, %v2012
        %v2014 = vpop.f32.mrb[0].mxu0
        %v2015 = vadd.f32 %v501, %v2014
        %2016 = vmatprep.mubr.bf16.mxu0 0
        %2017 = vmatmul.mubr.bf16.gmra.mrb[0].mxu0 %v639
        %v2018 = vpop.f32.mrb[0].mxu0
        %v2019 = vadd.f32 %v497, %v2018
        %v2020 = vpop.f32.mrb[0].mxu0
        %v2021 = vadd.f32 %v501, %v2020
        %v2022 = vpop.f32.mrb[0].mxu0
        %v2023 = vadd.f32 %v497, %v2022
        %v2024 = vpop.f32.mrb[0].mxu0
        %v2025 = vadd.f32 %v501, %v2024
        %2026 = vmatprep.mubr.bf16.mxu0 0
        %2027 = vmatmul.mubr.bf16.gmra.mrb[0].mxu0 %v642
        %v2028 = vpop.f32.mrb[0].mxu0
        %v2029 = vadd.f32 %v497, %v2028
        %v2030 = vpop.f32.mrb[0].mxu0
        %v2031 = vadd.f32 %v501, %v2030
        %v2032 = vpop.f32.mrb[0].mxu0
        %v2033 = vadd.f32 %v497, %v2032
        %v2034 = vpop.f32.mrb[0].mxu0
        %v2035 = vadd.f32 %v501, %v2034
        %2036 = vmatprep.mubr.bf16.mxu0 0
        %2037 = vmatmul.mubr.bf16.gmra.mrb[0].mxu0 %v645
        %v2038 = vpop.f32.mrb[0].mxu0
        %v2039 = vadd.f32 %v497, %v2038
        %v2040 = vpop.f32.mrb[0].mxu0
        %v2041 = vadd.f32 %v501, %v2040
        %v2042 = vpop.f32.mrb[0].mxu0
        %v2043 = vadd.f32 %v497, %v2042
        %v2044 = vpop.f32.mrb[0].mxu0
        %v2045 = vadd.f32 %v501, %v2044
        %2046 = vdwg.mxu0
        %2047 = vmatprep.subr.bf16.mxu0 %v694
        %2048 = vmatpush1.bf16.msra.mxu0 %v691
        %2049 = vmatprep.subr.bf16.mxu0 0
        %2050 = vmatpush1.bf16.msra.mxu0 0
        %2051 = vmatprep.subr.bf16.mxu0 0
        %2052 = vmatpush1.bf16.msra.mxu0 0
        %2053 = vmatprep.subr.bf16.mxu0 0
        %2054 = vmatpush1.bf16.msra.mxu0 0
        %2055 = vmatprep.subr.bf16.mxu0 0
        %2056 = vmatpush1.bf16.msra.mxu0 0
        %2057 = vmatprep.subr.bf16.mxu0 0
        %2058 = vmatpush1.bf16.msra.mxu0 0
        %2059 = vmatprep.subr.bf16.mxu0 0
        %2060 = vmatpush1.bf16.msra.mxu0 0
        %2061 = vmatprep.subr.bf16.mxu0 0
        %2062 = vmatpush1.bf16.msra.mxu0 0
        %2063 = vmatprep.subr.bf16.mxu0 0
        %2064 = vmatpush1.bf16.msra.mxu0 0
        %2065 = vmatprep.subr.bf16.mxu0 0
        %2066 = vmatpush1.bf16.msra.mxu0 0
        %2067 = vmatprep.subr.bf16.mxu0 0
        %2068 = vmatpush1.bf16.msra.mxu0 0
        %2069 = vmatprep.subr.bf16.mxu0 0
        %2070 = vmatpush1.bf16.msra.mxu0 0
        %2071 = vmatprep.subr.bf16.mxu0 0
        %2072 = vmatpush1.bf16.msra.mxu0 0
        %2073 = vmatprep.subr.bf16.mxu0 0
        %2074 = vmatpush1.bf16.msra.mxu0 0
        %2075 = vmatprep.subr.bf16.mxu0 0
        %2076 = vmatpush1.bf16.msra.mxu0 0
        %2077 = vmatprep.subr.bf16.mxu0 0
        %2078 = vmatpush1.bf16.msra.mxu0 0
        %2079 = vmatprep.mubr.bf16.mxu0 0
        %2080 = vmatmul.mubr.bf16.gmra.mrb[0].mxu0 %v600
        %v2081 = vpop.f32.mrb[0].mxu0
        %v2082 = vadd.f32 %v505, %v2081
        %v2083 = vpop.f32.mrb[0].mxu0
        %v2084 = vadd.f32 %v509, %v2083
        %v2085 = vpop.f32.mrb[0].mxu0
        %v2086 = vadd.f32 %v505, %v2085
        %v2087 = vpop.f32.mrb[0].mxu0
        %v2088 = vadd.f32 %v509, %v2087
        %2089 = vmatprep.mubr.bf16.mxu0 0
        %2090 = vmatmul.mubr.bf16.gmra.mrb[0].mxu0 %v603
        %v2091 = vpop.f32.mrb[0].mxu0
        %v2092 = vadd.f32 %v505, %v2091
        %v2093 = vpop.f32.mrb[0].mxu0
        %v2094 = vadd.f32 %v509, %v2093
        %v2095 = vpop.f32.mrb[0].mxu0
        %v2096 = vadd.f32 %v505, %v2095
        %v2097 = vpop.f32.mrb[0].mxu0
        %v2098 = vadd.f32 %v509, %v2097
        %2099 = vmatprep.mubr.bf16.mxu0 0
        %2100 = vmatmul.mubr.bf16.gmra.mrb[0].mxu0 %v606
        %v2101 = vpop.f32.mrb[0].mxu0
        %v2102 = vadd.f32 %v505, %v2101
        %v2103 = vpop.f32.mrb[0].mxu0
        %v2104 = vadd.f32 %v509, %v2103
        %v2105 = vpop.f32.mrb[0].mxu0
        %v2106 = vadd.f32 %v505, %v2105
        %v2107 = vpop.f32.mrb[0].mxu0
        %v2108 = vadd.f32 %v509, %v2107
        %2109 = vmatprep.mubr.bf16.mxu0 0
        %2110 = vmatmul.mubr.bf16.gmra.mrb[0].mxu0 %v609
        %v2111 = vpop.f32.mrb[0].mxu0
        %v2112 = vadd.f32 %v505, %v2111
        %v2113 = vpop.f32.mrb[0].mxu0
        %v2114 = vadd.f32 %v509, %v2113
        %v2115 = vpop.f32.mrb[0].mxu0
        %v2116 = vadd.f32 %v505, %v2115
        %v2117 = vpop.f32.mrb[0].mxu0
        %v2118 = vadd.f32 %v509, %v2117
        %2119 = vmatprep.mubr.bf16.mxu0 0
        %2120 = vmatmul.mubr.bf16.gmra.mrb[0].mxu0 %v612
        %v2121 = vpop.f32.mrb[0].mxu0
        %v2122 = vadd.f32 %v505, %v2121
        %v2123 = vpop.f32.mrb[0].mxu0
        %v2124 = vadd.f32 %v509, %v2123
        %v2125 = vpop.f32.mrb[0].mxu0
        %v2126 = vadd.f32 %v505, %v2125
        %v2127 = vpop.f32.mrb[0].mxu0
        %v2128 = vadd.f32 %v509, %v2127
        %2129 = vmatprep.mubr.bf16.mxu0 0
        %2130 = vmatmul.mubr.bf16.gmra.mrb[0].mxu0 %v615
        %v2131 = vpop.f32.mrb[0].mxu0
        %v2132 = vadd.f32 %v505, %v2131
        %v2133 = vpop.f32.mrb[0].mxu0
        %v2134 = vadd.f32 %v509, %v2133
        %v2135 = vpop.f32.mrb[0].mxu0
        %v2136 = vadd.f32 %v505, %v2135
        %v2137 = vpop.f32.mrb[0].mxu0
        %v2138 = vadd.f32 %v509, %v2137
        %2139 = vmatprep.mubr.bf16.mxu0 0
        %2140 = vmatmul.mubr.bf16.gmra.mrb[0].mxu0 %v618
        %v2141 = vpop.f32.mrb[0].mxu0
        %v2142 = vadd.f32 %v505, %v2141
        %v2143 = vpop.f32.mrb[0].mxu0
        %v2144 = vadd.f32 %v509, %v2143
        %v2145 = vpop.f32.mrb[0].mxu0
        %v2146 = vadd.f32 %v505, %v2145
        %v2147 = vpop.f32.mrb[0].mxu0
        %v2148 = vadd.f32 %v509, %v2147
        %2149 = vmatprep.mubr.bf16.mxu0 0
        %2150 = vmatmul.mubr.bf16.gmra.mrb[0].mxu0 %v621
        %v2151 = vpop.f32.mrb[0].mxu0
        %v2152 = vadd.f32 %v505, %v2151
        %v2153 = vpop.f32.mrb[0].mxu0
        %v2154 = vadd.f32 %v509, %v2153
        %v2155 = vpop.f32.mrb[0].mxu0
        %v2156 = vadd.f32 %v505, %v2155
        %v2157 = vpop.f32.mrb[0].mxu0
        %v2158 = vadd.f32 %v509, %v2157
        %2159 = vmatprep.mubr.bf16.mxu0 0
        %2160 = vmatmul.mubr.bf16.gmra.mrb[0].mxu0 %v624
        %v2161 = vpop.f32.mrb[0].mxu0
        %v2162 = vadd.f32 %v505, %v2161
        %v2163 = vpop.f32.mrb[0].mxu0
        %v2164 = vadd.f32 %v509, %v2163
        %v2165 = vpop.f32.mrb[0].mxu0
        %v2166 = vadd.f32 %v505, %v2165
        %v2167 = vpop.f32.mrb[0].mxu0
        %v2168 = vadd.f32 %v509, %v2167
        %2169 = vmatprep.mubr.bf16.mxu0 0
        %2170 = vmatmul.mubr.bf16.gmra.mrb[0].mxu0 %v627
        %v2171 = vpop.f32.mrb[0].mxu0
        %v2172 = vadd.f32 %v505, %v2171
        %v2173 = vpop.f32.mrb[0].mxu0
        %v2174 = vadd.f32 %v509, %v2173
        %v2175 = vpop.f32.mrb[0].mxu0
        %v2176 = vadd.f32 %v505, %v2175
        %v2177 = vpop.f32.mrb[0].mxu0
        %v2178 = vadd.f32 %v509, %v2177
        %2179 = vmatprep.mubr.bf16.mxu0 0
        %2180 = vmatmul.mubr.bf16.gmra.mrb[0].mxu0 %v630
        %v2181 = vpop.f32.mrb[0].mxu0
        %v2182 = vadd.f32 %v505, %v2181
        %v2183 = vpop.f32.mrb[0].mxu0
        %v2184 = vadd.f32 %v509, %v2183
        %v2185 = vpop.f32.mrb[0].mxu0
        %v2186 = vadd.f32 %v505, %v2185
        %v2187 = vpop.f32.mrb[0].mxu0
        %v2188 = vadd.f32 %v509, %v2187
        %2189 = vmatprep.mubr.bf16.mxu0 0
        %2190 = vmatmul.mubr.bf16.gmra.mrb[0].mxu0 %v633
        %v2191 = vpop.f32.mrb[0].mxu0
        %v2192 = vadd.f32 %v505, %v2191
        %v2193 = vpop.f32.mrb[0].mxu0
        %v2194 = vadd.f32 %v509, %v2193
        %v2195 = vpop.f32.mrb[0].mxu0
        %v2196 = vadd.f32 %v505, %v2195
        %v2197 = vpop.f32.mrb[0].mxu0
        %v2198 = vadd.f32 %v509, %v2197
        %2199 = vmatprep.mubr.bf16.mxu0 0
        %2200 = vmatmul.mubr.bf16.gmra.mrb[0].mxu0 %v636
        %v2201 = vpop.f32.mrb[0].mxu0
        %v2202 = vadd.f32 %v505, %v2201
        %v2203 = vpop.f32.mrb[0].mxu0
        %v2204 = vadd.f32 %v509, %v2203
        %v2205 = vpop.f32.mrb[0].mxu0
        %v2206 = vadd.f32 %v505, %v2205
        %v2207 = vpop.f32.mrb[0].mxu0
        %v2208 = vadd.f32 %v509, %v2207
        %2209 = vmatprep.mubr.bf16.mxu0 0
        %2210 = vmatmul.mubr.bf16.gmra.mrb[0].mxu0 %v639
        %v2211 = vpop.f32.mrb[0].mxu0
        %v2212 = vadd.f32 %v505, %v2211
        %v2213 = vpop.f32.mrb[0].mxu0
        %v2214 = vadd.f32 %v509, %v2213
        %v2215 = vpop.f32.mrb[0].mxu0
        %v2216 = vadd.f32 %v505, %v2215
        %v2217 = vpop.f32.mrb[0].mxu0
        %v2218 = vadd.f32 %v509, %v2217
        %2219 = vmatprep.mubr.bf16.mxu0 0
        %2220 = vmatmul.mubr.bf16.gmra.mrb[0].mxu0 %v642
        %v2221 = vpop.f32.mrb[0].mxu0
        %v2222 = vadd.f32 %v505, %v2221
        %v2223 = vpop.f32.mrb[0].mxu0
        %v2224 = vadd.f32 %v509, %v2223
        %v2225 = vpop.f32.mrb[0].mxu0
        %v2226 = vadd.f32 %v505, %v2225
        %v2227 = vpop.f32.mrb[0].mxu0
        %v2228 = vadd.f32 %v509, %v2227
        %2229 = vmatprep.mubr.bf16.mxu0 0
        %2230 = vmatmul.mubr.bf16.gmra.mrb[0].mxu0 %v645
        %v2231 = vpop.f32.mrb[0].mxu0
        %v2232 = vadd.f32 %v505, %v2231
        %v2233 = vpop.f32.mrb[0].mxu0
        %v2234 = vadd.f32 %v509, %v2233
        %v2235 = vpop.f32.mrb[0].mxu0
        %v2236 = vadd.f32 %v505, %v2235
        %v2237 = vpop.f32.mrb[0].mxu0
        %v2238 = vadd.f32 %v509, %v2237
        %2239 = vdwg.mxu0
        %v2240 = vmax.f32 %v731, 0.0
        %v2241 = vmax.f32 %v733, 0.0
        %v2242 = vmax.f32 %v924, 0.0
        %v2243 = vmax.f32 %v926, 0.0
        %v2244 = vmax.f32 %v1117, 0.0
        %v2245 = vmax.f32 %v1119, 0.0
        %v2246 = vmax.f32 %v1310, 0.0
        %v2247 = vmax.f32 %v1312, 0.0
        %v2248 = vmax.f32 %v1503, 0.0
        %v2249 = vmax.f32 %v1505, 0.0
        %v2250 = vmax.f32 %v1696, 0.0
        %v2251 = vmax.f32 %v1698, 0.0
        %v2252 = vmax.f32 %v1889, 0.0
        %v2253 = vmax.f32 %v1891, 0.0
        %v2254 = vmax.f32 %v2082, 0.0
        %v2255 = vmax.f32 %v2084, 0.0
        %v2256 = vmax.f32 %v735, 0.0
        %v2257 = vmax.f32 %v737, 0.0
        %v2258 = vmax.f32 %v928, 0.0
        %v2259 = vmax.f32 %v930, 0.0
        %v2260 = vmax.f32 %v1121, 0.0
        %v2261 = vmax.f32 %v1123, 0.0
        %v2262 = vmax.f32 %v1314, 0.0
        %v2263 = vmax.f32 %v1316, 0.0
        %v2264 = vmax.f32 %v1507, 0.0
        %v2265 = vmax.f32 %v1509, 0.0
        %v2266 = vmax.f32 %v1700, 0.0
        %v2267 = vmax.f32 %v1702, 0.0
        %v2268 = vmax.f32 %v1893, 0.0
        %v2269 = vmax.f32 %v1895, 0.0
        %v2270 = vmax.f32 %v2086, 0.0
        %v2271 = vmax.f32 %v2088, 0.0
        %v2272 = vmax.f32 %v741, 0.0
        %v2273 = vmax.f32 %v743, 0.0
        %v2274 = vmax.f32 %v934, 0.0
        %v2275 = vmax.f32 %v936, 0.0
        %v2276 = vmax.f32 %v1127, 0.0
        %v2277 = vmax.f32 %v1129, 0.0
        %v2278 = vmax.f32 %v1320, 0.0
        %v2279 = vmax.f32 %v1322, 0.0
        %v2280 = vmax.f32 %v1513, 0.0
        %v2281 = vmax.f32 %v1515, 0.0
        %v2282 = vmax.f32 %v1706, 0.0
        %v2283 = vmax.f32 %v1708, 0.0
        %v2284 = vmax.f32 %v1899, 0.0
        %v2285 = vmax.f32 %v1901, 0.0
        %v2286 = vmax.f32 %v2092, 0.0
        %v2287 = vmax.f32 %v2094, 0.0
        %v2288 = vmax.f32 %v745, 0.0
        %v2289 = vmax.f32 %v747, 0.0
        %v2290 = vmax.f32 %v938, 0.0
        %v2291 = vmax.f32 %v940, 0.0
        %v2292 = vmax.f32 %v1131, 0.0
        %v2293 = vmax.f32 %v1133, 0.0
        %v2294 = vmax.f32 %v1324, 0.0
        %v2295 = vmax.f32 %v1326, 0.0
        %v2296 = vmax.f32 %v1517, 0.0
        %v2297 = vmax.f32 %v1519, 0.0
        %v2298 = vmax.f32 %v1710, 0.0
        %v2299 = vmax.f32 %v1712, 0.0
        %v2300 = vmax.f32 %v1903, 0.0
        %v2301 = vmax.f32 %v1905, 0.0
        %v2302 = vmax.f32 %v2096, 0.0
        %v2303 = vmax.f32 %v2098, 0.0
        %v2304 = vmax.f32 %v751, 0.0
        %v2305 = vmax.f32 %v753, 0.0
        %v2306 = vmax.f32 %v944, 0.0
        %v2307 = vmax.f32 %v946, 0.0
        %v2308 = vmax.f32 %v1137, 0.0
        %v2309 = vmax.f32 %v1139, 0.0
        %v2310 = vmax.f32 %v1330, 0.0
        %v2311 = vmax.f32 %v1332, 0.0
        %v2312 = vmax.f32 %v1523, 0.0
        %v2313 = vmax.f32 %v1525, 0.0
        %v2314 = vmax.f32 %v1716, 0.0
        %v2315 = vmax.f32 %v1718, 0.0
        %v2316 = vmax.f32 %v1909, 0.0
        %v2317 = vmax.f32 %v1911, 0.0
        %v2318 = vmax.f32 %v2102, 0.0
        %v2319 = vmax.f32 %v2104, 0.0
        %v2320 = vmax.f32 %v755, 0.0
        %v2321 = vmax.f32 %v757, 0.0
        %v2322 = vmax.f32 %v948, 0.0
        %v2323 = vmax.f32 %v950, 0.0
        %v2324 = vmax.f32 %v1141, 0.0
        %v2325 = vmax.f32 %v1143, 0.0
        %v2326 = vmax.f32 %v1334, 0.0
        %v2327 = vmax.f32 %v1336, 0.0
        %v2328 = vmax.f32 %v1527, 0.0
        %v2329 = vmax.f32 %v1529, 0.0
        %v2330 = vmax.f32 %v1720, 0.0
        %v2331 = vmax.f32 %v1722, 0.0
        %v2332 = vmax.f32 %v1913, 0.0
        %v2333 = vmax.f32 %v1915, 0.0
        %v2334 = vmax.f32 %v2106, 0.0
        %v2335 = vmax.f32 %v2108, 0.0
        %v2336 = vmax.f32 %v761, 0.0
        %v2337 = vmax.f32 %v763, 0.0
        %v2338 = vmax.f32 %v954, 0.0
        %v2339 = vmax.f32 %v956, 0.0
        %v2340 = vmax.f32 %v1147, 0.0
        %v2341 = vmax.f32 %v1149, 0.0
        %v2342 = vmax.f32 %v1340, 0.0
        %v2343 = vmax.f32 %v1342, 0.0
        %v2344 = vmax.f32 %v1533, 0.0
        %v2345 = vmax.f32 %v1535, 0.0
        %v2346 = vmax.f32 %v1726, 0.0
        %v2347 = vmax.f32 %v1728, 0.0
        %v2348 = vmax.f32 %v1919, 0.0
        %v2349 = vmax.f32 %v1921, 0.0
        %v2350 = vmax.f32 %v2112, 0.0
        %v2351 = vmax.f32 %v2114, 0.0
        %v2352 = vmax.f32 %v765, 0.0
        %v2353 = vmax.f32 %v767, 0.0
        %v2354 = vmax.f32 %v958, 0.0
        %v2355 = vmax.f32 %v960, 0.0
        %v2356 = vmax.f32 %v1151, 0.0
        %v2357 = vmax.f32 %v1153, 0.0
        %v2358 = vmax.f32 %v1344, 0.0
        %v2359 = vmax.f32 %v1346, 0.0
        %v2360 = vmax.f32 %v1537, 0.0
        %v2361 = vmax.f32 %v1539, 0.0
        %v2362 = vmax.f32 %v1730, 0.0
        %v2363 = vmax.f32 %v1732, 0.0
        %v2364 = vmax.f32 %v1923, 0.0
        %v2365 = vmax.f32 %v1925, 0.0
        %v2366 = vmax.f32 %v2116, 0.0
        %v2367 = vmax.f32 %v2118, 0.0
        %v2368 = vmax.f32 %v771, 0.0
        %v2369 = vmax.f32 %v773, 0.0
        %v2370 = vmax.f32 %v964, 0.0
        %v2371 = vmax.f32 %v966, 0.0
        %v2372 = vmax.f32 %v1157, 0.0
        %v2373 = vmax.f32 %v1159, 0.0
        %v2374 = vmax.f32 %v1350, 0.0
        %v2375 = vmax.f32 %v1352, 0.0
        %v2376 = vmax.f32 %v1543, 0.0
        %v2377 = vmax.f32 %v1545, 0.0
        %v2378 = vmax.f32 %v1736, 0.0
        %v2379 = vmax.f32 %v1738, 0.0
        %v2380 = vmax.f32 %v1929, 0.0
        %v2381 = vmax.f32 %v1931, 0.0
        %v2382 = vmax.f32 %v2122, 0.0
        %v2383 = vmax.f32 %v2124, 0.0
        %v2384 = vmax.f32 %v775, 0.0
        %v2385 = vmax.f32 %v777, 0.0
        %v2386 = vmax.f32 %v968, 0.0
        %v2387 = vmax.f32 %v970, 0.0
        %v2388 = vmax.f32 %v1161, 0.0
        %v2389 = vmax.f32 %v1163, 0.0
        %v2390 = vmax.f32 %v1354, 0.0
        %v2391 = vmax.f32 %v1356, 0.0
        %v2392 = vmax.f32 %v1547, 0.0
        %v2393 = vmax.f32 %v1549, 0.0
        %v2394 = vmax.f32 %v1740, 0.0
        %v2395 = vmax.f32 %v1742, 0.0
        %v2396 = vmax.f32 %v1933, 0.0
        %v2397 = vmax.f32 %v1935, 0.0
        %v2398 = vmax.f32 %v2126, 0.0
        %v2399 = vmax.f32 %v2128, 0.0
        %v2400 = vmax.f32 %v781, 0.0
        %v2401 = vmax.f32 %v783, 0.0
        %v2402 = vmax.f32 %v974, 0.0
        %v2403 = vmax.f32 %v976, 0.0
        %v2404 = vmax.f32 %v1167, 0.0
        %v2405 = vmax.f32 %v1169, 0.0
        %v2406 = vmax.f32 %v1360, 0.0
        %v2407 = vmax.f32 %v1362, 0.0
        %v2408 = vmax.f32 %v1553, 0.0
        %v2409 = vmax.f32 %v1555, 0.0
        %v2410 = vmax.f32 %v1746, 0.0
        %v2411 = vmax.f32 %v1748, 0.0
        %v2412 = vmax.f32 %v1939, 0.0
        %v2413 = vmax.f32 %v1941, 0.0
        %v2414 = vmax.f32 %v2132, 0.0
        %v2415 = vmax.f32 %v2134, 0.0
        %v2416 = vmax.f32 %v785, 0.0
        %v2417 = vmax.f32 %v787, 0.0
        %v2418 = vmax.f32 %v978, 0.0
        %v2419 = vmax.f32 %v980, 0.0
        %v2420 = vmax.f32 %v1171, 0.0
        %v2421 = vmax.f32 %v1173, 0.0
        %v2422 = vmax.f32 %v1364, 0.0
        %v2423 = vmax.f32 %v1366, 0.0
        %v2424 = vmax.f32 %v1557, 0.0
        %v2425 = vmax.f32 %v1559, 0.0
        %v2426 = vmax.f32 %v1750, 0.0
        %v2427 = vmax.f32 %v1752, 0.0
        %v2428 = vmax.f32 %v1943, 0.0
        %v2429 = vmax.f32 %v1945, 0.0
        %v2430 = vmax.f32 %v2136, 0.0
        %v2431 = vmax.f32 %v2138, 0.0
        %v2432 = vmax.f32 %v791, 0.0
        %v2433 = vmax.f32 %v793, 0.0
        %v2434 = vmax.f32 %v984, 0.0
        %v2435 = vmax.f32 %v986, 0.0
        %v2436 = vmax.f32 %v1177, 0.0
        %v2437 = vmax.f32 %v1179, 0.0
        %v2438 = vmax.f32 %v1370, 0.0
        %v2439 = vmax.f32 %v1372, 0.0
        %v2440 = vmax.f32 %v1563, 0.0
        %v2441 = vmax.f32 %v1565, 0.0
        %v2442 = vmax.f32 %v1756, 0.0
        %v2443 = vmax.f32 %v1758, 0.0
        %v2444 = vmax.f32 %v1949, 0.0
        %v2445 = vmax.f32 %v1951, 0.0
        %v2446 = vmax.f32 %v2142, 0.0
        %v2447 = vmax.f32 %v2144, 0.0
        %v2448 = vmax.f32 %v795, 0.0
        %v2449 = vmax.f32 %v797, 0.0
        %v2450 = vmax.f32 %v988, 0.0
        %v2451 = vmax.f32 %v990, 0.0
        %v2452 = vmax.f32 %v1181, 0.0
        %v2453 = vmax.f32 %v1183, 0.0
        %v2454 = vmax.f32 %v1374, 0.0
        %v2455 = vmax.f32 %v1376, 0.0
        %v2456 = vmax.f32 %v1567, 0.0
        %v2457 = vmax.f32 %v1569, 0.0
        %v2458 = vmax.f32 %v1760, 0.0
        %v2459 = vmax.f32 %v1762, 0.0
        %v2460 = vmax.f32 %v1953, 0.0
        %v2461 = vmax.f32 %v1955, 0.0
        %v2462 = vmax.f32 %v2146, 0.0
        %v2463 = vmax.f32 %v2148, 0.0
        %v2464 = vmax.f32 %v801, 0.0
        %v2465 = vmax.f32 %v803, 0.0
        %v2466 = vmax.f32 %v994, 0.0
        %v2467 = vmax.f32 %v996, 0.0
        %v2468 = vmax.f32 %v1187, 0.0
        %v2469 = vmax.f32 %v1189, 0.0
        %v2470 = vmax.f32 %v1380, 0.0
        %v2471 = vmax.f32 %v1382, 0.0
        %v2472 = vmax.f32 %v1573, 0.0
        %v2473 = vmax.f32 %v1575, 0.0
        %v2474 = vmax.f32 %v1766, 0.0
        %v2475 = vmax.f32 %v1768, 0.0
        %v2476 = vmax.f32 %v1959, 0.0
        %v2477 = vmax.f32 %v1961, 0.0
        %v2478 = vmax.f32 %v2152, 0.0
        %v2479 = vmax.f32 %v2154, 0.0
        %v2480 = vmax.f32 %v805, 0.0
        %v2481 = vmax.f32 %v807, 0.0
        %v2482 = vmax.f32 %v998, 0.0
        %v2483 = vmax.f32 %v1000, 0.0
        %v2484 = vmax.f32 %v1191, 0.0
        %v2485 = vmax.f32 %v1193, 0.0
        %v2486 = vmax.f32 %v1384, 0.0
        %v2487 = vmax.f32 %v1386, 0.0
        %v2488 = vmax.f32 %v1577, 0.0
        %v2489 = vmax.f32 %v1579, 0.0
        %v2490 = vmax.f32 %v1770, 0.0
        %v2491 = vmax.f32 %v1772, 0.0
        %v2492 = vmax.f32 %v1963, 0.0
        %v2493 = vmax.f32 %v1965, 0.0
        %v2494 = vmax.f32 %v2156, 0.0
        %v2495 = vmax.f32 %v2158, 0.0
        %v2496 = vmax.f32 %v811, 0.0
        %v2497 = vmax.f32 %v813, 0.0
        %v2498 = vmax.f32 %v1004, 0.0
        %v2499 = vmax.f32 %v1006, 0.0
        %v2500 = vmax.f32 %v1197, 0.0
        %v2501 = vmax.f32 %v1199, 0.0
        %v2502 = vmax.f32 %v1390, 0.0
        %v2503 = vmax.f32 %v1392, 0.0
        %v2504 = vmax.f32 %v1583, 0.0
        %v2505 = vmax.f32 %v1585, 0.0
        %v2506 = vmax.f32 %v1776, 0.0
        %v2507 = vmax.f32 %v1778, 0.0
        %v2508 = vmax.f32 %v1969, 0.0
        %v2509 = vmax.f32 %v1971, 0.0
        %v2510 = vmax.f32 %v2162, 0.0
        %v2511 = vmax.f32 %v2164, 0.0
        %v2512 = vmax.f32 %v815, 0.0
        %v2513 = vmax.f32 %v817, 0.0
        %v2514 = vmax.f32 %v1008, 0.0
        %v2515 = vmax.f32 %v1010, 0.0
        %v2516 = vmax.f32 %v1201, 0.0
        %v2517 = vmax.f32 %v1203, 0.0
        %v2518 = vmax.f32 %v1394, 0.0
        %v2519 = vmax.f32 %v1396, 0.0
        %v2520 = vmax.f32 %v1587, 0.0
        %v2521 = vmax.f32 %v1589, 0.0
        %v2522 = vmax.f32 %v1780, 0.0
        %v2523 = vmax.f32 %v1782, 0.0
        %v2524 = vmax.f32 %v1973, 0.0
        %v2525 = vmax.f32 %v1975, 0.0
        %v2526 = vmax.f32 %v2166, 0.0
        %v2527 = vmax.f32 %v2168, 0.0
        %v2528 = vmax.f32 %v821, 0.0
        %v2529 = vmax.f32 %v823, 0.0
        %v2530 = vmax.f32 %v1014, 0.0
        %v2531 = vmax.f32 %v1016, 0.0
        %v2532 = vmax.f32 %v1207, 0.0
        %v2533 = vmax.f32 %v1209, 0.0
        %v2534 = vmax.f32 %v1400, 0.0
        %v2535 = vmax.f32 %v1402, 0.0
        %v2536 = vmax.f32 %v1593, 0.0
        %v2537 = vmax.f32 %v1595, 0.0
        %v2538 = vmax.f32 %v1786, 0.0
        %v2539 = vmax.f32 %v1788, 0.0
        %v2540 = vmax.f32 %v1979, 0.0
        %v2541 = vmax.f32 %v1981, 0.0
        %v2542 = vmax.f32 %v2172, 0.0
        %v2543 = vmax.f32 %v2174, 0.0
        %v2544 = vmax.f32 %v825, 0.0
        %v2545 = vmax.f32 %v827, 0.0
        %v2546 = vmax.f32 %v1018, 0.0
        %v2547 = vmax.f32 %v1020, 0.0
        %v2548 = vmax.f32 %v1211, 0.0
        %v2549 = vmax.f32 %v1213, 0.0
        %v2550 = vmax.f32 %v1404, 0.0
        %v2551 = vmax.f32 %v1406, 0.0
        %v2552 = vmax.f32 %v1597, 0.0
        %v2553 = vmax.f32 %v1599, 0.0
        %v2554 = vmax.f32 %v1790, 0.0
        %v2555 = vmax.f32 %v1792, 0.0
        %v2556 = vmax.f32 %v1983, 0.0
        %v2557 = vmax.f32 %v1985, 0.0
        %v2558 = vmax.f32 %v2176, 0.0
        %v2559 = vmax.f32 %v2178, 0.0
        %v2560 = vmax.f32 %v831, 0.0
        %v2561 = vmax.f32 %v833, 0.0
        %v2562 = vmax.f32 %v1024, 0.0
        %v2563 = vmax.f32 %v1026, 0.0
        %v2564 = vmax.f32 %v1217, 0.0
        %v2565 = vmax.f32 %v1219, 0.0
        %v2566 = vmax.f32 %v1410, 0.0
        %v2567 = vmax.f32 %v1412, 0.0
        %v2568 = vmax.f32 %v1603, 0.0
        %v2569 = vmax.f32 %v1605, 0.0
        %v2570 = vmax.f32 %v1796, 0.0
        %v2571 = vmax.f32 %v1798, 0.0
        %v2572 = vmax.f32 %v1989, 0.0
        %v2573 = vmax.f32 %v1991, 0.0
        %v2574 = vmax.f32 %v2182, 0.0
        %v2575 = vmax.f32 %v2184, 0.0
        %v2576 = vmax.f32 %v835, 0.0
        %v2577 = vmax.f32 %v837, 0.0
        %v2578 = vmax.f32 %v1028, 0.0
        %v2579 = vmax.f32 %v1030, 0.0
        %v2580 = vmax.f32 %v1221, 0.0
        %v2581 = vmax.f32 %v1223, 0.0
        %v2582 = vmax.f32 %v1414, 0.0
        %v2583 = vmax.f32 %v1416, 0.0
        %v2584 = vmax.f32 %v1607, 0.0
        %v2585 = vmax.f32 %v1609, 0.0
        %v2586 = vmax.f32 %v1800, 0.0
        %v2587 = vmax.f32 %v1802, 0.0
        %v2588 = vmax.f32 %v1993, 0.0
        %v2589 = vmax.f32 %v1995, 0.0
        %v2590 = vmax.f32 %v2186, 0.0
        %v2591 = vmax.f32 %v2188, 0.0
        %v2592 = vmax.f32 %v841, 0.0
        %v2593 = vmax.f32 %v843, 0.0
        %v2594 = vmax.f32 %v1034, 0.0
        %v2595 = vmax.f32 %v1036, 0.0
        %v2596 = vmax.f32 %v1227, 0.0
        %v2597 = vmax.f32 %v1229, 0.0
        %v2598 = vmax.f32 %v1420, 0.0
        %v2599 = vmax.f32 %v1422, 0.0
        %v2600 = vmax.f32 %v1613, 0.0
        %v2601 = vmax.f32 %v1615, 0.0
        %v2602 = vmax.f32 %v1806, 0.0
        %v2603 = vmax.f32 %v1808, 0.0
        %v2604 = vmax.f32 %v1999, 0.0
        %v2605 = vmax.f32 %v2001, 0.0
        %v2606 = vmax.f32 %v2192, 0.0
        %v2607 = vmax.f32 %v2194, 0.0
        %v2608 = vmax.f32 %v845, 0.0
        %v2609 = vmax.f32 %v847, 0.0
        %v2610 = vmax.f32 %v1038, 0.0
        %v2611 = vmax.f32 %v1040, 0.0
        %v2612 = vmax.f32 %v1231, 0.0
        %v2613 = vmax.f32 %v1233, 0.0
        %v2614 = vmax.f32 %v1424, 0.0
        %v2615 = vmax.f32 %v1426, 0.0
        %v2616 = vmax.f32 %v1617, 0.0
        %v2617 = vmax.f32 %v1619, 0.0
        %v2618 = vmax.f32 %v1810, 0.0
        %v2619 = vmax.f32 %v1812, 0.0
        %v2620 = vmax.f32 %v2003, 0.0
        %v2621 = vmax.f32 %v2005, 0.0
        %v2622 = vmax.f32 %v2196, 0.0
        %v2623 = vmax.f32 %v2198, 0.0
        %v2624 = vmax.f32 %v851, 0.0
        %v2625 = vmax.f32 %v853, 0.0
        %v2626 = vmax.f32 %v1044, 0.0
        %v2627 = vmax.f32 %v1046, 0.0
        %v2628 = vmax.f32 %v1237, 0.0
        %v2629 = vmax.f32 %v1239, 0.0
        %v2630 = vmax.f32 %v1430, 0.0
        %v2631 = vmax.f32 %v1432, 0.0
        %v2632 = vmax.f32 %v1623, 0.0
        %v2633 = vmax.f32 %v1625, 0.0
        %v2634 = vmax.f32 %v1816, 0.0
        %v2635 = vmax.f32 %v1818, 0.0
        %v2636 = vmax.f32 %v2009, 0.0
        %v2637 = vmax.f32 %v2011, 0.0
        %v2638 = vmax.f32 %v2202, 0.0
        %v2639 = vmax.f32 %v2204, 0.0
        %v2640 = vmax.f32 %v855, 0.0
        %v2641 = vmax.f32 %v857, 0.0
        %v2642 = vmax.f32 %v1048, 0.0
        %v2643 = vmax.f32 %v1050, 0.0
        %v2644 = vmax.f32 %v1241, 0.0
        %v2645 = vmax.f32 %v1243, 0.0
        %v2646 = vmax.f32 %v1434, 0.0
        %v2647 = vmax.f32 %v1436, 0.0
        %v2648 = vmax.f32 %v1627, 0.0
        %v2649 = vmax.f32 %v1629, 0.0
        %v2650 = vmax.f32 %v1820, 0.0
        %v2651 = vmax.f32 %v1822, 0.0
        %v2652 = vmax.f32 %v2013, 0.0
        %v2653 = vmax.f32 %v2015, 0.0
        %v2654 = vmax.f32 %v2206, 0.0
        %v2655 = vmax.f32 %v2208, 0.0
        %v2656 = vmax.f32 %v861, 0.0
        %v2657 = vmax.f32 %v863, 0.0
        %v2658 = vmax.f32 %v1054, 0.0
        %v2659 = vmax.f32 %v1056, 0.0
        %v2660 = vmax.f32 %v1247, 0.0
        %v2661 = vmax.f32 %v1249, 0.0
        %v2662 = vmax.f32 %v1440, 0.0
        %v2663 = vmax.f32 %v1442, 0.0
        %v2664 = vmax.f32 %v1633, 0.0
        %v2665 = vmax.f32 %v1635, 0.0
        %v2666 = vmax.f32 %v1826, 0.0
        %v2667 = vmax.f32 %v1828, 0.0
        %v2668 = vmax.f32 %v2019, 0.0
        %v2669 = vmax.f32 %v2021, 0.0
        %v2670 = vmax.f32 %v2212, 0.0
        %v2671 = vmax.f32 %v2214, 0.0
        %v2672 = vmax.f32 %v865, 0.0
        %v2673 = vmax.f32 %v867, 0.0
        %v2674 = vmax.f32 %v1058, 0.0
        %v2675 = vmax.f32 %v1060, 0.0
        %v2676 = vmax.f32 %v1251, 0.0
        %v2677 = vmax.f32 %v1253, 0.0
        %v2678 = vmax.f32 %v1444, 0.0
        %v2679 = vmax.f32 %v1446, 0.0
        %v2680 = vmax.f32 %v1637, 0.0
        %v2681 = vmax.f32 %v1639, 0.0
        %v2682 = vmax.f32 %v1830, 0.0
        %v2683 = vmax.f32 %v1832, 0.0
        %v2684 = vmax.f32 %v2023, 0.0
        %v2685 = vmax.f32 %v2025, 0.0
        %v2686 = vmax.f32 %v2216, 0.0
        %v2687 = vmax.f32 %v2218, 0.0
        %v2688 = vmax.f32 %v871, 0.0
        %v2689 = vmax.f32 %v873, 0.0
        %v2690 = vmax.f32 %v1064, 0.0
        %v2691 = vmax.f32 %v1066, 0.0
        %v2692 = vmax.f32 %v1257, 0.0
        %v2693 = vmax.f32 %v1259, 0.0
        %v2694 = vmax.f32 %v1450, 0.0
        %v2695 = vmax.f32 %v1452, 0.0
        %v2696 = vmax.f32 %v1643, 0.0
        %v2697 = vmax.f32 %v1645, 0.0
        %v2698 = vmax.f32 %v1836, 0.0
        %v2699 = vmax.f32 %v1838, 0.0
        %v2700 = vmax.f32 %v2029, 0.0
        %v2701 = vmax.f32 %v2031, 0.0
        %v2702 = vmax.f32 %v2222, 0.0
        %v2703 = vmax.f32 %v2224, 0.0
        %v2704 = vmax.f32 %v875, 0.0
        %v2705 = vmax.f32 %v877, 0.0
        %v2706 = vmax.f32 %v1068, 0.0
        %v2707 = vmax.f32 %v1070, 0.0
        %v2708 = vmax.f32 %v1261, 0.0
        %v2709 = vmax.f32 %v1263, 0.0
        %v2710 = vmax.f32 %v1454, 0.0
        %v2711 = vmax.f32 %v1456, 0.0
        %v2712 = vmax.f32 %v1647, 0.0
        %v2713 = vmax.f32 %v1649, 0.0
        %v2714 = vmax.f32 %v1840, 0.0
        %v2715 = vmax.f32 %v1842, 0.0
        %v2716 = vmax.f32 %v2033, 0.0
        %v2717 = vmax.f32 %v2035, 0.0
        %v2718 = vmax.f32 %v2226, 0.0
        %v2719 = vmax.f32 %v2228, 0.0
        %v2720 = vmax.f32 %v881, 0.0
        %v2721 = vmax.f32 %v883, 0.0
        %v2722 = vmax.f32 %v1074, 0.0
        %v2723 = vmax.f32 %v1076, 0.0
        %v2724 = vmax.f32 %v1267, 0.0
        %v2725 = vmax.f32 %v1269, 0.0
        %v2726 = vmax.f32 %v1460, 0.0
        %v2727 = vmax.f32 %v1462, 0.0
        %v2728 = vmax.f32 %v1653, 0.0
        %v2729 = vmax.f32 %v1655, 0.0
        %v2730 = vmax.f32 %v1846, 0.0
        %v2731 = vmax.f32 %v1848, 0.0
        %v2732 = vmax.f32 %v2039, 0.0
        %v2733 = vmax.f32 %v2041, 0.0
        %v2734 = vmax.f32 %v2232, 0.0
        %v2735 = vmax.f32 %v2234, 0.0
        %v2736 = vmax.f32 %v885, 0.0
        %v2737 = vmax.f32 %v887, 0.0
        %v2738 = vmax.f32 %v1078, 0.0
        %v2739 = vmax.f32 %v1080, 0.0
        %v2740 = vmax.f32 %v1271, 0.0
        %v2741 = vmax.f32 %v1273, 0.0
        %v2742 = vmax.f32 %v1464, 0.0
        %v2743 = vmax.f32 %v1466, 0.0
        %v2744 = vmax.f32 %v1657, 0.0
        %v2745 = vmax.f32 %v1659, 0.0
        %v2746 = vmax.f32 %v1850, 0.0
        %v2747 = vmax.f32 %v1852, 0.0
        %v2748 = vmax.f32 %v2043, 0.0
        %v2749 = vmax.f32 %v2045, 0.0
        %v2750 = vmax.f32 %v2236, 0.0
        %v2751 = vmax.f32 %v2238, 0.0
        %v2752 = vld [vmem:[#allocation2] sm:$0xff]
        %v2753 = vld [vmem:[#allocation2 + $0x8] sm:$0xff]
        %v2754 = vld [vmem:[#allocation2 + $0x10] sm:$0xff]
        %v2755 = vld [vmem:[#allocation2 + $0x18] sm:$0xff]
        %v2756 = vld [vmem:[#allocation2 + $0x20] sm:$0xff]
        %v2757 = vld [vmem:[#allocation2 + $0x28] sm:$0xff]
        %v2758 = vld [vmem:[#allocation2 + $0x30] sm:$0xff]
        %v2759 = vld [vmem:[#allocation2 + $0x38] sm:$0xff]
        %v2760 = vld [vmem:[#allocation2 + $0x40] sm:$0xff]
        %v2761 = vld [vmem:[#allocation2 + $0x48] sm:$0xff]
        %v2762 = vld [vmem:[#allocation2 + $0x50] sm:$0xff]
        %v2763 = vld [vmem:[#allocation2 + $0x58] sm:$0xff]
        %v2764 = vld [vmem:[#allocation2 + $0x60] sm:$0xff]
        %v2765 = vld [vmem:[#allocation2 + $0x68] sm:$0xff]
        %v2766 = vld [vmem:[#allocation2 + $0x70] sm:$0xff]
        %v2767 = vld [vmem:[#allocation2 + $0x78] sm:$0xff]
        %v2768 = vadd.f32 %v2240, %v2256
        %v2769 = vadd.f32 %v2768, %v2272
        %v2770 = vadd.f32 %v2769, %v2288
        %v2771 = vadd.f32 %v2770, %v2304
        %v2772 = vadd.f32 %v2771, %v2320
        %v2773 = vadd.f32 %v2772, %v2336
        %v2774 = vadd.f32 %v2773, %v2352
        %v2775 = vadd.f32 %v2774, %v2368
        %v2776 = vadd.f32 %v2775, %v2384
        %v2777 = vadd.f32 %v2776, %v2400
        %v2778 = vadd.f32 %v2777, %v2416
        %v2779 = vadd.f32 %v2778, %v2432
        %v2780 = vadd.f32 %v2779, %v2448
        %v2781 = vadd.f32 %v2780, %v2464
        %v2782 = vadd.f32 %v2781, %v2480
        %v2783 = vadd.f32 %v2782, %v2496
        %v2784 = vadd.f32 %v2783, %v2512
        %v2785 = vadd.f32 %v2784, %v2528
        %v2786 = vadd.f32 %v2785, %v2544
        %v2787 = vadd.f32 %v2786, %v2560
        %v2788 = vadd.f32 %v2787, %v2576
        %v2789 = vadd.f32 %v2788, %v2592
        %v2790 = vadd.f32 %v2789, %v2608
        %v2791 = vadd.f32 %v2790, %v2624
        %v2792 = vadd.f32 %v2791, %v2640
        %v2793 = vadd.f32 %v2792, %v2656
        %v2794 = vadd.f32 %v2793, %v2672
        %v2795 = vadd.f32 %v2794, %v2688
        %v2796 = vadd.f32 %v2795, %v2704
        %v2797 = vadd.f32 %v2796, %v2720
        %v2798 = vadd.f32 %v2797, %v2736
        %v2799 = vadd.f32 %v2241, %v2257
        %v2800 = vadd.f32 %v2799, %v2273
        %v2801 = vadd.f32 %v2800, %v2289
        %v2802 = vadd.f32 %v2801, %v2305
        %v2803 = vadd.f32 %v2802, %v2321
        %v2804 = vadd.f32 %v2803, %v2337
        %v2805 = vadd.f32 %v2804, %v2353
        %v2806 = vadd.f32 %v2805, %v2369
        %v2807 = vadd.f32 %v2806, %v2385
        %v2808 = vadd.f32 %v2807, %v2401
        %v2809 = vadd.f32 %v2808, %v2417
        %v2810 = vadd.f32 %v2809, %v2433
        %v2811 = vadd.f32 %v2810, %v2449
        %v2812 = vadd.f32 %v2811, %v2465
        %v2813 = vadd.f32 %v2812, %v2481
        %v2814 = vadd.f32 %v2813, %v2497
        %v2815 = vadd.f32 %v2814, %v2513
        %v2816 = vadd.f32 %v2815, %v2529
        %v2817 = vadd.f32 %v2816, %v2545
        %v2818 = vadd.f32 %v2817, %v2561
        %v2819 = vadd.f32 %v2818, %v2577
        %v2820 = vadd.f32 %v2819, %v2593
        %v2821 = vadd.f32 %v2820, %v2609
        %v2822 = vadd.f32 %v2821, %v2625
        %v2823 = vadd.f32 %v2822, %v2641
        %v2824 = vadd.f32 %v2823, %v2657
        %v2825 = vadd.f32 %v2824, %v2673
        %v2826 = vadd.f32 %v2825, %v2689
        %v2827 = vadd.f32 %v2826, %v2705
        %v2828 = vadd.f32 %v2827, %v2721
        %v2829 = vadd.f32 %v2828, %v2737
        %v2830 = vadd.f32 %v2242, %v2258
        %v2831 = vadd.f32 %v2830, %v2274
        %v2832 = vadd.f32 %v2831, %v2290
        %v2833 = vadd.f32 %v2832, %v2306
        %v2834 = vadd.f32 %v2833, %v2322
        %v2835 = vadd.f32 %v2834, %v2338
        %v2836 = vadd.f32 %v2835, %v2354
        %v2837 = vadd.f32 %v2836, %v2370
        %v2838 = vadd.f32 %v2837, %v2386
        %v2839 = vadd.f32 %v2838, %v2402
        %v2840 = vadd.f32 %v2839, %v2418
        %v2841 = vadd.f32 %v2840, %v2434
        %v2842 = vadd.f32 %v2841, %v2450
        %v2843 = vadd.f32 %v2842, %v2466
        %v2844 = vadd.f32 %v2843, %v2482
        %v2845 = vadd.f32 %v2844, %v2498
        %v2846 = vadd.f32 %v2845, %v2514
        %v2847 = vadd.f32 %v2846, %v2530
        %v2848 = vadd.f32 %v2847, %v2546
        %v2849 = vadd.f32 %v2848, %v2562
        %v2850 = vadd.f32 %v2849, %v2578
        %v2851 = vadd.f32 %v2850, %v2594
        %v2852 = vadd.f32 %v2851, %v2610
        %v2853 = vadd.f32 %v2852, %v2626
        %v2854 = vadd.f32 %v2853, %v2642
        %v2855 = vadd.f32 %v2854, %v2658
        %v2856 = vadd.f32 %v2855, %v2674
        %v2857 = vadd.f32 %v2856, %v2690
        %v2858 = vadd.f32 %v2857, %v2706
        %v2859 = vadd.f32 %v2858, %v2722
        %v2860 = vadd.f32 %v2859, %v2738
        %v2861 = vadd.f32 %v2243, %v2259
        %v2862 = vadd.f32 %v2861, %v2275
        %v2863 = vadd.f32 %v2862, %v2291
        %v2864 = vadd.f32 %v2863, %v2307
        %v2865 = vadd.f32 %v2864, %v2323
        %v2866 = vadd.f32 %v2865, %v2339
        %v2867 = vadd.f32 %v2866, %v2355
        %v2868 = vadd.f32 %v2867, %v2371
        %v2869 = vadd.f32 %v2868, %v2387
        %v2870 = vadd.f32 %v2869, %v2403
        %v2871 = vadd.f32 %v2870, %v2419
        %v2872 = vadd.f32 %v2871, %v2435
        %v2873 = vadd.f32 %v2872, %v2451
        %v2874 = vadd.f32 %v2873, %v2467
        %v2875 = vadd.f32 %v2874, %v2483
        %v2876 = vadd.f32 %v2875, %v2499
        %v2877 = vadd.f32 %v2876, %v2515
        %v2878 = vadd.f32 %v2877, %v2531
        %v2879 = vadd.f32 %v2878, %v2547
        %v2880 = vadd.f32 %v2879, %v2563
        %v2881 = vadd.f32 %v2880, %v2579
        %v2882 = vadd.f32 %v2881, %v2595
        %v2883 = vadd.f32 %v2882, %v2611
        %v2884 = vadd.f32 %v2883, %v2627
        %v2885 = vadd.f32 %v2884, %v2643
        %v2886 = vadd.f32 %v2885, %v2659
        %v2887 = vadd.f32 %v2886, %v2675
        %v2888 = vadd.f32 %v2887, %v2691
        %v2889 = vadd.f32 %v2888, %v2707
        %v2890 = vadd.f32 %v2889, %v2723
        %v2891 = vadd.f32 %v2890, %v2739
        %v2892 = vadd.f32 %v2244, %v2260
        %v2893 = vadd.f32 %v2892, %v2276
        %v2894 = vadd.f32 %v2893, %v2292
        %v2895 = vadd.f32 %v2894, %v2308
        %v2896 = vadd.f32 %v2895, %v2324
        %v2897 = vadd.f32 %v2896, %v2340
        %v2898 = vadd.f32 %v2897, %v2356
        %v2899 = vadd.f32 %v2898, %v2372
        %v2900 = vadd.f32 %v2899, %v2388
        %v2901 = vadd.f32 %v2900, %v2404
        %v2902 = vadd.f32 %v2901, %v2420
        %v2903 = vadd.f32 %v2902, %v2436
        %v2904 = vadd.f32 %v2903, %v2452
        %v2905 = vadd.f32 %v2904, %v2468
        %v2906 = vadd.f32 %v2905, %v2484
        %v2907 = vadd.f32 %v2906, %v2500
        %v2908 = vadd.f32 %v2907, %v2516
        %v2909 = vadd.f32 %v2908, %v2532
        %v2910 = vadd.f32 %v2909, %v2548
        %v2911 = vadd.f32 %v2910, %v2564
        %v2912 = vadd.f32 %v2911, %v2580
        %v2913 = vadd.f32 %v2912, %v2596
        %v2914 = vadd.f32 %v2913, %v2612
        %v2915 = vadd.f32 %v2914, %v2628
        %v2916 = vadd.f32 %v2915, %v2644
        %v2917 = vadd.f32 %v2916, %v2660
        %v2918 = vadd.f32 %v2917, %v2676
        %v2919 = vadd.f32 %v2918, %v2692
        %v2920 = vadd.f32 %v2919, %v2708
        %v2921 = vadd.f32 %v2920, %v2724
        %v2922 = vadd.f32 %v2921, %v2740
        %v2923 = vadd.f32 %v2245, %v2261
        %v2924 = vadd.f32 %v2923, %v2277
        %v2925 = vadd.f32 %v2924, %v2293
        %v2926 = vadd.f32 %v2925, %v2309
        %v2927 = vadd.f32 %v2926, %v2325
        %v2928 = vadd.f32 %v2927, %v2341
        %v2929 = vadd.f32 %v2928, %v2357
        %v2930 = vadd.f32 %v2929, %v2373
        %v2931 = vadd.f32 %v2930, %v2389
        %v2932 = vadd.f32 %v2931, %v2405
        %v2933 = vadd.f32 %v2932, %v2421
        %v2934 = vadd.f32 %v2933, %v2437
        %v2935 = vadd.f32 %v2934, %v2453
        %v2936 = vadd.f32 %v2935, %v2469
        %v2937 = vadd.f32 %v2936, %v2485
        %v2938 = vadd.f32 %v2937, %v2501
        %v2939 = vadd.f32 %v2938, %v2517
        %v2940 = vadd.f32 %v2939, %v2533
        %v2941 = vadd.f32 %v2940, %v2549
        %v2942 = vadd.f32 %v2941, %v2565
        %v2943 = vadd.f32 %v2942, %v2581
        %v2944 = vadd.f32 %v2943, %v2597
        %v2945 = vadd.f32 %v2944, %v2613
        %v2946 = vadd.f32 %v2945, %v2629
        %v2947 = vadd.f32 %v2946, %v2645
        %v2948 = vadd.f32 %v2947, %v2661
        %v2949 = vadd.f32 %v2948, %v2677
        %v2950 = vadd.f32 %v2949, %v2693
        %v2951 = vadd.f32 %v2950, %v2709
        %v2952 = vadd.f32 %v2951, %v2725
        %v2953 = vadd.f32 %v2952, %v2741
        %v2954 = vadd.f32 %v2246, %v2262
        %v2955 = vadd.f32 %v2954, %v2278
        %v2956 = vadd.f32 %v2955, %v2294
        %v2957 = vadd.f32 %v2956, %v2310
        %v2958 = vadd.f32 %v2957, %v2326
        %v2959 = vadd.f32 %v2958, %v2342
        %v2960 = vadd.f32 %v2959, %v2358
        %v2961 = vadd.f32 %v2960, %v2374
        %v2962 = vadd.f32 %v2961, %v2390
        %v2963 = vadd.f32 %v2962, %v2406
        %v2964 = vadd.f32 %v2963, %v2422
        %v2965 = vadd.f32 %v2964, %v2438
        %v2966 = vadd.f32 %v2965, %v2454
        %v2967 = vadd.f32 %v2966, %v2470
        %v2968 = vadd.f32 %v2967, %v2486
        %v2969 = vadd.f32 %v2968, %v2502
        %v2970 = vadd.f32 %v2969, %v2518
        %v2971 = vadd.f32 %v2970, %v2534
        %v2972 = vadd.f32 %v2971, %v2550
        %v2973 = vadd.f32 %v2972, %v2566
        %v2974 = vadd.f32 %v2973, %v2582
        %v2975 = vadd.f32 %v2974, %v2598
        %v2976 = vadd.f32 %v2975, %v2614
        %v2977 = vadd.f32 %v2976, %v2630
        %v2978 = vadd.f32 %v2977, %v2646
        %v2979 = vadd.f32 %v2978, %v2662
        %v2980 = vadd.f32 %v2979, %v2678
        %v2981 = vadd.f32 %v2980, %v2694
        %v2982 = vadd.f32 %v2981, %v2710
        %v2983 = vadd.f32 %v2982, %v2726
        %v2984 = vadd.f32 %v2983, %v2742
        %v2985 = vadd.f32 %v2247, %v2263
        %v2986 = vadd.f32 %v2985, %v2279
        %v2987 = vadd.f32 %v2986, %v2295
        %v2988 = vadd.f32 %v2987, %v2311
        %v2989 = vadd.f32 %v2988, %v2327
        %v2990 = vadd.f32 %v2989, %v2343
        %v2991 = vadd.f32 %v2990, %v2359
        %v2992 = vadd.f32 %v2991, %v2375
        %v2993 = vadd.f32 %v2992, %v2391
        %v2994 = vadd.f32 %v2993, %v2407
        %v2995 = vadd.f32 %v2994, %v2423
        %v2996 = vadd.f32 %v2995, %v2439
        %v2997 = vadd.f32 %v2996, %v2455
        %v2998 = vadd.f32 %v2997, %v2471
        %v2999 = vadd.f32 %v2998, %v2487
        %v3000 = vadd.f32 %v2999, %v2503
        %v3001 = vadd.f32 %v3000, %v2519
        %v3002 = vadd.f32 %v3001, %v2535
        %v3003 = vadd.f32 %v3002, %v2551
        %v3004 = vadd.f32 %v3003, %v2567
        %v3005 = vadd.f32 %v3004, %v2583
        %v3006 = vadd.f32 %v3005, %v2599
        %v3007 = vadd.f32 %v3006, %v2615
        %v3008 = vadd.f32 %v3007, %v2631
        %v3009 = vadd.f32 %v3008, %v2647
        %v3010 = vadd.f32 %v3009, %v2663
        %v3011 = vadd.f32 %v3010, %v2679
        %v3012 = vadd.f32 %v3011, %v2695
        %v3013 = vadd.f32 %v3012, %v2711
        %v3014 = vadd.f32 %v3013, %v2727
        %v3015 = vadd.f32 %v3014, %v2743
        %v3016 = vadd.f32 %v2248, %v2264
        %v3017 = vadd.f32 %v3016, %v2280
        %v3018 = vadd.f32 %v3017, %v2296
        %v3019 = vadd.f32 %v3018, %v2312
        %v3020 = vadd.f32 %v3019, %v2328
        %v3021 = vadd.f32 %v3020, %v2344
        %v3022 = vadd.f32 %v3021, %v2360
        %v3023 = vadd.f32 %v3022, %v2376
        %v3024 = vadd.f32 %v3023, %v2392
        %v3025 = vadd.f32 %v3024, %v2408
        %v3026 = vadd.f32 %v3025, %v2424
        %v3027 = vadd.f32 %v3026, %v2440
        %v3028 = vadd.f32 %v3027, %v2456
        %v3029 = vadd.f32 %v3028, %v2472
        %v3030 = vadd.f32 %v3029, %v2488
        %v3031 = vadd.f32 %v3030, %v2504
        %v3032 = vadd.f32 %v3031, %v2520
        %v3033 = vadd.f32 %v3032, %v2536
        %v3034 = vadd.f32 %v3033, %v2552
        %v3035 = vadd.f32 %v3034, %v2568
        %v3036 = vadd.f32 %v3035, %v2584
        %v3037 = vadd.f32 %v3036, %v2600
        %v3038 = vadd.f32 %v3037, %v2616
        %v3039 = vadd.f32 %v3038, %v2632
        %v3040 = vadd.f32 %v3039, %v2648
        %v3041 = vadd.f32 %v3040, %v2664
        %v3042 = vadd.f32 %v3041, %v2680
        %v3043 = vadd.f32 %v3042, %v2696
        %v3044 = vadd.f32 %v3043, %v2712
        %v3045 = vadd.f32 %v3044, %v2728
        %v3046 = vadd.f32 %v3045, %v2744
        %v3047 = vadd.f32 %v2249, %v2265
        %v3048 = vadd.f32 %v3047, %v2281
        %v3049 = vadd.f32 %v3048, %v2297
        %v3050 = vadd.f32 %v3049, %v2313
        %v3051 = vadd.f32 %v3050, %v2329
        %v3052 = vadd.f32 %v3051, %v2345
        %v3053 = vadd.f32 %v3052, %v2361
        %v3054 = vadd.f32 %v3053, %v2377
        %v3055 = vadd.f32 %v3054, %v2393
        %v3056 = vadd.f32 %v3055, %v2409
        %v3057 = vadd.f32 %v3056, %v2425
        %v3058 = vadd.f32 %v3057, %v2441
        %v3059 = vadd.f32 %v3058, %v2457
        %v3060 = vadd.f32 %v3059, %v2473
        %v3061 = vadd.f32 %v3060, %v2489
        %v3062 = vadd.f32 %v3061, %v2505
        %v3063 = vadd.f32 %v3062, %v2521
        %v3064 = vadd.f32 %v3063, %v2537
        %v3065 = vadd.f32 %v3064, %v2553
        %v3066 = vadd.f32 %v3065, %v2569
        %v3067 = vadd.f32 %v3066, %v2585
        %v3068 = vadd.f32 %v3067, %v2601
        %v3069 = vadd.f32 %v3068, %v2617
        %v3070 = vadd.f32 %v3069, %v2633
        %v3071 = vadd.f32 %v3070, %v2649
        %v3072 = vadd.f32 %v3071, %v2665
        %v3073 = vadd.f32 %v3072, %v2681
        %v3074 = vadd.f32 %v3073, %v2697
        %v3075 = vadd.f32 %v3074, %v2713
        %v3076 = vadd.f32 %v3075, %v2729
        %v3077 = vadd.f32 %v3076, %v2745
        %v3078 = vadd.f32 %v2250, %v2266
        %v3079 = vadd.f32 %v3078, %v2282
        %v3080 = vadd.f32 %v3079, %v2298
        %v3081 = vadd.f32 %v3080, %v2314
        %v3082 = vadd.f32 %v3081, %v2330
        %v3083 = vadd.f32 %v3082, %v2346
        %v3084 = vadd.f32 %v3083, %v2362
        %v3085 = vadd.f32 %v3084, %v2378
        %v3086 = vadd.f32 %v3085, %v2394
        %v3087 = vadd.f32 %v3086, %v2410
        %v3088 = vadd.f32 %v3087, %v2426
        %v3089 = vadd.f32 %v3088, %v2442
        %v3090 = vadd.f32 %v3089, %v2458
        %v3091 = vadd.f32 %v3090, %v2474
        %v3092 = vadd.f32 %v3091, %v2490
        %v3093 = vadd.f32 %v3092, %v2506
        %v3094 = vadd.f32 %v3093, %v2522
        %v3095 = vadd.f32 %v3094, %v2538
        %v3096 = vadd.f32 %v3095, %v2554
        %v3097 = vadd.f32 %v3096, %v2570
        %v3098 = vadd.f32 %v3097, %v2586
        %v3099 = vadd.f32 %v3098, %v2602
        %v3100 = vadd.f32 %v3099, %v2618
        %v3101 = vadd.f32 %v3100, %v2634
        %v3102 = vadd.f32 %v3101, %v2650
        %v3103 = vadd.f32 %v3102, %v2666
        %v3104 = vadd.f32 %v3103, %v2682
        %v3105 = vadd.f32 %v3104, %v2698
        %v3106 = vadd.f32 %v3105, %v2714
        %v3107 = vadd.f32 %v3106, %v2730
        %v3108 = vadd.f32 %v3107, %v2746
        %v3109 = vadd.f32 %v2251, %v2267
        %v3110 = vadd.f32 %v3109, %v2283
        %v3111 = vadd.f32 %v3110, %v2299
        %v3112 = vadd.f32 %v3111, %v2315
        %v3113 = vadd.f32 %v3112, %v2331
        %v3114 = vadd.f32 %v3113, %v2347
        %v3115 = vadd.f32 %v3114, %v2363
        %v3116 = vadd.f32 %v3115, %v2379
        %v3117 = vadd.f32 %v3116, %v2395
        %v3118 = vadd.f32 %v3117, %v2411
        %v3119 = vadd.f32 %v3118, %v2427
        %v3120 = vadd.f32 %v3119, %v2443
        %v3121 = vadd.f32 %v3120, %v2459
        %v3122 = vadd.f32 %v3121, %v2475
        %v3123 = vadd.f32 %v3122, %v2491
        %v3124 = vadd.f32 %v3123, %v2507
        %v3125 = vadd.f32 %v3124, %v2523
        %v3126 = vadd.f32 %v3125, %v2539
        %v3127 = vadd.f32 %v3126, %v2555
        %v3128 = vadd.f32 %v3127, %v2571
        %v3129 = vadd.f32 %v3128, %v2587
        %v3130 = vadd.f32 %v3129, %v2603
        %v3131 = vadd.f32 %v3130, %v2619
        %v3132 = vadd.f32 %v3131, %v2635
        %v3133 = vadd.f32 %v3132, %v2651
        %v3134 = vadd.f32 %v3133, %v2667
        %v3135 = vadd.f32 %v3134, %v2683
        %v3136 = vadd.f32 %v3135, %v2699
        %v3137 = vadd.f32 %v3136, %v2715
        %v3138 = vadd.f32 %v3137, %v2731
        %v3139 = vadd.f32 %v3138, %v2747
        %v3140 = vadd.f32 %v2252, %v2268
        %v3141 = vadd.f32 %v3140, %v2284
        %v3142 = vadd.f32 %v3141, %v2300
        %v3143 = vadd.f32 %v3142, %v2316
        %v3144 = vadd.f32 %v3143, %v2332
        %v3145 = vadd.f32 %v3144, %v2348
        %v3146 = vadd.f32 %v3145, %v2364
        %v3147 = vadd.f32 %v3146, %v2380
        %v3148 = vadd.f32 %v3147, %v2396
        %v3149 = vadd.f32 %v3148, %v2412
        %v3150 = vadd.f32 %v3149, %v2428
        %v3151 = vadd.f32 %v3150, %v2444
        %v3152 = vadd.f32 %v3151, %v2460
        %v3153 = vadd.f32 %v3152, %v2476
        %v3154 = vadd.f32 %v3153, %v2492
        %v3155 = vadd.f32 %v3154, %v2508
        %v3156 = vadd.f32 %v3155, %v2524
        %v3157 = vadd.f32 %v3156, %v2540
        %v3158 = vadd.f32 %v3157, %v2556
        %v3159 = vadd.f32 %v3158, %v2572
        %v3160 = vadd.f32 %v3159, %v2588
        %v3161 = vadd.f32 %v3160, %v2604
        %v3162 = vadd.f32 %v3161, %v2620
        %v3163 = vadd.f32 %v3162, %v2636
        %v3164 = vadd.f32 %v3163, %v2652
        %v3165 = vadd.f32 %v3164, %v2668
        %v3166 = vadd.f32 %v3165, %v2684
        %v3167 = vadd.f32 %v3166, %v2700
        %v3168 = vadd.f32 %v3167, %v2716
        %v3169 = vadd.f32 %v3168, %v2732
        %v3170 = vadd.f32 %v3169, %v2748
        %v3171 = vadd.f32 %v2253, %v2269
        %v3172 = vadd.f32 %v3171, %v2285
        %v3173 = vadd.f32 %v3172, %v2301
        %v3174 = vadd.f32 %v3173, %v2317
        %v3175 = vadd.f32 %v3174, %v2333
        %v3176 = vadd.f32 %v3175, %v2349
        %v3177 = vadd.f32 %v3176, %v2365
        %v3178 = vadd.f32 %v3177, %v2381
        %v3179 = vadd.f32 %v3178, %v2397
        %v3180 = vadd.f32 %v3179, %v2413
        %v3181 = vadd.f32 %v3180, %v2429
        %v3182 = vadd.f32 %v3181, %v2445
        %v3183 = vadd.f32 %v3182, %v2461
        %v3184 = vadd.f32 %v3183, %v2477
        %v3185 = vadd.f32 %v3184, %v2493
        %v3186 = vadd.f32 %v3185, %v2509
        %v3187 = vadd.f32 %v3186, %v2525
        %v3188 = vadd.f32 %v3187, %v2541
        %v3189 = vadd.f32 %v3188, %v2557
        %v3190 = vadd.f32 %v3189, %v2573
        %v3191 = vadd.f32 %v3190, %v2589
        %v3192 = vadd.f32 %v3191, %v2605
        %v3193 = vadd.f32 %v3192, %v2621
        %v3194 = vadd.f32 %v3193, %v2637
        %v3195 = vadd.f32 %v3194, %v2653
        %v3196 = vadd.f32 %v3195, %v2669
        %v3197 = vadd.f32 %v3196, %v2685
        %v3198 = vadd.f32 %v3197, %v2701
        %v3199 = vadd.f32 %v3198, %v2717
        %v3200 = vadd.f32 %v3199, %v2733
        %v3201 = vadd.f32 %v3200, %v2749
        %v3202 = vadd.f32 %v2254, %v2270
        %v3203 = vadd.f32 %v3202, %v2286
        %v3204 = vadd.f32 %v3203, %v2302
        %v3205 = vadd.f32 %v3204, %v2318
        %v3206 = vadd.f32 %v3205, %v2334
        %v3207 = vadd.f32 %v3206, %v2350
        %v3208 = vadd.f32 %v3207, %v2366
        %v3209 = vadd.f32 %v3208, %v2382
        %v3210 = vadd.f32 %v3209, %v2398
        %v3211 = vadd.f32 %v3210, %v2414
        %v3212 = vadd.f32 %v3211, %v2430
        %v3213 = vadd.f32 %v3212, %v2446
        %v3214 = vadd.f32 %v3213, %v2462
        %v3215 = vadd.f32 %v3214, %v2478
        %v3216 = vadd.f32 %v3215, %v2494
        %v3217 = vadd.f32 %v3216, %v2510
        %v3218 = vadd.f32 %v3217, %v2526
        %v3219 = vadd.f32 %v3218, %v2542
        %v3220 = vadd.f32 %v3219, %v2558
        %v3221 = vadd.f32 %v3220, %v2574
        %v3222 = vadd.f32 %v3221, %v2590
        %v3223 = vadd.f32 %v3222, %v2606
        %v3224 = vadd.f32 %v3223, %v2622
        %v3225 = vadd.f32 %v3224, %v2638
        %v3226 = vadd.f32 %v3225, %v2654
        %v3227 = vadd.f32 %v3226, %v2670
        %v3228 = vadd.f32 %v3227, %v2686
        %v3229 = vadd.f32 %v3228, %v2702
        %v3230 = vadd.f32 %v3229, %v2718
        %v3231 = vadd.f32 %v3230, %v2734
        %v3232 = vadd.f32 %v3231, %v2750
        %v3233 = vadd.f32 %v2255, %v2271
        %v3234 = vadd.f32 %v3233, %v2287
        %v3235 = vadd.f32 %v3234, %v2303
        %v3236 = vadd.f32 %v3235, %v2319
        %v3237 = vadd.f32 %v3236, %v2335
        %v3238 = vadd.f32 %v3237, %v2351
        %v3239 = vadd.f32 %v3238, %v2367
        %v3240 = vadd.f32 %v3239, %v2383
        %v3241 = vadd.f32 %v3240, %v2399
        %v3242 = vadd.f32 %v3241, %v2415
        %v3243 = vadd.f32 %v3242, %v2431
        %v3244 = vadd.f32 %v3243, %v2447
        %v3245 = vadd.f32 %v3244, %v2463
        %v3246 = vadd.f32 %v3245, %v2479
        %v3247 = vadd.f32 %v3246, %v2495
        %v3248 = vadd.f32 %v3247, %v2511
        %v3249 = vadd.f32 %v3248, %v2527
        %v3250 = vadd.f32 %v3249, %v2543
        %v3251 = vadd.f32 %v3250, %v2559
        %v3252 = vadd.f32 %v3251, %v2575
        %v3253 = vadd.f32 %v3252, %v2591
        %v3254 = vadd.f32 %v3253, %v2607
        %v3255 = vadd.f32 %v3254, %v2623
        %v3256 = vadd.f32 %v3255, %v2639
        %v3257 = vadd.f32 %v3256, %v2655
        %v3258 = vadd.f32 %v3257, %v2671
        %v3259 = vadd.f32 %v3258, %v2687
        %v3260 = vadd.f32 %v3259, %v2703
        %v3261 = vadd.f32 %v3260, %v2719
        %v3262 = vadd.f32 %v3261, %v2735
        %v3263 = vadd.f32 %v3262, %v2751
        %v3264 = vadd.f32 %v2752, %v2798
        %v3265 = vadd.f32 %v2753, %v2829
        %v3266 = vadd.f32 %v2754, %v2860
        %v3267 = vadd.f32 %v2755, %v2891
        %v3268 = vadd.f32 %v2756, %v2922
        %v3269 = vadd.f32 %v2757, %v2953
        %v3270 = vadd.f32 %v2758, %v2984
        %v3271 = vadd.f32 %v2759, %v3015
        %v3272 = vadd.f32 %v2760, %v3046
        %v3273 = vadd.f32 %v2761, %v3077
        %v3274 = vadd.f32 %v2762, %v3108
        %v3275 = vadd.f32 %v2763, %v3139
        %v3276 = vadd.f32 %v2764, %v3170
        %v3277 = vadd.f32 %v2765, %v3201
        %v3278 = vadd.f32 %v2766, %v3232
        %v3279 = vadd.f32 %v2767, %v3263
        %3280 = vst [vmem:[#allocation2] sm:$0xff] %v3264
        %3281 = vst [vmem:[#allocation2 + $0x8] sm:$0xff] %v3265
        %3282 = vst [vmem:[#allocation2 + $0x10] sm:$0xff] %v3266
        %3283 = vst [vmem:[#allocation2 + $0x18] sm:$0xff] %v3267
        %3284 = vst [vmem:[#allocation2 + $0x20] sm:$0xff] %v3268
        %3285 = vst [vmem:[#allocation2 + $0x28] sm:$0xff] %v3269
        %3286 = vst [vmem:[#allocation2 + $0x30] sm:$0xff] %v3270
        %3287 = vst [vmem:[#allocation2 + $0x38] sm:$0xff] %v3271
        %3288 = vst [vmem:[#allocation2 + $0x40] sm:$0xff] %v3272
        %3289 = vst [vmem:[#allocation2 + $0x48] sm:$0xff] %v3273
        %3290 = vst [vmem:[#allocation2 + $0x50] sm:$0xff] %v3274
        %3291 = vst [vmem:[#allocation2 + $0x58] sm:$0xff] %v3275
        %3292 = vst [vmem:[#allocation2 + $0x60] sm:$0xff] %v3276
        %3293 = vst [vmem:[#allocation2 + $0x68] sm:$0xff] %v3277
        %3294 = vst [vmem:[#allocation2 + $0x70] sm:$0xff] %v3278
        %3295 = vst [vmem:[#allocation2 + $0x78] sm:$0xff] %v3279
        // Predicated region
        $region57: #{cnn_forward.1} parent=51 // pred_check
          %p3296 = pneg %p370
        $region58: #{cnn_forward.1} parent=51 // pred_check_branch
          %3298 = sbr.rel (%p3296) target = $region60
        $region59: #{cnn_forward.1} parent=51 // pred_region
          %v3299 = vld [vmem:[#allocation2] sm:$0xff]
          %v3300 = vld [vmem:[#allocation2 + $0x8] sm:$0xff]
          %v3301 = vld [vmem:[#allocation2 + $0x10] sm:$0xff]
          %v3302 = vld [vmem:[#allocation2 + $0x18] sm:$0xff]
          %v3303 = vld [vmem:[#allocation2 + $0x20] sm:$0xff]
          %v3304 = vld [vmem:[#allocation2 + $0x28] sm:$0xff]
          %v3305 = vld [vmem:[#allocation2 + $0x30] sm:$0xff]
          %v3306 = vld [vmem:[#allocation2 + $0x38] sm:$0xff]
          %v3307 = vld [vmem:[#allocation2 + $0x40] sm:$0xff]
          %v3308 = vld [vmem:[#allocation2 + $0x48] sm:$0xff]
          %v3309 = vld [vmem:[#allocation2 + $0x50] sm:$0xff]
          %v3310 = vld [vmem:[#allocation2 + $0x58] sm:$0xff]
          %v3311 = vld [vmem:[#allocation2 + $0x60] sm:$0xff]
          %v3312 = vld [vmem:[#allocation2 + $0x68] sm:$0xff]
          %v3313 = vld [vmem:[#allocation2 + $0x70] sm:$0xff]
          %v3314 = vld [vmem:[#allocation2 + $0x78] sm:$0xff]
          %v3315 = vrot.slane %v3299, 4
          %v3316 = vadd.f32 %v3299, %v3315
          %v3317 = vrot.slane %v3316, 2
          %v3318 = vadd.f32 %v3316, %v3317
          %v3319 = vrot.slane %v3318, 1
          %v3320 = vadd.f32 %v3318, %v3319
          %v3321 = vrot.slane %v3300, 4
          %v3322 = vadd.f32 %v3300, %v3321
          %v3323 = vrot.slane %v3322, 2
          %v3324 = vadd.f32 %v3322, %v3323
          %v3325 = vrot.slane %v3324, 1
          %v3326 = vadd.f32 %v3324, %v3325
          %v3327 = vrot.slane %v3301, 4
          %v3328 = vadd.f32 %v3301, %v3327
          %v3329 = vrot.slane %v3328, 2
          %v3330 = vadd.f32 %v3328, %v3329
          %v3331 = vrot.slane %v3330, 1
          %v3332 = vadd.f32 %v3330, %v3331
          %v3333 = vrot.slane %v3302, 4
          %v3334 = vadd.f32 %v3302, %v3333
          %v3335 = vrot.slane %v3334, 2
          %v3336 = vadd.f32 %v3334, %v3335
          %v3337 = vrot.slane %v3336, 1
          %v3338 = vadd.f32 %v3336, %v3337
          %v3339 = vrot.slane %v3303, 4
          %v3340 = vadd.f32 %v3303, %v3339
          %v3341 = vrot.slane %v3340, 2
          %v3342 = vadd.f32 %v3340, %v3341
          %v3343 = vrot.slane %v3342, 1
          %v3344 = vadd.f32 %v3342, %v3343
          %v3345 = vrot.slane %v3304, 4
          %v3346 = vadd.f32 %v3304, %v3345
          %v3347 = vrot.slane %v3346, 2
          %v3348 = vadd.f32 %v3346, %v3347
          %v3349 = vrot.slane %v3348, 1
          %v3350 = vadd.f32 %v3348, %v3349
          %v3351 = vrot.slane %v3305, 4
          %v3352 = vadd.f32 %v3305, %v3351
          %v3353 = vrot.slane %v3352, 2
          %v3354 = vadd.f32 %v3352, %v3353
          %v3355 = vrot.slane %v3354, 1
          %v3356 = vadd.f32 %v3354, %v3355
          %v3357 = vrot.slane %v3306, 4
          %v3358 = vadd.f32 %v3306, %v3357
          %v3359 = vrot.slane %v3358, 2
          %v3360 = vadd.f32 %v3358, %v3359
          %v3361 = vrot.slane %v3360, 1
          %v3362 = vadd.f32 %v3360, %v3361
          %v3363 = vrot.slane %v3307, 4
          %v3364 = vadd.f32 %v3307, %v3363
          %v3365 = vrot.slane %v3364, 2
          %v3366 = vadd.f32 %v3364, %v3365
          %v3367 = vrot.slane %v3366, 1
          %v3368 = vadd.f32 %v3366, %v3367
          %v3369 = vrot.slane %v3308, 4
          %v3370 = vadd.f32 %v3308, %v3369
          %v3371 = vrot.slane %v3370, 2
          %v3372 = vadd.f32 %v3370, %v3371
          %v3373 = vrot.slane %v3372, 1
          %v3374 = vadd.f32 %v3372, %v3373
          %v3375 = vrot.slane %v3309, 4
          %v3376 = vadd.f32 %v3309, %v3375
          %v3377 = vrot.slane %v3376, 2
          %v3378 = vadd.f32 %v3376, %v3377
          %v3379 = vrot.slane %v3378, 1
          %v3380 = vadd.f32 %v3378, %v3379
          %v3381 = vrot.slane %v3310, 4
          %v3382 = vadd.f32 %v3310, %v3381
          %v3383 = vrot.slane %v3382, 2
          %v3384 = vadd.f32 %v3382, %v3383
          %v3385 = vrot.slane %v3384, 1
          %v3386 = vadd.f32 %v3384, %v3385
          %v3387 = vrot.slane %v3311, 4
          %v3388 = vadd.f32 %v3311, %v3387
          %v3389 = vrot.slane %v3388, 2
          %v3390 = vadd.f32 %v3388, %v3389
          %v3391 = vrot.slane %v3390, 1
          %v3392 = vadd.f32 %v3390, %v3391
          %v3393 = vrot.slane %v3312, 4
          %v3394 = vadd.f32 %v3312, %v3393
          %v3395 = vrot.slane %v3394, 2
          %v3396 = vadd.f32 %v3394, %v3395
          %v3397 = vrot.slane %v3396, 1
          %v3398 = vadd.f32 %v3396, %v3397
          %v3399 = vrot.slane %v3313, 4
          %v3400 = vadd.f32 %v3313, %v3399
          %v3401 = vrot.slane %v3400, 2
          %v3402 = vadd.f32 %v3400, %v3401
          %v3403 = vrot.slane %v3402, 1
          %v3404 = vadd.f32 %v3402, %v3403
          %v3405 = vrot.slane %v3314, 4
          %v3406 = vadd.f32 %v3314, %v3405
          %v3407 = vrot.slane %v3406, 2
          %v3408 = vadd.f32 %v3406, %v3407
          %v3409 = vrot.slane %v3408, 1
          %v3410 = vadd.f32 %v3408, %v3409
          %v3411 = vmul.f32 %v3320, 0.00390625
          %v3412 = vmul.f32 %v3326, 0.00390625
          %v3413 = vmul.f32 %v3332, 0.00390625
          %v3414 = vmul.f32 %v3338, 0.00390625
          %v3415 = vmul.f32 %v3344, 0.00390625
          %v3416 = vmul.f32 %v3350, 0.00390625
          %v3417 = vmul.f32 %v3356, 0.00390625
          %v3418 = vmul.f32 %v3362, 0.00390625
          %v3419 = vmul.f32 %v3368, 0.00390625
          %v3420 = vmul.f32 %v3374, 0.00390625
          %v3421 = vmul.f32 %v3380, 0.00390625
          %v3422 = vmul.f32 %v3386, 0.00390625
          %v3423 = vmul.f32 %v3392, 0.00390625
          %v3424 = vmul.f32 %v3398, 0.00390625
          %v3425 = vmul.f32 %v3404, 0.00390625
          %v3426 = vmul.f32 %v3410, 0.00390625
          %v3427 = vld [vmem:[%s3] sm:$0xff]
          %v3428 = vld [vmem:[%s3 + $0x8] sm:$0xff]
          %v3429 = vld [vmem:[%s3 + $0x10] sm:$0xff]
          %v3430 = vld [vmem:[%s3 + $0x18] sm:$0xff]
          %v3431 = vld [vmem:[%s3 + $0x20] sm:$0xff]
          %v3432 = vld [vmem:[%s3 + $0x28] sm:$0xff]
          %v3433 = vld [vmem:[%s3 + $0x30] sm:$0xff]
          %v3434 = vld [vmem:[%s3 + $0x38] sm:$0xff]
          %v3435 = vld [vmem:[%s3 + $0x40] sm:$0xff]
          %v3436 = vld [vmem:[%s3 + $0x48] sm:$0xff]
          %v3437 = vld [vmem:[%s3 + $0x50] sm:$0xff]
          %v3438 = vld [vmem:[%s3 + $0x58] sm:$0xff]
          %v3439 = vld [vmem:[%s3 + $0x60] sm:$0xff]
          %v3440 = vld [vmem:[%s3 + $0x68] sm:$0xff]
          %v3441 = vld [vmem:[%s3 + $0x70] sm:$0xff]
          %v3442 = vld [vmem:[%s3 + $0x78] sm:$0xff]
          %v3443 = vld [vmem:[%s3 + $0x80] sm:$0xff]
          %v3444 = vld [vmem:[%s3 + $0x88] sm:$0xff]
          %v3445 = vld [vmem:[%s3 + $0x90] sm:$0xff]
          %v3446 = vld [vmem:[%s3 + $0x98] sm:$0xff]
          %v3447 = vld [vmem:[%s3 + $0xa0] sm:$0xff]
          %v3448 = vld [vmem:[%s3 + $0xa8] sm:$0xff]
          %v3449 = vld [vmem:[%s3 + $0xb0] sm:$0xff]
          %v3450 = vld [vmem:[%s3 + $0xb8] sm:$0xff]
          %v3451 = vld [vmem:[%s3 + $0xc0] sm:$0xff]
          %v3452 = vld [vmem:[%s3 + $0xc8] sm:$0xff]
          %v3453 = vld [vmem:[%s3 + $0xd0] sm:$0xff]
          %v3454 = vld [vmem:[%s3 + $0xd8] sm:$0xff]
          %v3455 = vld [vmem:[%s3 + $0xe0] sm:$0xff]
          %v3456 = vld [vmem:[%s3 + $0xe8] sm:$0xff]
          %v3457 = vld [vmem:[%s3 + $0xf0] sm:$0xff]
          %v3458 = vld [vmem:[%s3 + $0xf8] sm:$0xff]
          %v3459 = vld [vmem:[%s3 + $0x100] sm:$0xff]
          %v3460 = vld [vmem:[%s3 + $0x108] sm:$0xff]
          %v3461 = vld [vmem:[%s3 + $0x110] sm:$0xff]
          %v3462 = vld [vmem:[%s3 + $0x118] sm:$0xff]
          %v3463 = vld [vmem:[%s3 + $0x120] sm:$0xff]
          %v3464 = vld [vmem:[%s3 + $0x128] sm:$0xff]
          %v3465 = vld [vmem:[%s3 + $0x130] sm:$0xff]
          %v3466 = vld [vmem:[%s3 + $0x138] sm:$0xff]
          %v3467 = vld [vmem:[%s3 + $0x140] sm:$0xff]
          %v3468 = vld [vmem:[%s3 + $0x148] sm:$0xff]
          %v3469 = vld [vmem:[%s3 + $0x150] sm:$0xff]
          %v3470 = vld [vmem:[%s3 + $0x158] sm:$0xff]
          %v3471 = vld [vmem:[%s3 + $0x160] sm:$0xff]
          %v3472 = vld [vmem:[%s3 + $0x168] sm:$0xff]
          %v3473 = vld [vmem:[%s3 + $0x170] sm:$0xff]
          %v3474 = vld [vmem:[%s3 + $0x178] sm:$0xff]
          %v3475 = vld [vmem:[%s3 + $0x180] sm:$0xff]
          %v3476 = vld [vmem:[%s3 + $0x188] sm:$0xff]
          %v3477 = vld [vmem:[%s3 + $0x190] sm:$0xff]
          %v3478 = vld [vmem:[%s3 + $0x198] sm:$0xff]
          %v3479 = vld [vmem:[%s3 + $0x1a0] sm:$0xff]
          %v3480 = vld [vmem:[%s3 + $0x1a8] sm:$0xff]
          %v3481 = vld [vmem:[%s3 + $0x1b0] sm:$0xff]
          %v3482 = vld [vmem:[%s3 + $0x1b8] sm:$0xff]
          %v3483 = vld [vmem:[%s3 + $0x1c0] sm:$0xff]
          %v3484 = vld [vmem:[%s3 + $0x1c8] sm:$0xff]
          %v3485 = vld [vmem:[%s3 + $0x1d0] sm:$0xff]
          %v3486 = vld [vmem:[%s3 + $0x1d8] sm:$0xff]
          %v3487 = vld [vmem:[%s3 + $0x1e0] sm:$0xff]
          %v3488 = vld [vmem:[%s3 + $0x1e8] sm:$0xff]
          %v3489 = vld [vmem:[%s3 + $0x1f0] sm:$0xff]
          %v3490 = vld [vmem:[%s3 + $0x1f8] sm:$0xff]
          %v3491 = vld [vmem:[%s3 + $0x200] sm:$0xff]
          %v3492 = vld [vmem:[%s3 + $0x208] sm:$0xff]
          %v3493 = vld [vmem:[%s3 + $0x210] sm:$0xff]
          %v3494 = vld [vmem:[%s3 + $0x218] sm:$0xff]
          %v3495 = vld [vmem:[%s3 + $0x220] sm:$0xff]
          %v3496 = vld [vmem:[%s3 + $0x228] sm:$0xff]
          %v3497 = vld [vmem:[%s3 + $0x230] sm:$0xff]
          %v3498 = vld [vmem:[%s3 + $0x238] sm:$0xff]
          %v3499 = vld [vmem:[%s3 + $0x240] sm:$0xff]
          %v3500 = vld [vmem:[%s3 + $0x248] sm:$0xff]
          %v3501 = vld [vmem:[%s3 + $0x250] sm:$0xff]
          %v3502 = vld [vmem:[%s3 + $0x258] sm:$0xff]
          %v3503 = vld [vmem:[%s3 + $0x260] sm:$0xff]
          %v3504 = vld [vmem:[%s3 + $0x268] sm:$0xff]
          %v3505 = vld [vmem:[%s3 + $0x270] sm:$0xff]
          %v3506 = vld [vmem:[%s3 + $0x278] sm:$0xff]
          %v3507 = vld [vmem:[%s3 + $0x280] sm:$0xff]
          %v3508 = vld [vmem:[%s3 + $0x288] sm:$0xff]
          %v3509 = vld [vmem:[%s3 + $0x290] sm:$0xff]
          %v3510 = vld [vmem:[%s3 + $0x298] sm:$0xff]
          %v3511 = vld [vmem:[%s3 + $0x2a0] sm:$0xff]
          %v3512 = vld [vmem:[%s3 + $0x2a8] sm:$0xff]
          %v3513 = vld [vmem:[%s3 + $0x2b0] sm:$0xff]
          %v3514 = vld [vmem:[%s3 + $0x2b8] sm:$0xff]
          %v3515 = vld [vmem:[%s3 + $0x2c0] sm:$0xff]
          %v3516 = vld [vmem:[%s3 + $0x2c8] sm:$0xff]
          %v3517 = vld [vmem:[%s3 + $0x2d0] sm:$0xff]
          %v3518 = vld [vmem:[%s3 + $0x2d8] sm:$0xff]
          %v3519 = vld [vmem:[%s3 + $0x2e0] sm:$0xff]
          %v3520 = vld [vmem:[%s3 + $0x2e8] sm:$0xff]
          %v3521 = vld [vmem:[%s3 + $0x2f0] sm:$0xff]
          %v3522 = vld [vmem:[%s3 + $0x2f8] sm:$0xff]
          %v3523 = vld [vmem:[%s3 + $0x300] sm:$0xff]
          %v3524 = vld [vmem:[%s3 + $0x308] sm:$0xff]
          %v3525 = vld [vmem:[%s3 + $0x310] sm:$0xff]
          %v3526 = vld [vmem:[%s3 + $0x318] sm:$0xff]
          %v3527 = vld [vmem:[%s3 + $0x320] sm:$0xff]
          %v3528 = vld [vmem:[%s3 + $0x328] sm:$0xff]
          %v3529 = vld [vmem:[%s3 + $0x330] sm:$0xff]
          %v3530 = vld [vmem:[%s3 + $0x338] sm:$0xff]
          %v3531 = vld [vmem:[%s3 + $0x340] sm:$0xff]
          %v3532 = vld [vmem:[%s3 + $0x348] sm:$0xff]
          %v3533 = vld [vmem:[%s3 + $0x350] sm:$0xff]
          %v3534 = vld [vmem:[%s3 + $0x358] sm:$0xff]
          %v3535 = vld [vmem:[%s3 + $0x360] sm:$0xff]
          %v3536 = vld [vmem:[%s3 + $0x368] sm:$0xff]
          %v3537 = vld [vmem:[%s3 + $0x370] sm:$0xff]
          %v3538 = vld [vmem:[%s3 + $0x378] sm:$0xff]
          %v3539 = vld [vmem:[%s3 + $0x380] sm:$0xff]
          %v3540 = vld [vmem:[%s3 + $0x388] sm:$0xff]
          %v3541 = vld [vmem:[%s3 + $0x390] sm:$0xff]
          %v3542 = vld [vmem:[%s3 + $0x398] sm:$0xff]
          %v3543 = vld [vmem:[%s3 + $0x3a0] sm:$0xff]
          %v3544 = vld [vmem:[%s3 + $0x3a8] sm:$0xff]
          %v3545 = vld [vmem:[%s3 + $0x3b0] sm:$0xff]
          %v3546 = vld [vmem:[%s3 + $0x3b8] sm:$0xff]
          %v3547 = vld [vmem:[%s3 + $0x3c0] sm:$0xff]
          %v3548 = vld [vmem:[%s3 + $0x3c8] sm:$0xff]
          %v3549 = vld [vmem:[%s3 + $0x3d0] sm:$0xff]
          %v3550 = vld [vmem:[%s3 + $0x3d8] sm:$0xff]
          %v3551 = vld [vmem:[%s3 + $0x3e0] sm:$0xff]
          %v3552 = vld [vmem:[%s3 + $0x3e8] sm:$0xff]
          %v3553 = vld [vmem:[%s3 + $0x3f0] sm:$0xff]
          %v3554 = vld [vmem:[%s3 + $0x3f8] sm:$0xff]
          %v3555 = vld [vmem:[%s3 + $0x400] sm:$0xff]
          %v3556 = vld [vmem:[%s3 + $0x408] sm:$0xff]
          %v3557 = vld [vmem:[%s3 + $0x410] sm:$0xff]
          %v3558 = vld [vmem:[%s3 + $0x418] sm:$0xff]
          %v3559 = vld [vmem:[%s3 + $0x420] sm:$0xff]
          %v3560 = vld [vmem:[%s3 + $0x428] sm:$0xff]
          %v3561 = vld [vmem:[%s3 + $0x430] sm:$0xff]
          %v3562 = vld [vmem:[%s3 + $0x438] sm:$0xff]
          %v3563 = vld [vmem:[%s3 + $0x440] sm:$0xff]
          %v3564 = vld [vmem:[%s3 + $0x448] sm:$0xff]
          %v3565 = vld [vmem:[%s3 + $0x450] sm:$0xff]
          %v3566 = vld [vmem:[%s3 + $0x458] sm:$0xff]
          %v3567 = vld [vmem:[%s3 + $0x460] sm:$0xff]
          %v3568 = vld [vmem:[%s3 + $0x468] sm:$0xff]
          %v3569 = vld [vmem:[%s3 + $0x470] sm:$0xff]
          %v3570 = vld [vmem:[%s3 + $0x478] sm:$0xff]
          %v3571 = vld [vmem:[%s3 + $0x480] sm:$0xff]
          %v3572 = vld [vmem:[%s3 + $0x488] sm:$0xff]
          %v3573 = vld [vmem:[%s3 + $0x490] sm:$0xff]
          %v3574 = vld [vmem:[%s3 + $0x498] sm:$0xff]
          %v3575 = vld [vmem:[%s3 + $0x4a0] sm:$0xff]
          %v3576 = vld [vmem:[%s3 + $0x4a8] sm:$0xff]
          %v3577 = vld [vmem:[%s3 + $0x4b0] sm:$0xff]
          %v3578 = vld [vmem:[%s3 + $0x4b8] sm:$0xff]
          %v3579 = vld [vmem:[%s3 + $0x4c0] sm:$0xff]
          %v3580 = vld [vmem:[%s3 + $0x4c8] sm:$0xff]
          %v3581 = vld [vmem:[%s3 + $0x4d0] sm:$0xff]
          %v3582 = vld [vmem:[%s3 + $0x4d8] sm:$0xff]
          %v3583 = vld [vmem:[%s3 + $0x4e0] sm:$0xff]
          %v3584 = vld [vmem:[%s3 + $0x4e8] sm:$0xff]
          %v3585 = vld [vmem:[%s3 + $0x4f0] sm:$0xff]
          %v3586 = vld [vmem:[%s3 + $0x4f8] sm:$0xff]
          %v3587 = vld [vmem:[%s3 + $0x500] sm:$0xff]
          %v3588 = vld [vmem:[%s3 + $0x508] sm:$0xff]
          %v3589 = vld [vmem:[%s3 + $0x510] sm:$0xff]
          %v3590 = vld [vmem:[%s3 + $0x518] sm:$0xff]
          %v3591 = vld [vmem:[%s3 + $0x520] sm:$0xff]
          %v3592 = vld [vmem:[%s3 + $0x528] sm:$0xff]
          %v3593 = vld [vmem:[%s3 + $0x530] sm:$0xff]
          %v3594 = vld [vmem:[%s3 + $0x538] sm:$0xff]
          %v3595 = vld [vmem:[%s3 + $0x540] sm:$0xff]
          %v3596 = vld [vmem:[%s3 + $0x548] sm:$0xff]
          %v3597 = vld [vmem:[%s3 + $0x550] sm:$0xff]
          %v3598 = vld [vmem:[%s3 + $0x558] sm:$0xff]
          %v3599 = vld [vmem:[%s3 + $0x560] sm:$0xff]
          %v3600 = vld [vmem:[%s3 + $0x568] sm:$0xff]
          %v3601 = vld [vmem:[%s3 + $0x570] sm:$0xff]
          %v3602 = vld [vmem:[%s3 + $0x578] sm:$0xff]
          %v3603 = vld [vmem:[%s3 + $0x580] sm:$0xff]
          %v3604 = vld [vmem:[%s3 + $0x588] sm:$0xff]
          %v3605 = vld [vmem:[%s3 + $0x590] sm:$0xff]
          %v3606 = vld [vmem:[%s3 + $0x598] sm:$0xff]
          %v3607 = vld [vmem:[%s3 + $0x5a0] sm:$0xff]
          %v3608 = vld [vmem:[%s3 + $0x5a8] sm:$0xff]
          %v3609 = vld [vmem:[%s3 + $0x5b0] sm:$0xff]
          %v3610 = vld [vmem:[%s3 + $0x5b8] sm:$0xff]
          %v3611 = vld [vmem:[%s3 + $0x5c0] sm:$0xff]
          %v3612 = vld [vmem:[%s3 + $0x5c8] sm:$0xff]
          %v3613 = vld [vmem:[%s3 + $0x5d0] sm:$0xff]
          %v3614 = vld [vmem:[%s3 + $0x5d8] sm:$0xff]
          %v3615 = vld [vmem:[%s3 + $0x5e0] sm:$0xff]
          %v3616 = vld [vmem:[%s3 + $0x5e8] sm:$0xff]
          %v3617 = vld [vmem:[%s3 + $0x5f0] sm:$0xff]
          %v3618 = vld [vmem:[%s3 + $0x5f8] sm:$0xff]
          %v3619 = vld [vmem:[%s3 + $0x600] sm:$0xff]
          %v3620 = vld [vmem:[%s3 + $0x608] sm:$0xff]
          %v3621 = vld [vmem:[%s3 + $0x610] sm:$0xff]
          %v3622 = vld [vmem:[%s3 + $0x618] sm:$0xff]
          %v3623 = vld [vmem:[%s3 + $0x620] sm:$0xff]
          %v3624 = vld [vmem:[%s3 + $0x628] sm:$0xff]
          %v3625 = vld [vmem:[%s3 + $0x630] sm:$0xff]
          %v3626 = vld [vmem:[%s3 + $0x638] sm:$0xff]
          %v3627 = vld [vmem:[%s3 + $0x640] sm:$0xff]
          %v3628 = vld [vmem:[%s3 + $0x648] sm:$0xff]
          %v3629 = vld [vmem:[%s3 + $0x650] sm:$0xff]
          %v3630 = vld [vmem:[%s3 + $0x658] sm:$0xff]
          %v3631 = vld [vmem:[%s3 + $0x660] sm:$0xff]
          %v3632 = vld [vmem:[%s3 + $0x668] sm:$0xff]
          %v3633 = vld [vmem:[%s3 + $0x670] sm:$0xff]
          %v3634 = vld [vmem:[%s3 + $0x678] sm:$0xff]
          %v3635 = vld [vmem:[%s3 + $0x680] sm:$0xff]
          %v3636 = vld [vmem:[%s3 + $0x688] sm:$0xff]
          %v3637 = vld [vmem:[%s3 + $0x690] sm:$0xff]
          %v3638 = vld [vmem:[%s3 + $0x698] sm:$0xff]
          %v3639 = vld [vmem:[%s3 + $0x6a0] sm:$0xff]
          %v3640 = vld [vmem:[%s3 + $0x6a8] sm:$0xff]
          %v3641 = vld [vmem:[%s3 + $0x6b0] sm:$0xff]
          %v3642 = vld [vmem:[%s3 + $0x6b8] sm:$0xff]
          %v3643 = vld [vmem:[%s3 + $0x6c0] sm:$0xff]
          %v3644 = vld [vmem:[%s3 + $0x6c8] sm:$0xff]
          %v3645 = vld [vmem:[%s3 + $0x6d0] sm:$0xff]
          %v3646 = vld [vmem:[%s3 + $0x6d8] sm:$0xff]
          %v3647 = vld [vmem:[%s3 + $0x6e0] sm:$0xff]
          %v3648 = vld [vmem:[%s3 + $0x6e8] sm:$0xff]
          %v3649 = vld [vmem:[%s3 + $0x6f0] sm:$0xff]
          %v3650 = vld [vmem:[%s3 + $0x6f8] sm:$0xff]
          %v3651 = vld [vmem:[%s3 + $0x700] sm:$0xff]
          %v3652 = vld [vmem:[%s3 + $0x708] sm:$0xff]
          %v3653 = vld [vmem:[%s3 + $0x710] sm:$0xff]
          %v3654 = vld [vmem:[%s3 + $0x718] sm:$0xff]
          %v3655 = vld [vmem:[%s3 + $0x720] sm:$0xff]
          %v3656 = vld [vmem:[%s3 + $0x728] sm:$0xff]
          %v3657 = vld [vmem:[%s3 + $0x730] sm:$0xff]
          %v3658 = vld [vmem:[%s3 + $0x738] sm:$0xff]
          %v3659 = vld [vmem:[%s3 + $0x740] sm:$0xff]
          %v3660 = vld [vmem:[%s3 + $0x748] sm:$0xff]
          %v3661 = vld [vmem:[%s3 + $0x750] sm:$0xff]
          %v3662 = vld [vmem:[%s3 + $0x758] sm:$0xff]
          %v3663 = vld [vmem:[%s3 + $0x760] sm:$0xff]
          %v3664 = vld [vmem:[%s3 + $0x768] sm:$0xff]
          %v3665 = vld [vmem:[%s3 + $0x770] sm:$0xff]
          %v3666 = vld [vmem:[%s3 + $0x778] sm:$0xff]
          %v3667 = vld [vmem:[%s3 + $0x780] sm:$0xff]
          %v3668 = vld [vmem:[%s3 + $0x788] sm:$0xff]
          %v3669 = vld [vmem:[%s3 + $0x790] sm:$0xff]
          %v3670 = vld [vmem:[%s3 + $0x798] sm:$0xff]
          %v3671 = vld [vmem:[%s3 + $0x7a0] sm:$0xff]
          %v3672 = vld [vmem:[%s3 + $0x7a8] sm:$0xff]
          %v3673 = vld [vmem:[%s3 + $0x7b0] sm:$0xff]
          %v3674 = vld [vmem:[%s3 + $0x7b8] sm:$0xff]
          %v3675 = vld [vmem:[%s3 + $0x7c0] sm:$0xff]
          %v3676 = vld [vmem:[%s3 + $0x7c8] sm:$0xff]
          %v3677 = vld [vmem:[%s3 + $0x7d0] sm:$0xff]
          %v3678 = vld [vmem:[%s3 + $0x7d8] sm:$0xff]
          %v3679 = vld [vmem:[%s3 + $0x7e0] sm:$0xff]
          %v3680 = vld [vmem:[%s3 + $0x7e8] sm:$0xff]
          %v3681 = vld [vmem:[%s3 + $0x7f0] sm:$0xff]
          %v3682 = vld [vmem:[%s3 + $0x7f8] sm:$0xff]
          %v3683 = vunpack.c.l.bf16 %v3427
          %v3684 = vunpack.c.h.bf16 %v3427
          %v3685 = vunpack.c.l.bf16 %v3428
          %v3686 = vunpack.c.h.bf16 %v3428
          %v3687 = vunpack.c.l.bf16 %v3429
          %v3688 = vunpack.c.h.bf16 %v3429
          %v3689 = vunpack.c.l.bf16 %v3430
          %v3690 = vunpack.c.h.bf16 %v3430
          %v3691 = vunpack.c.l.bf16 %v3431
          %v3692 = vunpack.c.h.bf16 %v3431
          %v3693 = vunpack.c.l.bf16 %v3432
          %v3694 = vunpack.c.h.bf16 %v3432
          %v3695 = vunpack.c.l.bf16 %v3433
          %v3696 = vunpack.c.h.bf16 %v3433
          %v3697 = vunpack.c.l.bf16 %v3434
          %v3698 = vunpack.c.h.bf16 %v3434
          %v3699 = vunpack.c.l.bf16 %v3435
          %v3700 = vunpack.c.h.bf16 %v3435
          %v3701 = vunpack.c.l.bf16 %v3436
          %v3702 = vunpack.c.h.bf16 %v3436
          %v3703 = vunpack.c.l.bf16 %v3437
          %v3704 = vunpack.c.h.bf16 %v3437
          %v3705 = vunpack.c.l.bf16 %v3438
          %v3706 = vunpack.c.h.bf16 %v3438
          %v3707 = vunpack.c.l.bf16 %v3439
          %v3708 = vunpack.c.h.bf16 %v3439
          %v3709 = vunpack.c.l.bf16 %v3440
          %v3710 = vunpack.c.h.bf16 %v3440
          %v3711 = vunpack.c.l.bf16 %v3441
          %v3712 = vunpack.c.h.bf16 %v3441
          %v3713 = vunpack.c.l.bf16 %v3442
          %v3714 = vunpack.c.h.bf16 %v3442
          %v3715 = vunpack.c.l.bf16 %v3443
          %v3716 = vunpack.c.h.bf16 %v3443
          %v3717 = vunpack.c.l.bf16 %v3444
          %v3718 = vunpack.c.h.bf16 %v3444
          %v3719 = vunpack.c.l.bf16 %v3445
          %v3720 = vunpack.c.h.bf16 %v3445
          %v3721 = vunpack.c.l.bf16 %v3446
          %v3722 = vunpack.c.h.bf16 %v3446
          %v3723 = vunpack.c.l.bf16 %v3447
          %v3724 = vunpack.c.h.bf16 %v3447
          %v3725 = vunpack.c.l.bf16 %v3448
          %v3726 = vunpack.c.h.bf16 %v3448
          %v3727 = vunpack.c.l.bf16 %v3449
          %v3728 = vunpack.c.h.bf16 %v3449
          %v3729 = vunpack.c.l.bf16 %v3450
          %v3730 = vunpack.c.h.bf16 %v3450
          %v3731 = vunpack.c.l.bf16 %v3451
          %v3732 = vunpack.c.h.bf16 %v3451
          %v3733 = vunpack.c.l.bf16 %v3452
          %v3734 = vunpack.c.h.bf16 %v3452
          %v3735 = vunpack.c.l.bf16 %v3453
          %v3736 = vunpack.c.h.bf16 %v3453
          %v3737 = vunpack.c.l.bf16 %v3454
          %v3738 = vunpack.c.h.bf16 %v3454
          %v3739 = vunpack.c.l.bf16 %v3455
          %v3740 = vunpack.c.h.bf16 %v3455
          %v3741 = vunpack.c.l.bf16 %v3456
          %v3742 = vunpack.c.h.bf16 %v3456
          %v3743 = vunpack.c.l.bf16 %v3457
          %v3744 = vunpack.c.h.bf16 %v3457
          %v3745 = vunpack.c.l.bf16 %v3458
          %v3746 = vunpack.c.h.bf16 %v3458
          %v3747 = vunpack.c.l.bf16 %v3459
          %v3748 = vunpack.c.h.bf16 %v3459
          %v3749 = vunpack.c.l.bf16 %v3460
          %v3750 = vunpack.c.h.bf16 %v3460
          %v3751 = vunpack.c.l.bf16 %v3461
          %v3752 = vunpack.c.h.bf16 %v3461
          %v3753 = vunpack.c.l.bf16 %v3462
          %v3754 = vunpack.c.h.bf16 %v3462
          %v3755 = vunpack.c.l.bf16 %v3463
          %v3756 = vunpack.c.h.bf16 %v3463
          %v3757 = vunpack.c.l.bf16 %v3464
          %v3758 = vunpack.c.h.bf16 %v3464
          %v3759 = vunpack.c.l.bf16 %v3465
          %v3760 = vunpack.c.h.bf16 %v3465
          %v3761 = vunpack.c.l.bf16 %v3466
          %v3762 = vunpack.c.h.bf16 %v3466
          %v3763 = vunpack.c.l.bf16 %v3467
          %v3764 = vunpack.c.h.bf16 %v3467
          %v3765 = vunpack.c.l.bf16 %v3468
          %v3766 = vunpack.c.h.bf16 %v3468
          %v3767 = vunpack.c.l.bf16 %v3469
          %v3768 = vunpack.c.h.bf16 %v3469
          %v3769 = vunpack.c.l.bf16 %v3470
          %v3770 = vunpack.c.h.bf16 %v3470
          %v3771 = vunpack.c.l.bf16 %v3471
          %v3772 = vunpack.c.h.bf16 %v3471
          %v3773 = vunpack.c.l.bf16 %v3472
          %v3774 = vunpack.c.h.bf16 %v3472
          %v3775 = vunpack.c.l.bf16 %v3473
          %v3776 = vunpack.c.h.bf16 %v3473
          %v3777 = vunpack.c.l.bf16 %v3474
          %v3778 = vunpack.c.h.bf16 %v3474
          %v3779 = vunpack.c.l.bf16 %v3475
          %v3780 = vunpack.c.h.bf16 %v3475
          %v3781 = vunpack.c.l.bf16 %v3476
          %v3782 = vunpack.c.h.bf16 %v3476
          %v3783 = vunpack.c.l.bf16 %v3477
          %v3784 = vunpack.c.h.bf16 %v3477
          %v3785 = vunpack.c.l.bf16 %v3478
          %v3786 = vunpack.c.h.bf16 %v3478
          %v3787 = vunpack.c.l.bf16 %v3479
          %v3788 = vunpack.c.h.bf16 %v3479
          %v3789 = vunpack.c.l.bf16 %v3480
          %v3790 = vunpack.c.h.bf16 %v3480
          %v3791 = vunpack.c.l.bf16 %v3481
          %v3792 = vunpack.c.h.bf16 %v3481
          %v3793 = vunpack.c.l.bf16 %v3482
          %v3794 = vunpack.c.h.bf16 %v3482
          %v3795 = vunpack.c.l.bf16 %v3483
          %v3796 = vunpack.c.h.bf16 %v3483
          %v3797 = vunpack.c.l.bf16 %v3484
          %v3798 = vunpack.c.h.bf16 %v3484
          %v3799 = vunpack.c.l.bf16 %v3485
          %v3800 = vunpack.c.h.bf16 %v3485
          %v3801 = vunpack.c.l.bf16 %v3486
          %v3802 = vunpack.c.h.bf16 %v3486
          %v3803 = vunpack.c.l.bf16 %v3487
          %v3804 = vunpack.c.h.bf16 %v3487
          %v3805 = vunpack.c.l.bf16 %v3488
          %v3806 = vunpack.c.h.bf16 %v3488
          %v3807 = vunpack.c.l.bf16 %v3489
          %v3808 = vunpack.c.h.bf16 %v3489
          %v3809 = vunpack.c.l.bf16 %v3490
          %v3810 = vunpack.c.h.bf16 %v3490
          %v3811 = vunpack.c.l.bf16 %v3491
          %v3812 = vunpack.c.h.bf16 %v3491
          %v3813 = vunpack.c.l.bf16 %v3492
          %v3814 = vunpack.c.h.bf16 %v3492
          %v3815 = vunpack.c.l.bf16 %v3493
          %v3816 = vunpack.c.h.bf16 %v3493
          %v3817 = vunpack.c.l.bf16 %v3494
          %v3818 = vunpack.c.h.bf16 %v3494
          %v3819 = vunpack.c.l.bf16 %v3495
          %v3820 = vunpack.c.h.bf16 %v3495
          %v3821 = vunpack.c.l.bf16 %v3496
          %v3822 = vunpack.c.h.bf16 %v3496
          %v3823 = vunpack.c.l.bf16 %v3497
          %v3824 = vunpack.c.h.bf16 %v3497
          %v3825 = vunpack.c.l.bf16 %v3498
          %v3826 = vunpack.c.h.bf16 %v3498
          %v3827 = vunpack.c.l.bf16 %v3499
          %v3828 = vunpack.c.h.bf16 %v3499
          %v3829 = vunpack.c.l.bf16 %v3500
          %v3830 = vunpack.c.h.bf16 %v3500
          %v3831 = vunpack.c.l.bf16 %v3501
          %v3832 = vunpack.c.h.bf16 %v3501
          %v3833 = vunpack.c.l.bf16 %v3502
          %v3834 = vunpack.c.h.bf16 %v3502
          %v3835 = vunpack.c.l.bf16 %v3503
          %v3836 = vunpack.c.h.bf16 %v3503
          %v3837 = vunpack.c.l.bf16 %v3504
          %v3838 = vunpack.c.h.bf16 %v3504
          %v3839 = vunpack.c.l.bf16 %v3505
          %v3840 = vunpack.c.h.bf16 %v3505
          %v3841 = vunpack.c.l.bf16 %v3506
          %v3842 = vunpack.c.h.bf16 %v3506
          %v3843 = vunpack.c.l.bf16 %v3507
          %v3844 = vunpack.c.h.bf16 %v3507
          %v3845 = vunpack.c.l.bf16 %v3508
          %v3846 = vunpack.c.h.bf16 %v3508
          %v3847 = vunpack.c.l.bf16 %v3509
          %v3848 = vunpack.c.h.bf16 %v3509
          %v3849 = vunpack.c.l.bf16 %v3510
          %v3850 = vunpack.c.h.bf16 %v3510
          %v3851 = vunpack.c.l.bf16 %v3511
          %v3852 = vunpack.c.h.bf16 %v3511
          %v3853 = vunpack.c.l.bf16 %v3512
          %v3854 = vunpack.c.h.bf16 %v3512
          %v3855 = vunpack.c.l.bf16 %v3513
          %v3856 = vunpack.c.h.bf16 %v3513
          %v3857 = vunpack.c.l.bf16 %v3514
          %v3858 = vunpack.c.h.bf16 %v3514
          %v3859 = vunpack.c.l.bf16 %v3515
          %v3860 = vunpack.c.h.bf16 %v3515
          %v3861 = vunpack.c.l.bf16 %v3516
          %v3862 = vunpack.c.h.bf16 %v3516
          %v3863 = vunpack.c.l.bf16 %v3517
          %v3864 = vunpack.c.h.bf16 %v3517
          %v3865 = vunpack.c.l.bf16 %v3518
          %v3866 = vunpack.c.h.bf16 %v3518
          %v3867 = vunpack.c.l.bf16 %v3519
          %v3868 = vunpack.c.h.bf16 %v3519
          %v3869 = vunpack.c.l.bf16 %v3520
          %v3870 = vunpack.c.h.bf16 %v3520
          %v3871 = vunpack.c.l.bf16 %v3521
          %v3872 = vunpack.c.h.bf16 %v3521
          %v3873 = vunpack.c.l.bf16 %v3522
          %v3874 = vunpack.c.h.bf16 %v3522
          %v3875 = vunpack.c.l.bf16 %v3523
          %v3876 = vunpack.c.h.bf16 %v3523
          %v3877 = vunpack.c.l.bf16 %v3524
          %v3878 = vunpack.c.h.bf16 %v3524
          %v3879 = vunpack.c.l.bf16 %v3525
          %v3880 = vunpack.c.h.bf16 %v3525
          %v3881 = vunpack.c.l.bf16 %v3526
          %v3882 = vunpack.c.h.bf16 %v3526
          %v3883 = vunpack.c.l.bf16 %v3527
          %v3884 = vunpack.c.h.bf16 %v3527
          %v3885 = vunpack.c.l.bf16 %v3528
          %v3886 = vunpack.c.h.bf16 %v3528
          %v3887 = vunpack.c.l.bf16 %v3529
          %v3888 = vunpack.c.h.bf16 %v3529
          %v3889 = vunpack.c.l.bf16 %v3530
          %v3890 = vunpack.c.h.bf16 %v3530
          %v3891 = vunpack.c.l.bf16 %v3531
          %v3892 = vunpack.c.h.bf16 %v3531
          %v3893 = vunpack.c.l.bf16 %v3532
          %v3894 = vunpack.c.h.bf16 %v3532
          %v3895 = vunpack.c.l.bf16 %v3533
          %v3896 = vunpack.c.h.bf16 %v3533
          %v3897 = vunpack.c.l.bf16 %v3534
          %v3898 = vunpack.c.h.bf16 %v3534
          %v3899 = vunpack.c.l.bf16 %v3535
          %v3900 = vunpack.c.h.bf16 %v3535
          %v3901 = vunpack.c.l.bf16 %v3536
          %v3902 = vunpack.c.h.bf16 %v3536
          %v3903 = vunpack.c.l.bf16 %v3537
          %v3904 = vunpack.c.h.bf16 %v3537
          %v3905 = vunpack.c.l.bf16 %v3538
          %v3906 = vunpack.c.h.bf16 %v3538
          %v3907 = vunpack.c.l.bf16 %v3539
          %v3908 = vunpack.c.h.bf16 %v3539
          %v3909 = vunpack.c.l.bf16 %v3540
          %v3910 = vunpack.c.h.bf16 %v3540
          %v3911 = vunpack.c.l.bf16 %v3541
          %v3912 = vunpack.c.h.bf16 %v3541
          %v3913 = vunpack.c.l.bf16 %v3542
          %v3914 = vunpack.c.h.bf16 %v3542
          %v3915 = vunpack.c.l.bf16 %v3543
          %v3916 = vunpack.c.h.bf16 %v3543
          %v3917 = vunpack.c.l.bf16 %v3544
          %v3918 = vunpack.c.h.bf16 %v3544
          %v3919 = vunpack.c.l.bf16 %v3545
          %v3920 = vunpack.c.h.bf16 %v3545
          %v3921 = vunpack.c.l.bf16 %v3546
          %v3922 = vunpack.c.h.bf16 %v3546
          %v3923 = vunpack.c.l.bf16 %v3547
          %v3924 = vunpack.c.h.bf16 %v3547
          %v3925 = vunpack.c.l.bf16 %v3548
          %v3926 = vunpack.c.h.bf16 %v3548
          %v3927 = vunpack.c.l.bf16 %v3549
          %v3928 = vunpack.c.h.bf16 %v3549
          %v3929 = vunpack.c.l.bf16 %v3550
          %v3930 = vunpack.c.h.bf16 %v3550
          %v3931 = vunpack.c.l.bf16 %v3551
          %v3932 = vunpack.c.h.bf16 %v3551
          %v3933 = vunpack.c.l.bf16 %v3552
          %v3934 = vunpack.c.h.bf16 %v3552
          %v3935 = vunpack.c.l.bf16 %v3553
          %v3936 = vunpack.c.h.bf16 %v3553
          %v3937 = vunpack.c.l.bf16 %v3554
          %v3938 = vunpack.c.h.bf16 %v3554
          %v3939 = vunpack.c.l.bf16 %v3555
          %v3940 = vunpack.c.h.bf16 %v3555
          %v3941 = vunpack.c.l.bf16 %v3556
          %v3942 = vunpack.c.h.bf16 %v3556
          %v3943 = vunpack.c.l.bf16 %v3557
          %v3944 = vunpack.c.h.bf16 %v3557
          %v3945 = vunpack.c.l.bf16 %v3558
          %v3946 = vunpack.c.h.bf16 %v3558
          %v3947 = vunpack.c.l.bf16 %v3559
          %v3948 = vunpack.c.h.bf16 %v3559
          %v3949 = vunpack.c.l.bf16 %v3560
          %v3950 = vunpack.c.h.bf16 %v3560
          %v3951 = vunpack.c.l.bf16 %v3561
          %v3952 = vunpack.c.h.bf16 %v3561
          %v3953 = vunpack.c.l.bf16 %v3562
          %v3954 = vunpack.c.h.bf16 %v3562
          %v3955 = vunpack.c.l.bf16 %v3563
          %v3956 = vunpack.c.h.bf16 %v3563
          %v3957 = vunpack.c.l.bf16 %v3564
          %v3958 = vunpack.c.h.bf16 %v3564
          %v3959 = vunpack.c.l.bf16 %v3565
          %v3960 = vunpack.c.h.bf16 %v3565
          %v3961 = vunpack.c.l.bf16 %v3566
          %v3962 = vunpack.c.h.bf16 %v3566
          %v3963 = vunpack.c.l.bf16 %v3567
          %v3964 = vunpack.c.h.bf16 %v3567
          %v3965 = vunpack.c.l.bf16 %v3568
          %v3966 = vunpack.c.h.bf16 %v3568
          %v3967 = vunpack.c.l.bf16 %v3569
          %v3968 = vunpack.c.h.bf16 %v3569
          %v3969 = vunpack.c.l.bf16 %v3570
          %v3970 = vunpack.c.h.bf16 %v3570
          %v3971 = vunpack.c.l.bf16 %v3571
          %v3972 = vunpack.c.h.bf16 %v3571
          %v3973 = vunpack.c.l.bf16 %v3572
          %v3974 = vunpack.c.h.bf16 %v3572
          %v3975 = vunpack.c.l.bf16 %v3573
          %v3976 = vunpack.c.h.bf16 %v3573
          %v3977 = vunpack.c.l.bf16 %v3574
          %v3978 = vunpack.c.h.bf16 %v3574
          %v3979 = vunpack.c.l.bf16 %v3575
          %v3980 = vunpack.c.h.bf16 %v3575
          %v3981 = vunpack.c.l.bf16 %v3576
          %v3982 = vunpack.c.h.bf16 %v3576
          %v3983 = vunpack.c.l.bf16 %v3577
          %v3984 = vunpack.c.h.bf16 %v3577
          %v3985 = vunpack.c.l.bf16 %v3578
          %v3986 = vunpack.c.h.bf16 %v3578
          %v3987 = vunpack.c.l.bf16 %v3579
          %v3988 = vunpack.c.h.bf16 %v3579
          %v3989 = vunpack.c.l.bf16 %v3580
          %v3990 = vunpack.c.h.bf16 %v3580
          %v3991 = vunpack.c.l.bf16 %v3581
          %v3992 = vunpack.c.h.bf16 %v3581
          %v3993 = vunpack.c.l.bf16 %v3582
          %v3994 = vunpack.c.h.bf16 %v3582
          %v3995 = vunpack.c.l.bf16 %v3583
          %v3996 = vunpack.c.h.bf16 %v3583
          %v3997 = vunpack.c.l.bf16 %v3584
          %v3998 = vunpack.c.h.bf16 %v3584
          %v3999 = vunpack.c.l.bf16 %v3585
          %v4000 = vunpack.c.h.bf16 %v3585
          %v4001 = vunpack.c.l.bf16 %v3586
          %v4002 = vunpack.c.h.bf16 %v3586
          %v4003 = vunpack.c.l.bf16 %v3587
          %v4004 = vunpack.c.h.bf16 %v3587
          %v4005 = vunpack.c.l.bf16 %v3588
          %v4006 = vunpack.c.h.bf16 %v3588
          %v4007 = vunpack.c.l.bf16 %v3589
          %v4008 = vunpack.c.h.bf16 %v3589
          %v4009 = vunpack.c.l.bf16 %v3590
          %v4010 = vunpack.c.h.bf16 %v3590
          %v4011 = vunpack.c.l.bf16 %v3591
          %v4012 = vunpack.c.h.bf16 %v3591
          %v4013 = vunpack.c.l.bf16 %v3592
          %v4014 = vunpack.c.h.bf16 %v3592
          %v4015 = vunpack.c.l.bf16 %v3593
          %v4016 = vunpack.c.h.bf16 %v3593
          %v4017 = vunpack.c.l.bf16 %v3594
          %v4018 = vunpack.c.h.bf16 %v3594
          %v4019 = vunpack.c.l.bf16 %v3595
          %v4020 = vunpack.c.h.bf16 %v3595
          %v4021 = vunpack.c.l.bf16 %v3596
          %v4022 = vunpack.c.h.bf16 %v3596
          %v4023 = vunpack.c.l.bf16 %v3597
          %v4024 = vunpack.c.h.bf16 %v3597
          %v4025 = vunpack.c.l.bf16 %v3598
          %v4026 = vunpack.c.h.bf16 %v3598
          %v4027 = vunpack.c.l.bf16 %v3599
          %v4028 = vunpack.c.h.bf16 %v3599
          %v4029 = vunpack.c.l.bf16 %v3600
          %v4030 = vunpack.c.h.bf16 %v3600
          %v4031 = vunpack.c.l.bf16 %v3601
          %v4032 = vunpack.c.h.bf16 %v3601
          %v4033 = vunpack.c.l.bf16 %v3602
          %v4034 = vunpack.c.h.bf16 %v3602
          %v4035 = vunpack.c.l.bf16 %v3603
          %v4036 = vunpack.c.h.bf16 %v3603
          %v4037 = vunpack.c.l.bf16 %v3604
          %v4038 = vunpack.c.h.bf16 %v3604
          %v4039 = vunpack.c.l.bf16 %v3605
          %v4040 = vunpack.c.h.bf16 %v3605
          %v4041 = vunpack.c.l.bf16 %v3606
          %v4042 = vunpack.c.h.bf16 %v3606
          %v4043 = vunpack.c.l.bf16 %v3607
          %v4044 = vunpack.c.h.bf16 %v3607
          %v4045 = vunpack.c.l.bf16 %v3608
          %v4046 = vunpack.c.h.bf16 %v3608
          %v4047 = vunpack.c.l.bf16 %v3609
          %v4048 = vunpack.c.h.bf16 %v3609
          %v4049 = vunpack.c.l.bf16 %v3610
          %v4050 = vunpack.c.h.bf16 %v3610
          %v4051 = vunpack.c.l.bf16 %v3611
          %v4052 = vunpack.c.h.bf16 %v3611
          %v4053 = vunpack.c.l.bf16 %v3612
          %v4054 = vunpack.c.h.bf16 %v3612
          %v4055 = vunpack.c.l.bf16 %v3613
          %v4056 = vunpack.c.h.bf16 %v3613
          %v4057 = vunpack.c.l.bf16 %v3614
          %v4058 = vunpack.c.h.bf16 %v3614
          %v4059 = vunpack.c.l.bf16 %v3615
          %v4060 = vunpack.c.h.bf16 %v3615
          %v4061 = vunpack.c.l.bf16 %v3616
          %v4062 = vunpack.c.h.bf16 %v3616
          %v4063 = vunpack.c.l.bf16 %v3617
          %v4064 = vunpack.c.h.bf16 %v3617
          %v4065 = vunpack.c.l.bf16 %v3618
          %v4066 = vunpack.c.h.bf16 %v3618
          %v4067 = vunpack.c.l.bf16 %v3619
          %v4068 = vunpack.c.h.bf16 %v3619
          %v4069 = vunpack.c.l.bf16 %v3620
          %v4070 = vunpack.c.h.bf16 %v3620
          %v4071 = vunpack.c.l.bf16 %v3621
          %v4072 = vunpack.c.h.bf16 %v3621
          %v4073 = vunpack.c.l.bf16 %v3622
          %v4074 = vunpack.c.h.bf16 %v3622
          %v4075 = vunpack.c.l.bf16 %v3623
          %v4076 = vunpack.c.h.bf16 %v3623
          %v4077 = vunpack.c.l.bf16 %v3624
          %v4078 = vunpack.c.h.bf16 %v3624
          %v4079 = vunpack.c.l.bf16 %v3625
          %v4080 = vunpack.c.h.bf16 %v3625
          %v4081 = vunpack.c.l.bf16 %v3626
          %v4082 = vunpack.c.h.bf16 %v3626
          %v4083 = vunpack.c.l.bf16 %v3627
          %v4084 = vunpack.c.h.bf16 %v3627
          %v4085 = vunpack.c.l.bf16 %v3628
          %v4086 = vunpack.c.h.bf16 %v3628
          %v4087 = vunpack.c.l.bf16 %v3629
          %v4088 = vunpack.c.h.bf16 %v3629
          %v4089 = vunpack.c.l.bf16 %v3630
          %v4090 = vunpack.c.h.bf16 %v3630
          %v4091 = vunpack.c.l.bf16 %v3631
          %v4092 = vunpack.c.h.bf16 %v3631
          %v4093 = vunpack.c.l.bf16 %v3632
          %v4094 = vunpack.c.h.bf16 %v3632
          %v4095 = vunpack.c.l.bf16 %v3633
          %v4096 = vunpack.c.h.bf16 %v3633
          %v4097 = vunpack.c.l.bf16 %v3634
          %v4098 = vunpack.c.h.bf16 %v3634
          %v4099 = vunpack.c.l.bf16 %v3635
          %v4100 = vunpack.c.h.bf16 %v3635
          %v4101 = vunpack.c.l.bf16 %v3636
          %v4102 = vunpack.c.h.bf16 %v3636
          %v4103 = vunpack.c.l.bf16 %v3637
          %v4104 = vunpack.c.h.bf16 %v3637
          %v4105 = vunpack.c.l.bf16 %v3638
          %v4106 = vunpack.c.h.bf16 %v3638
          %v4107 = vunpack.c.l.bf16 %v3639
          %v4108 = vunpack.c.h.bf16 %v3639
          %v4109 = vunpack.c.l.bf16 %v3640
          %v4110 = vunpack.c.h.bf16 %v3640
          %v4111 = vunpack.c.l.bf16 %v3641
          %v4112 = vunpack.c.h.bf16 %v3641
          %v4113 = vunpack.c.l.bf16 %v3642
          %v4114 = vunpack.c.h.bf16 %v3642
          %v4115 = vunpack.c.l.bf16 %v3643
          %v4116 = vunpack.c.h.bf16 %v3643
          %v4117 = vunpack.c.l.bf16 %v3644
          %v4118 = vunpack.c.h.bf16 %v3644
          %v4119 = vunpack.c.l.bf16 %v3645
          %v4120 = vunpack.c.h.bf16 %v3645
          %v4121 = vunpack.c.l.bf16 %v3646
          %v4122 = vunpack.c.h.bf16 %v3646
          %v4123 = vunpack.c.l.bf16 %v3647
          %v4124 = vunpack.c.h.bf16 %v3647
          %v4125 = vunpack.c.l.bf16 %v3648
          %v4126 = vunpack.c.h.bf16 %v3648
          %v4127 = vunpack.c.l.bf16 %v3649
          %v4128 = vunpack.c.h.bf16 %v3649
          %v4129 = vunpack.c.l.bf16 %v3650
          %v4130 = vunpack.c.h.bf16 %v3650
          %v4131 = vunpack.c.l.bf16 %v3651
          %v4132 = vunpack.c.h.bf16 %v3651
          %v4133 = vunpack.c.l.bf16 %v3652
          %v4134 = vunpack.c.h.bf16 %v3652
          %v4135 = vunpack.c.l.bf16 %v3653
          %v4136 = vunpack.c.h.bf16 %v3653
          %v4137 = vunpack.c.l.bf16 %v3654
          %v4138 = vunpack.c.h.bf16 %v3654
          %v4139 = vunpack.c.l.bf16 %v3655
          %v4140 = vunpack.c.h.bf16 %v3655
          %v4141 = vunpack.c.l.bf16 %v3656
          %v4142 = vunpack.c.h.bf16 %v3656
          %v4143 = vunpack.c.l.bf16 %v3657
          %v4144 = vunpack.c.h.bf16 %v3657
          %v4145 = vunpack.c.l.bf16 %v3658
          %v4146 = vunpack.c.h.bf16 %v3658
          %v4147 = vunpack.c.l.bf16 %v3659
          %v4148 = vunpack.c.h.bf16 %v3659
          %v4149 = vunpack.c.l.bf16 %v3660
          %v4150 = vunpack.c.h.bf16 %v3660
          %v4151 = vunpack.c.l.bf16 %v3661
          %v4152 = vunpack.c.h.bf16 %v3661
          %v4153 = vunpack.c.l.bf16 %v3662
          %v4154 = vunpack.c.h.bf16 %v3662
          %v4155 = vunpack.c.l.bf16 %v3663
          %v4156 = vunpack.c.h.bf16 %v3663
          %v4157 = vunpack.c.l.bf16 %v3664
          %v4158 = vunpack.c.h.bf16 %v3664
          %v4159 = vunpack.c.l.bf16 %v3665
          %v4160 = vunpack.c.h.bf16 %v3665
          %v4161 = vunpack.c.l.bf16 %v3666
          %v4162 = vunpack.c.h.bf16 %v3666
          %v4163 = vunpack.c.l.bf16 %v3667
          %v4164 = vunpack.c.h.bf16 %v3667
          %v4165 = vunpack.c.l.bf16 %v3668
          %v4166 = vunpack.c.h.bf16 %v3668
          %v4167 = vunpack.c.l.bf16 %v3669
          %v4168 = vunpack.c.h.bf16 %v3669
          %v4169 = vunpack.c.l.bf16 %v3670
          %v4170 = vunpack.c.h.bf16 %v3670
          %v4171 = vunpack.c.l.bf16 %v3671
          %v4172 = vunpack.c.h.bf16 %v3671
          %v4173 = vunpack.c.l.bf16 %v3672
          %v4174 = vunpack.c.h.bf16 %v3672
          %v4175 = vunpack.c.l.bf16 %v3673
          %v4176 = vunpack.c.h.bf16 %v3673
          %v4177 = vunpack.c.l.bf16 %v3674
          %v4178 = vunpack.c.h.bf16 %v3674
          %v4179 = vunpack.c.l.bf16 %v3675
          %v4180 = vunpack.c.h.bf16 %v3675
          %v4181 = vunpack.c.l.bf16 %v3676
          %v4182 = vunpack.c.h.bf16 %v3676
          %v4183 = vunpack.c.l.bf16 %v3677
          %v4184 = vunpack.c.h.bf16 %v3677
          %v4185 = vunpack.c.l.bf16 %v3678
          %v4186 = vunpack.c.h.bf16 %v3678
          %v4187 = vunpack.c.l.bf16 %v3679
          %v4188 = vunpack.c.h.bf16 %v3679
          %v4189 = vunpack.c.l.bf16 %v3680
          %v4190 = vunpack.c.h.bf16 %v3680
          %v4191 = vunpack.c.l.bf16 %v3681
          %v4192 = vunpack.c.h.bf16 %v3681
          %v4193 = vunpack.c.l.bf16 %v3682
          %v4194 = vunpack.c.h.bf16 %v3682
          %4195 = vmatprep.subr.mxu0 %v3684
          %4196 = vmatpush1.msra.mxu0 %v3683
          %4197 = vmatprep.subr.mxu0 %v3686
          %4198 = vmatpush1.msra.mxu0 %v3685
          %4199 = vmatprep.subr.mxu0 %v3688
          %4200 = vmatpush1.msra.mxu0 %v3687
          %4201 = vmatprep.subr.mxu0 %v3690
          %4202 = vmatpush1.msra.mxu0 %v3689
          %4203 = vmatprep.subr.mxu0 %v3692
          %4204 = vmatpush1.msra.mxu0 %v3691
          %4205 = vmatprep.subr.mxu0 %v3694
          %4206 = vmatpush1.msra.mxu0 %v3693
          %4207 = vmatprep.subr.mxu0 %v3696
          %4208 = vmatpush1.msra.mxu0 %v3695
          %4209 = vmatprep.subr.mxu0 %v3698
          %4210 = vmatpush1.msra.mxu0 %v3697
          %4211 = vmatprep.subr.mxu0 %v3700
          %4212 = vmatpush1.msra.mxu0 %v3699
          %4213 = vmatprep.subr.mxu0 %v3702
          %4214 = vmatpush1.msra.mxu0 %v3701
          %4215 = vmatprep.subr.mxu0 %v3704
          %4216 = vmatpush1.msra.mxu0 %v3703
          %4217 = vmatprep.subr.mxu0 %v3706
          %4218 = vmatpush1.msra.mxu0 %v3705
          %4219 = vmatprep.subr.mxu0 %v3708
          %4220 = vmatpush1.msra.mxu0 %v3707
          %4221 = vmatprep.subr.mxu0 %v3710
          %4222 = vmatpush1.msra.mxu0 %v3709
          %4223 = vmatprep.subr.mxu0 %v3712
          %4224 = vmatpush1.msra.mxu0 %v3711
          %4225 = vmatprep.subr.mxu0 %v3714
          %4226 = vmatpush1.msra.mxu0 %v3713
          %4227 = vmatprep.subr.mxu0 %v3716
          %4228 = vmatpush1.msra.mxu0 %v3715
          %4229 = vmatprep.subr.mxu0 %v3718
          %4230 = vmatpush1.msra.mxu0 %v3717
          %4231 = vmatprep.subr.mxu0 %v3720
          %4232 = vmatpush1.msra.mxu0 %v3719
          %4233 = vmatprep.subr.mxu0 %v3722
          %4234 = vmatpush1.msra.mxu0 %v3721
          %4235 = vmatprep.subr.mxu0 %v3724
          %4236 = vmatpush1.msra.mxu0 %v3723
          %4237 = vmatprep.subr.mxu0 %v3726
          %4238 = vmatpush1.msra.mxu0 %v3725
          %4239 = vmatprep.subr.mxu0 %v3728
          %4240 = vmatpush1.msra.mxu0 %v3727
          %4241 = vmatprep.subr.mxu0 %v3730
          %4242 = vmatpush1.msra.mxu0 %v3729
          %4243 = vmatprep.subr.mxu0 %v3732
          %4244 = vmatpush1.msra.mxu0 %v3731
          %4245 = vmatprep.subr.mxu0 %v3734
          %4246 = vmatpush1.msra.mxu0 %v3733
          %4247 = vmatprep.subr.mxu0 %v3736
          %4248 = vmatpush1.msra.mxu0 %v3735
          %4249 = vmatprep.subr.mxu0 %v3738
          %4250 = vmatpush1.msra.mxu0 %v3737
          %4251 = vmatprep.subr.mxu0 %v3740
          %4252 = vmatpush1.msra.mxu0 %v3739
          %4253 = vmatprep.subr.mxu0 %v3742
          %4254 = vmatpush1.msra.mxu0 %v3741
          %4255 = vmatprep.subr.mxu0 %v3744
          %4256 = vmatpush1.msra.mxu0 %v3743
          %4257 = vmatprep.subr.mxu0 %v3746
          %4258 = vmatpush1.msra.mxu0 %v3745
          %4259 = vmatprep.mubr.f32.mxu0 %v3412
          %4260 = vmatmul.mubr.f32.gmra.mrb[0].mxu0 %v3411
          %v4261 = vpop.f32.mrb[0].mxu0
          %v4262 = vadd.f32 0.0, %v4261
          %v4263 = vpop.f32.mrb[0].mxu0
          %v4264 = vadd.f32 0.0, %v4263
          %4265 = vdwg.mxu0
          %4266 = vmatprep.subr.mxu0 %v3748
          %4267 = vmatpush1.msra.mxu0 %v3747
          %4268 = vmatprep.subr.mxu0 %v3750
          %4269 = vmatpush1.msra.mxu0 %v3749
          %4270 = vmatprep.subr.mxu0 %v3752
          %4271 = vmatpush1.msra.mxu0 %v3751
          %4272 = vmatprep.subr.mxu0 %v3754
          %4273 = vmatpush1.msra.mxu0 %v3753
          %4274 = vmatprep.subr.mxu0 %v3756
          %4275 = vmatpush1.msra.mxu0 %v3755
          %4276 = vmatprep.subr.mxu0 %v3758
          %4277 = vmatpush1.msra.mxu0 %v3757
          %4278 = vmatprep.subr.mxu0 %v3760
          %4279 = vmatpush1.msra.mxu0 %v3759
          %4280 = vmatprep.subr.mxu0 %v3762
          %4281 = vmatpush1.msra.mxu0 %v3761
          %4282 = vmatprep.subr.mxu0 %v3764
          %4283 = vmatpush1.msra.mxu0 %v3763
          %4284 = vmatprep.subr.mxu0 %v3766
          %4285 = vmatpush1.msra.mxu0 %v3765
          %4286 = vmatprep.subr.mxu0 %v3768
          %4287 = vmatpush1.msra.mxu0 %v3767
          %4288 = vmatprep.subr.mxu0 %v3770
          %4289 = vmatpush1.msra.mxu0 %v3769
          %4290 = vmatprep.subr.mxu0 %v3772
          %4291 = vmatpush1.msra.mxu0 %v3771
          %4292 = vmatprep.subr.mxu0 %v3774
          %4293 = vmatpush1.msra.mxu0 %v3773
          %4294 = vmatprep.subr.mxu0 %v3776
          %4295 = vmatpush1.msra.mxu0 %v3775
          %4296 = vmatprep.subr.mxu0 %v3778
          %4297 = vmatpush1.msra.mxu0 %v3777
          %4298 = vmatprep.subr.mxu0 %v3780
          %4299 = vmatpush1.msra.mxu0 %v3779
          %4300 = vmatprep.subr.mxu0 %v3782
          %4301 = vmatpush1.msra.mxu0 %v3781
          %4302 = vmatprep.subr.mxu0 %v3784
          %4303 = vmatpush1.msra.mxu0 %v3783
          %4304 = vmatprep.subr.mxu0 %v3786
          %4305 = vmatpush1.msra.mxu0 %v3785
          %4306 = vmatprep.subr.mxu0 %v3788
          %4307 = vmatpush1.msra.mxu0 %v3787
          %4308 = vmatprep.subr.mxu0 %v3790
          %4309 = vmatpush1.msra.mxu0 %v3789
          %4310 = vmatprep.subr.mxu0 %v3792
          %4311 = vmatpush1.msra.mxu0 %v3791
          %4312 = vmatprep.subr.mxu0 %v3794
          %4313 = vmatpush1.msra.mxu0 %v3793
          %4314 = vmatprep.subr.mxu0 %v3796
          %4315 = vmatpush1.msra.mxu0 %v3795
          %4316 = vmatprep.subr.mxu0 %v3798
          %4317 = vmatpush1.msra.mxu0 %v3797
          %4318 = vmatprep.subr.mxu0 %v3800
          %4319 = vmatpush1.msra.mxu0 %v3799
          %4320 = vmatprep.subr.mxu0 %v3802
          %4321 = vmatpush1.msra.mxu0 %v3801
          %4322 = vmatprep.subr.mxu0 %v3804
          %4323 = vmatpush1.msra.mxu0 %v3803
          %4324 = vmatprep.subr.mxu0 %v3806
          %4325 = vmatpush1.msra.mxu0 %v3805
          %4326 = vmatprep.subr.mxu0 %v3808
          %4327 = vmatpush1.msra.mxu0 %v3807
          %4328 = vmatprep.subr.mxu0 %v3810
          %4329 = vmatpush1.msra.mxu0 %v3809
          %4330 = vmatprep.mubr.f32.mxu0 %v3414
          %4331 = vmatmul.mubr.f32.gmra.mrb[0].mxu0 %v3413
          %v4332 = vpop.f32.mrb[0].mxu0
          %v4333 = vadd.f32 %v4262, %v4332
          %v4334 = vpop.f32.mrb[0].mxu0
          %v4335 = vadd.f32 %v4264, %v4334
          %4336 = vdwg.mxu0
          %4337 = vmatprep.subr.mxu0 %v3812
          %4338 = vmatpush1.msra.mxu0 %v3811
          %4339 = vmatprep.subr.mxu0 %v3814
          %4340 = vmatpush1.msra.mxu0 %v3813
          %4341 = vmatprep.subr.mxu0 %v3816
          %4342 = vmatpush1.msra.mxu0 %v3815
          %4343 = vmatprep.subr.mxu0 %v3818
          %4344 = vmatpush1.msra.mxu0 %v3817
          %4345 = vmatprep.subr.mxu0 %v3820
          %4346 = vmatpush1.msra.mxu0 %v3819
          %4347 = vmatprep.subr.mxu0 %v3822
          %4348 = vmatpush1.msra.mxu0 %v3821
          %4349 = vmatprep.subr.mxu0 %v3824
          %4350 = vmatpush1.msra.mxu0 %v3823
          %4351 = vmatprep.subr.mxu0 %v3826
          %4352 = vmatpush1.msra.mxu0 %v3825
          %4353 = vmatprep.subr.mxu0 %v3828
          %4354 = vmatpush1.msra.mxu0 %v3827
          %4355 = vmatprep.subr.mxu0 %v3830
          %4356 = vmatpush1.msra.mxu0 %v3829
          %4357 = vmatprep.subr.mxu0 %v3832
          %4358 = vmatpush1.msra.mxu0 %v3831
          %4359 = vmatprep.subr.mxu0 %v3834
          %4360 = vmatpush1.msra.mxu0 %v3833
          %4361 = vmatprep.subr.mxu0 %v3836
          %4362 = vmatpush1.msra.mxu0 %v3835
          %4363 = vmatprep.subr.mxu0 %v3838
          %4364 = vmatpush1.msra.mxu0 %v3837
          %4365 = vmatprep.subr.mxu0 %v3840
          %4366 = vmatpush1.msra.mxu0 %v3839
          %4367 = vmatprep.subr.mxu0 %v3842
          %4368 = vmatpush1.msra.mxu0 %v3841
          %4369 = vmatprep.subr.mxu0 %v3844
          %4370 = vmatpush1.msra.mxu0 %v3843
          %4371 = vmatprep.subr.mxu0 %v3846
          %4372 = vmatpush1.msra.mxu0 %v3845
          %4373 = vmatprep.subr.mxu0 %v3848
          %4374 = vmatpush1.msra.mxu0 %v3847
          %4375 = vmatprep.subr.mxu0 %v3850
          %4376 = vmatpush1.msra.mxu0 %v3849
          %4377 = vmatprep.subr.mxu0 %v3852
          %4378 = vmatpush1.msra.mxu0 %v3851
          %4379 = vmatprep.subr.mxu0 %v3854
          %4380 = vmatpush1.msra.mxu0 %v3853
          %4381 = vmatprep.subr.mxu0 %v3856
          %4382 = vmatpush1.msra.mxu0 %v3855
          %4383 = vmatprep.subr.mxu0 %v3858
          %4384 = vmatpush1.msra.mxu0 %v3857
          %4385 = vmatprep.subr.mxu0 %v3860
          %4386 = vmatpush1.msra.mxu0 %v3859
          %4387 = vmatprep.subr.mxu0 %v3862
          %4388 = vmatpush1.msra.mxu0 %v3861
          %4389 = vmatprep.subr.mxu0 %v3864
          %4390 = vmatpush1.msra.mxu0 %v3863
          %4391 = vmatprep.subr.mxu0 %v3866
          %4392 = vmatpush1.msra.mxu0 %v3865
          %4393 = vmatprep.subr.mxu0 %v3868
          %4394 = vmatpush1.msra.mxu0 %v3867
          %4395 = vmatprep.subr.mxu0 %v3870
          %4396 = vmatpush1.msra.mxu0 %v3869
          %4397 = vmatprep.subr.mxu0 %v3872
          %4398 = vmatpush1.msra.mxu0 %v3871
          %4399 = vmatprep.subr.mxu0 %v3874
          %4400 = vmatpush1.msra.mxu0 %v3873
          %4401 = vmatprep.mubr.f32.mxu0 %v3416
          %4402 = vmatmul.mubr.f32.gmra.mrb[0].mxu0 %v3415
          %v4403 = vpop.f32.mrb[0].mxu0
          %v4404 = vadd.f32 %v4333, %v4403
          %v4405 = vpop.f32.mrb[0].mxu0
          %v4406 = vadd.f32 %v4335, %v4405
          %4407 = vdwg.mxu0
          %4408 = vmatprep.subr.mxu0 %v3876
          %4409 = vmatpush1.msra.mxu0 %v3875
          %4410 = vmatprep.subr.mxu0 %v3878
          %4411 = vmatpush1.msra.mxu0 %v3877
          %4412 = vmatprep.subr.mxu0 %v3880
          %4413 = vmatpush1.msra.mxu0 %v3879
          %4414 = vmatprep.subr.mxu0 %v3882
          %4415 = vmatpush1.msra.mxu0 %v3881
          %4416 = vmatprep.subr.mxu0 %v3884
          %4417 = vmatpush1.msra.mxu0 %v3883
          %4418 = vmatprep.subr.mxu0 %v3886
          %4419 = vmatpush1.msra.mxu0 %v3885
          %4420 = vmatprep.subr.mxu0 %v3888
          %4421 = vmatpush1.msra.mxu0 %v3887
          %4422 = vmatprep.subr.mxu0 %v3890
          %4423 = vmatpush1.msra.mxu0 %v3889
          %4424 = vmatprep.subr.mxu0 %v3892
          %4425 = vmatpush1.msra.mxu0 %v3891
          %4426 = vmatprep.subr.mxu0 %v3894
          %4427 = vmatpush1.msra.mxu0 %v3893
          %4428 = vmatprep.subr.mxu0 %v3896
          %4429 = vmatpush1.msra.mxu0 %v3895
          %4430 = vmatprep.subr.mxu0 %v3898
          %4431 = vmatpush1.msra.mxu0 %v3897
          %4432 = vmatprep.subr.mxu0 %v3900
          %4433 = vmatpush1.msra.mxu0 %v3899
          %4434 = vmatprep.subr.mxu0 %v3902
          %4435 = vmatpush1.msra.mxu0 %v3901
          %4436 = vmatprep.subr.mxu0 %v3904
          %4437 = vmatpush1.msra.mxu0 %v3903
          %4438 = vmatprep.subr.mxu0 %v3906
          %4439 = vmatpush1.msra.mxu0 %v3905
          %4440 = vmatprep.subr.mxu0 %v3908
          %4441 = vmatpush1.msra.mxu0 %v3907
          %4442 = vmatprep.subr.mxu0 %v3910
          %4443 = vmatpush1.msra.mxu0 %v3909
          %4444 = vmatprep.subr.mxu0 %v3912
          %4445 = vmatpush1.msra.mxu0 %v3911
          %4446 = vmatprep.subr.mxu0 %v3914
          %4447 = vmatpush1.msra.mxu0 %v3913
          %4448 = vmatprep.subr.mxu0 %v3916
          %4449 = vmatpush1.msra.mxu0 %v3915
          %4450 = vmatprep.subr.mxu0 %v3918
          %4451 = vmatpush1.msra.mxu0 %v3917
          %4452 = vmatprep.subr.mxu0 %v3920
          %4453 = vmatpush1.msra.mxu0 %v3919
          %4454 = vmatprep.subr.mxu0 %v3922
          %4455 = vmatpush1.msra.mxu0 %v3921
          %4456 = vmatprep.subr.mxu0 %v3924
          %4457 = vmatpush1.msra.mxu0 %v3923
          %4458 = vmatprep.subr.mxu0 %v3926
          %4459 = vmatpush1.msra.mxu0 %v3925
          %4460 = vmatprep.subr.mxu0 %v3928
          %4461 = vmatpush1.msra.mxu0 %v3927
          %4462 = vmatprep.subr.mxu0 %v3930
          %4463 = vmatpush1.msra.mxu0 %v3929
          %4464 = vmatprep.subr.mxu0 %v3932
          %4465 = vmatpush1.msra.mxu0 %v3931
          %4466 = vmatprep.subr.mxu0 %v3934
          %4467 = vmatpush1.msra.mxu0 %v3933
          %4468 = vmatprep.subr.mxu0 %v3936
          %4469 = vmatpush1.msra.mxu0 %v3935
          %4470 = vmatprep.subr.mxu0 %v3938
          %4471 = vmatpush1.msra.mxu0 %v3937
          %4472 = vmatprep.mubr.f32.mxu0 %v3418
          %4473 = vmatmul.mubr.f32.gmra.mrb[0].mxu0 %v3417
          %v4474 = vpop.f32.mrb[0].mxu0
          %v4475 = vadd.f32 %v4404, %v4474
          %v4476 = vpop.f32.mrb[0].mxu0
          %v4477 = vadd.f32 %v4406, %v4476
          %4478 = vdwg.mxu0
          %4479 = vmatprep.subr.mxu0 %v3940
          %4480 = vmatpush1.msra.mxu0 %v3939
          %4481 = vmatprep.subr.mxu0 %v3942
          %4482 = vmatpush1.msra.mxu0 %v3941
          %4483 = vmatprep.subr.mxu0 %v3944
          %4484 = vmatpush1.msra.mxu0 %v3943
          %4485 = vmatprep.subr.mxu0 %v3946
          %4486 = vmatpush1.msra.mxu0 %v3945
          %4487 = vmatprep.subr.mxu0 %v3948
          %4488 = vmatpush1.msra.mxu0 %v3947
          %4489 = vmatprep.subr.mxu0 %v3950
          %4490 = vmatpush1.msra.mxu0 %v3949
          %4491 = vmatprep.subr.mxu0 %v3952
          %4492 = vmatpush1.msra.mxu0 %v3951
          %4493 = vmatprep.subr.mxu0 %v3954
          %4494 = vmatpush1.msra.mxu0 %v3953
          %4495 = vmatprep.subr.mxu0 %v3956
          %4496 = vmatpush1.msra.mxu0 %v3955
          %4497 = vmatprep.subr.mxu0 %v3958
          %4498 = vmatpush1.msra.mxu0 %v3957
          %4499 = vmatprep.subr.mxu0 %v3960
          %4500 = vmatpush1.msra.mxu0 %v3959
          %4501 = vmatprep.subr.mxu0 %v3962
          %4502 = vmatpush1.msra.mxu0 %v3961
          %4503 = vmatprep.subr.mxu0 %v3964
          %4504 = vmatpush1.msra.mxu0 %v3963
          %4505 = vmatprep.subr.mxu0 %v3966
          %4506 = vmatpush1.msra.mxu0 %v3965
          %4507 = vmatprep.subr.mxu0 %v3968
          %4508 = vmatpush1.msra.mxu0 %v3967
          %4509 = vmatprep.subr.mxu0 %v3970
          %4510 = vmatpush1.msra.mxu0 %v3969
          %4511 = vmatprep.subr.mxu0 %v3972
          %4512 = vmatpush1.msra.mxu0 %v3971
          %4513 = vmatprep.subr.mxu0 %v3974
          %4514 = vmatpush1.msra.mxu0 %v3973
          %4515 = vmatprep.subr.mxu0 %v3976
          %4516 = vmatpush1.msra.mxu0 %v3975
          %4517 = vmatprep.subr.mxu0 %v3978
          %4518 = vmatpush1.msra.mxu0 %v3977
          %4519 = vmatprep.subr.mxu0 %v3980
          %4520 = vmatpush1.msra.mxu0 %v3979
          %4521 = vmatprep.subr.mxu0 %v3982
          %4522 = vmatpush1.msra.mxu0 %v3981
          %4523 = vmatprep.subr.mxu0 %v3984
          %4524 = vmatpush1.msra.mxu0 %v3983
          %4525 = vmatprep.subr.mxu0 %v3986
          %4526 = vmatpush1.msra.mxu0 %v3985
          %4527 = vmatprep.subr.mxu0 %v3988
          %4528 = vmatpush1.msra.mxu0 %v3987
          %4529 = vmatprep.subr.mxu0 %v3990
          %4530 = vmatpush1.msra.mxu0 %v3989
          %4531 = vmatprep.subr.mxu0 %v3992
          %4532 = vmatpush1.msra.mxu0 %v3991
          %4533 = vmatprep.subr.mxu0 %v3994
          %4534 = vmatpush1.msra.mxu0 %v3993
          %4535 = vmatprep.subr.mxu0 %v3996
          %4536 = vmatpush1.msra.mxu0 %v3995
          %4537 = vmatprep.subr.mxu0 %v3998
          %4538 = vmatpush1.msra.mxu0 %v3997
          %4539 = vmatprep.subr.mxu0 %v4000
          %4540 = vmatpush1.msra.mxu0 %v3999
          %4541 = vmatprep.subr.mxu0 %v4002
          %4542 = vmatpush1.msra.mxu0 %v4001
          %4543 = vmatprep.mubr.f32.mxu0 %v3420
          %4544 = vmatmul.mubr.f32.gmra.mrb[0].mxu0 %v3419
          %v4545 = vpop.f32.mrb[0].mxu0
          %v4546 = vadd.f32 %v4475, %v4545
          %v4547 = vpop.f32.mrb[0].mxu0
          %v4548 = vadd.f32 %v4477, %v4547
          %4549 = vdwg.mxu0
          %4550 = vmatprep.subr.mxu0 %v4004
          %4551 = vmatpush1.msra.mxu0 %v4003
          %4552 = vmatprep.subr.mxu0 %v4006
          %4553 = vmatpush1.msra.mxu0 %v4005
          %4554 = vmatprep.subr.mxu0 %v4008
          %4555 = vmatpush1.msra.mxu0 %v4007
          %4556 = vmatprep.subr.mxu0 %v4010
          %4557 = vmatpush1.msra.mxu0 %v4009
          %4558 = vmatprep.subr.mxu0 %v4012
          %4559 = vmatpush1.msra.mxu0 %v4011
          %4560 = vmatprep.subr.mxu0 %v4014
          %4561 = vmatpush1.msra.mxu0 %v4013
          %4562 = vmatprep.subr.mxu0 %v4016
          %4563 = vmatpush1.msra.mxu0 %v4015
          %4564 = vmatprep.subr.mxu0 %v4018
          %4565 = vmatpush1.msra.mxu0 %v4017
          %4566 = vmatprep.subr.mxu0 %v4020
          %4567 = vmatpush1.msra.mxu0 %v4019
          %4568 = vmatprep.subr.mxu0 %v4022
          %4569 = vmatpush1.msra.mxu0 %v4021
          %4570 = vmatprep.subr.mxu0 %v4024
          %4571 = vmatpush1.msra.mxu0 %v4023
          %4572 = vmatprep.subr.mxu0 %v4026
          %4573 = vmatpush1.msra.mxu0 %v4025
          %4574 = vmatprep.subr.mxu0 %v4028
          %4575 = vmatpush1.msra.mxu0 %v4027
          %4576 = vmatprep.subr.mxu0 %v4030
          %4577 = vmatpush1.msra.mxu0 %v4029
          %4578 = vmatprep.subr.mxu0 %v4032
          %4579 = vmatpush1.msra.mxu0 %v4031
          %4580 = vmatprep.subr.mxu0 %v4034
          %4581 = vmatpush1.msra.mxu0 %v4033
          %4582 = vmatprep.subr.mxu0 %v4036
          %4583 = vmatpush1.msra.mxu0 %v4035
          %4584 = vmatprep.subr.mxu0 %v4038
          %4585 = vmatpush1.msra.mxu0 %v4037
          %4586 = vmatprep.subr.mxu0 %v4040
          %4587 = vmatpush1.msra.mxu0 %v4039
          %4588 = vmatprep.subr.mxu0 %v4042
          %4589 = vmatpush1.msra.mxu0 %v4041
          %4590 = vmatprep.subr.mxu0 %v4044
          %4591 = vmatpush1.msra.mxu0 %v4043
          %4592 = vmatprep.subr.mxu0 %v4046
          %4593 = vmatpush1.msra.mxu0 %v4045
          %4594 = vmatprep.subr.mxu0 %v4048
          %4595 = vmatpush1.msra.mxu0 %v4047
          %4596 = vmatprep.subr.mxu0 %v4050
          %4597 = vmatpush1.msra.mxu0 %v4049
          %4598 = vmatprep.subr.mxu0 %v4052
          %4599 = vmatpush1.msra.mxu0 %v4051
          %4600 = vmatprep.subr.mxu0 %v4054
          %4601 = vmatpush1.msra.mxu0 %v4053
          %4602 = vmatprep.subr.mxu0 %v4056
          %4603 = vmatpush1.msra.mxu0 %v4055
          %4604 = vmatprep.subr.mxu0 %v4058
          %4605 = vmatpush1.msra.mxu0 %v4057
          %4606 = vmatprep.subr.mxu0 %v4060
          %4607 = vmatpush1.msra.mxu0 %v4059
          %4608 = vmatprep.subr.mxu0 %v4062
          %4609 = vmatpush1.msra.mxu0 %v4061
          %4610 = vmatprep.subr.mxu0 %v4064
          %4611 = vmatpush1.msra.mxu0 %v4063
          %4612 = vmatprep.subr.mxu0 %v4066
          %4613 = vmatpush1.msra.mxu0 %v4065
          %4614 = vmatprep.mubr.f32.mxu0 %v3422
          %4615 = vmatmul.mubr.f32.gmra.mrb[0].mxu0 %v3421
          %v4616 = vpop.f32.mrb[0].mxu0
          %v4617 = vadd.f32 %v4546, %v4616
          %v4618 = vpop.f32.mrb[0].mxu0
          %v4619 = vadd.f32 %v4548, %v4618
          %4620 = vdwg.mxu0
          %4621 = vmatprep.subr.mxu0 %v4068
          %4622 = vmatpush1.msra.mxu0 %v4067
          %4623 = vmatprep.subr.mxu0 %v4070
          %4624 = vmatpush1.msra.mxu0 %v4069
          %4625 = vmatprep.subr.mxu0 %v4072
          %4626 = vmatpush1.msra.mxu0 %v4071
          %4627 = vmatprep.subr.mxu0 %v4074
          %4628 = vmatpush1.msra.mxu0 %v4073
          %4629 = vmatprep.subr.mxu0 %v4076
          %4630 = vmatpush1.msra.mxu0 %v4075
          %4631 = vmatprep.subr.mxu0 %v4078
          %4632 = vmatpush1.msra.mxu0 %v4077
          %4633 = vmatprep.subr.mxu0 %v4080
          %4634 = vmatpush1.msra.mxu0 %v4079
          %4635 = vmatprep.subr.mxu0 %v4082
          %4636 = vmatpush1.msra.mxu0 %v4081
          %4637 = vmatprep.subr.mxu0 %v4084
          %4638 = vmatpush1.msra.mxu0 %v4083
          %4639 = vmatprep.subr.mxu0 %v4086
          %4640 = vmatpush1.msra.mxu0 %v4085
          %4641 = vmatprep.subr.mxu0 %v4088
          %4642 = vmatpush1.msra.mxu0 %v4087
          %4643 = vmatprep.subr.mxu0 %v4090
          %4644 = vmatpush1.msra.mxu0 %v4089
          %4645 = vmatprep.subr.mxu0 %v4092
          %4646 = vmatpush1.msra.mxu0 %v4091
          %4647 = vmatprep.subr.mxu0 %v4094
          %4648 = vmatpush1.msra.mxu0 %v4093
          %4649 = vmatprep.subr.mxu0 %v4096
          %4650 = vmatpush1.msra.mxu0 %v4095
          %4651 = vmatprep.subr.mxu0 %v4098
          %4652 = vmatpush1.msra.mxu0 %v4097
          %4653 = vmatprep.subr.mxu0 %v4100
          %4654 = vmatpush1.msra.mxu0 %v4099
          %4655 = vmatprep.subr.mxu0 %v4102
          %4656 = vmatpush1.msra.mxu0 %v4101
          %4657 = vmatprep.subr.mxu0 %v4104
          %4658 = vmatpush1.msra.mxu0 %v4103
          %4659 = vmatprep.subr.mxu0 %v4106
          %4660 = vmatpush1.msra.mxu0 %v4105
          %4661 = vmatprep.subr.mxu0 %v4108
          %4662 = vmatpush1.msra.mxu0 %v4107
          %4663 = vmatprep.subr.mxu0 %v4110
          %4664 = vmatpush1.msra.mxu0 %v4109
          %4665 = vmatprep.subr.mxu0 %v4112
          %4666 = vmatpush1.msra.mxu0 %v4111
          %4667 = vmatprep.subr.mxu0 %v4114
          %4668 = vmatpush1.msra.mxu0 %v4113
          %4669 = vmatprep.subr.mxu0 %v4116
          %4670 = vmatpush1.msra.mxu0 %v4115
          %4671 = vmatprep.subr.mxu0 %v4118
          %4672 = vmatpush1.msra.mxu0 %v4117
          %4673 = vmatprep.subr.mxu0 %v4120
          %4674 = vmatpush1.msra.mxu0 %v4119
          %4675 = vmatprep.subr.mxu0 %v4122
          %4676 = vmatpush1.msra.mxu0 %v4121
          %4677 = vmatprep.subr.mxu0 %v4124
          %4678 = vmatpush1.msra.mxu0 %v4123
          %4679 = vmatprep.subr.mxu0 %v4126
          %4680 = vmatpush1.msra.mxu0 %v4125
          %4681 = vmatprep.subr.mxu0 %v4128
          %4682 = vmatpush1.msra.mxu0 %v4127
          %4683 = vmatprep.subr.mxu0 %v4130
          %4684 = vmatpush1.msra.mxu0 %v4129
          %4685 = vmatprep.mubr.f32.mxu0 %v3424
          %4686 = vmatmul.mubr.f32.gmra.mrb[0].mxu0 %v3423
          %v4687 = vpop.f32.mrb[0].mxu0
          %v4688 = vadd.f32 %v4617, %v4687
          %v4689 = vpop.f32.mrb[0].mxu0
          %v4690 = vadd.f32 %v4619, %v4689
          %4691 = vdwg.mxu0
          %4692 = vmatprep.subr.mxu0 %v4132
          %4693 = vmatpush1.msra.mxu0 %v4131
          %4694 = vmatprep.subr.mxu0 %v4134
          %4695 = vmatpush1.msra.mxu0 %v4133
          %4696 = vmatprep.subr.mxu0 %v4136
          %4697 = vmatpush1.msra.mxu0 %v4135
          %4698 = vmatprep.subr.mxu0 %v4138
          %4699 = vmatpush1.msra.mxu0 %v4137
          %4700 = vmatprep.subr.mxu0 %v4140
          %4701 = vmatpush1.msra.mxu0 %v4139
          %4702 = vmatprep.subr.mxu0 %v4142
          %4703 = vmatpush1.msra.mxu0 %v4141
          %4704 = vmatprep.subr.mxu0 %v4144
          %4705 = vmatpush1.msra.mxu0 %v4143
          %4706 = vmatprep.subr.mxu0 %v4146
          %4707 = vmatpush1.msra.mxu0 %v4145
          %4708 = vmatprep.subr.mxu0 %v4148
          %4709 = vmatpush1.msra.mxu0 %v4147
          %4710 = vmatprep.subr.mxu0 %v4150
          %4711 = vmatpush1.msra.mxu0 %v4149
          %4712 = vmatprep.subr.mxu0 %v4152
          %4713 = vmatpush1.msra.mxu0 %v4151
          %4714 = vmatprep.subr.mxu0 %v4154
          %4715 = vmatpush1.msra.mxu0 %v4153
          %4716 = vmatprep.subr.mxu0 %v4156
          %4717 = vmatpush1.msra.mxu0 %v4155
          %4718 = vmatprep.subr.mxu0 %v4158
          %4719 = vmatpush1.msra.mxu0 %v4157
          %4720 = vmatprep.subr.mxu0 %v4160
          %4721 = vmatpush1.msra.mxu0 %v4159
          %4722 = vmatprep.subr.mxu0 %v4162
          %4723 = vmatpush1.msra.mxu0 %v4161
          %4724 = vmatprep.subr.mxu0 %v4164
          %4725 = vmatpush1.msra.mxu0 %v4163
          %4726 = vmatprep.subr.mxu0 %v4166
          %4727 = vmatpush1.msra.mxu0 %v4165
          %4728 = vmatprep.subr.mxu0 %v4168
          %4729 = vmatpush1.msra.mxu0 %v4167
          %4730 = vmatprep.subr.mxu0 %v4170
          %4731 = vmatpush1.msra.mxu0 %v4169
          %4732 = vmatprep.subr.mxu0 %v4172
          %4733 = vmatpush1.msra.mxu0 %v4171
          %4734 = vmatprep.subr.mxu0 %v4174
          %4735 = vmatpush1.msra.mxu0 %v4173
          %4736 = vmatprep.subr.mxu0 %v4176
          %4737 = vmatpush1.msra.mxu0 %v4175
          %4738 = vmatprep.subr.mxu0 %v4178
          %4739 = vmatpush1.msra.mxu0 %v4177
          %4740 = vmatprep.subr.mxu0 %v4180
          %4741 = vmatpush1.msra.mxu0 %v4179
          %4742 = vmatprep.subr.mxu0 %v4182
          %4743 = vmatpush1.msra.mxu0 %v4181
          %4744 = vmatprep.subr.mxu0 %v4184
          %4745 = vmatpush1.msra.mxu0 %v4183
          %4746 = vmatprep.subr.mxu0 %v4186
          %4747 = vmatpush1.msra.mxu0 %v4185
          %4748 = vmatprep.subr.mxu0 %v4188
          %4749 = vmatpush1.msra.mxu0 %v4187
          %4750 = vmatprep.subr.mxu0 %v4190
          %4751 = vmatpush1.msra.mxu0 %v4189
          %4752 = vmatprep.subr.mxu0 %v4192
          %4753 = vmatpush1.msra.mxu0 %v4191
          %4754 = vmatprep.subr.mxu0 %v4194
          %4755 = vmatpush1.msra.mxu0 %v4193
          %4756 = vmatprep.mubr.f32.mxu0 %v3426
          %4757 = vmatmul.mubr.f32.gmra.mrb[0].mxu0 %v3425
          %v4758 = vpop.f32.mrb[0].mxu0
          %v4759 = vadd.f32 %v4688, %v4758
          %v4760 = vpop.f32.mrb[0].mxu0
          %v4761 = vadd.f32 %v4690, %v4760
          %4762 = vdwg.mxu0
          %v4763 = vld [vmem:[%s4] sm:$0x3]
          %v4765 = vlaneseq
          %v4766 = vshrl.u32 %v4765, 7
          %v4767 = vsub.s32 0, %v4766
          %v4768 = vrot.slane %v4763, %v4767
          %v4769 = vlaneseq
          %v4770 = vshrl.u32 %v4769, 7
          %v4771 = vsub.s32 1, %v4770
          %v4772 = vrot.slane %v4763, %v4771
          %v4775 = vmul.f32 %v4759, %v4768
          %v4776 = vmul.f32 %v4761, %v4772
          %v4777 = vld [vmem:[%s5] sm:$0x3]
          %v4779 = vlaneseq
          %v4780 = vshrl.u32 %v4779, 7
          %v4781 = vsub.s32 0, %v4780
          %v4782 = vrot.slane %v4777, %v4781
          %v4783 = vlaneseq
          %v4784 = vshrl.u32 %v4783, 7
          %v4785 = vsub.s32 1, %v4784
          %v4786 = vrot.slane %v4777, %v4785
          %v4789 = vadd.f32 %v4775, %v4782
          %v4790 = vadd.f32 %v4776, %v4786
          %v4793 = vcombine.low %v4789, %v4790
          %v4795 = vunpack.c.l.s4 1966171168
          %v4796 = vunpack.c.0.s8 %v4795
          %v4797 = vlaneseq
          %v4798 = vshrl.u32 %v4797, 7
          %v4799 = vsub.s32 %v4796, %v4798
          %v4800 = vrot.slane %v4793, %v4799
          %v4802 = vunpack.c.l.s4 1966171168
          %v4803 = vunpack.c.0.s8 %v4802
          %v4804 = vlaneseq
          %v4805 = vshrl.u32 %v4804, 7
          %v4806 = vsub.s32 %v4803, %v4805
          %v4807 = vrot.slane %v4800, %v4806
          %v4809 = vlaneseq
          %vm4810 = vcmp.ge.s32.totalorder %v4809, 0
          %vm4811 = vcmp.lt.s32.totalorder %v4809, 256
          %vm4812 = vmand %vm4810, %vm4811
          %4813 = vst.msk [vmem:[%s368] sm:$0x3] %vm4812, %v4807
          %v4814 = vmax.f32 %v4789, 0.0
          %v4815 = vmax.f32 %v4790, 0.0
          %v4816 = vld [vmem:[%s6] sm:$0xff]
          %v4817 = vld [vmem:[%s6 + $0x8] sm:$0xff]
          %v4818 = vld [vmem:[%s6 + $0x10] sm:$0xff]
          %v4819 = vld [vmem:[%s6 + $0x18] sm:$0xff]
          %v4820 = vld [vmem:[%s6 + $0x20] sm:$0xff]
          %v4821 = vld [vmem:[%s6 + $0x28] sm:$0xff]
          %v4822 = vld [vmem:[%s6 + $0x30] sm:$0xff]
          %v4823 = vld [vmem:[%s6 + $0x38] sm:$0xff]
          %v4824 = vld [vmem:[%s6 + $0x40] sm:$0xff]
          %v4825 = vld [vmem:[%s6 + $0x48] sm:$0xff]
          %v4826 = vld [vmem:[%s6 + $0x50] sm:$0xff]
          %v4827 = vld [vmem:[%s6 + $0x58] sm:$0xff]
          %v4828 = vld [vmem:[%s6 + $0x60] sm:$0xff]
          %v4829 = vld [vmem:[%s6 + $0x68] sm:$0xff]
          %v4830 = vld [vmem:[%s6 + $0x70] sm:$0xff]
          %v4831 = vld [vmem:[%s6 + $0x78] sm:$0xff]
          %v4832 = vld [vmem:[%s6 + $0x80] sm:$0xff]
          %v4833 = vld [vmem:[%s6 + $0x88] sm:$0xff]
          %v4834 = vld [vmem:[%s6 + $0x90] sm:$0xff]
          %v4835 = vld [vmem:[%s6 + $0x98] sm:$0xff]
          %v4836 = vld [vmem:[%s6 + $0xa0] sm:$0xff]
          %v4837 = vld [vmem:[%s6 + $0xa8] sm:$0xff]
          %v4838 = vld [vmem:[%s6 + $0xb0] sm:$0xff]
          %v4839 = vld [vmem:[%s6 + $0xb8] sm:$0xff]
          %v4840 = vld [vmem:[%s6 + $0xc0] sm:$0xff]
          %v4841 = vld [vmem:[%s6 + $0xc8] sm:$0xff]
          %v4842 = vld [vmem:[%s6 + $0xd0] sm:$0xff]
          %v4843 = vld [vmem:[%s6 + $0xd8] sm:$0xff]
          %v4844 = vld [vmem:[%s6 + $0xe0] sm:$0xff]
          %v4845 = vld [vmem:[%s6 + $0xe8] sm:$0xff]
          %v4846 = vld [vmem:[%s6 + $0xf0] sm:$0xff]
          %v4847 = vld [vmem:[%s6 + $0xf8] sm:$0xff]
          %v4848 = vld [vmem:[%s7] sm:$0x1]
          %4849 = vmatprep.subr.mxu0 0.0
          %4850 = vmatpush1.msra.mxu0 %v4816
          %4851 = vmatprep.subr.mxu0 0.0
          %4852 = vmatpush1.msra.mxu0 %v4817
          %4853 = vmatprep.subr.mxu0 0.0
          %4854 = vmatpush1.msra.mxu0 %v4818
          %4855 = vmatprep.subr.mxu0 0.0
          %4856 = vmatpush1.msra.mxu0 %v4819
          %4857 = vmatprep.subr.mxu0 0.0
          %4858 = vmatpush1.msra.mxu0 %v4820
          %4859 = vmatprep.subr.mxu0 0.0
          %4860 = vmatpush1.msra.mxu0 %v4821
          %4861 = vmatprep.subr.mxu0 0.0
          %4862 = vmatpush1.msra.mxu0 %v4822
          %4863 = vmatprep.subr.mxu0 0.0
          %4864 = vmatpush1.msra.mxu0 %v4823
          %4865 = vmatprep.subr.mxu0 0.0
          %4866 = vmatpush1.msra.mxu0 %v4824
          %4867 = vmatprep.subr.mxu0 0.0
          %4868 = vmatpush1.msra.mxu0 %v4825
          %4869 = vmatprep.subr.mxu0 0.0
          %4870 = vmatpush1.msra.mxu0 %v4826
          %4871 = vmatprep.subr.mxu0 0.0
          %4872 = vmatpush1.msra.mxu0 %v4827
          %4873 = vmatprep.subr.mxu0 0.0
          %4874 = vmatpush1.msra.mxu0 %v4828
          %4875 = vmatprep.subr.mxu0 0.0
          %4876 = vmatpush1.msra.mxu0 %v4829
          %4877 = vmatprep.subr.mxu0 0.0
          %4878 = vmatpush1.msra.mxu0 %v4830
          %4879 = vmatprep.subr.mxu0 0.0
          %4880 = vmatpush1.msra.mxu0 %v4831
          %4881 = vmatprep.subr.mxu0 0.0
          %4882 = vmatpush1.msra.mxu0 %v4832
          %4883 = vmatprep.subr.mxu0 0.0
          %4884 = vmatpush1.msra.mxu0 %v4833
          %4885 = vmatprep.subr.mxu0 0.0
          %4886 = vmatpush1.msra.mxu0 %v4834
          %4887 = vmatprep.subr.mxu0 0.0
          %4888 = vmatpush1.msra.mxu0 %v4835
          %4889 = vmatprep.subr.mxu0 0.0
          %4890 = vmatpush1.msra.mxu0 %v4836
          %4891 = vmatprep.subr.mxu0 0.0
          %4892 = vmatpush1.msra.mxu0 %v4837
          %4893 = vmatprep.subr.mxu0 0.0
          %4894 = vmatpush1.msra.mxu0 %v4838
          %4895 = vmatprep.subr.mxu0 0.0
          %4896 = vmatpush1.msra.mxu0 %v4839
          %4897 = vmatprep.subr.mxu0 0.0
          %4898 = vmatpush1.msra.mxu0 %v4840
          %4899 = vmatprep.subr.mxu0 0.0
          %4900 = vmatpush1.msra.mxu0 %v4841
          %4901 = vmatprep.subr.mxu0 0.0
          %4902 = vmatpush1.msra.mxu0 %v4842
          %4903 = vmatprep.subr.mxu0 0.0
          %4904 = vmatpush1.msra.mxu0 %v4843
          %4905 = vmatprep.subr.mxu0 0.0
          %4906 = vmatpush1.msra.mxu0 %v4844
          %4907 = vmatprep.subr.mxu0 0.0
          %4908 = vmatpush1.msra.mxu0 %v4845
          %4909 = vmatprep.subr.mxu0 0.0
          %4910 = vmatpush1.msra.mxu0 %v4846
          %4911 = vmatprep.subr.mxu0 0.0
          %4912 = vmatpush1.msra.mxu0 %v4847
          %4913 = vmatprep.mubr.f32.mxu0 %v4815
          %4914 = vmatmul.mubr.f32.gmra.mrb[0].mxu0 %v4814
          %v4915 = vpop.f32.mrb[0].mxu0
          %v4916 = vadd.f32 %v4848, %v4915
          %v4917 = vpop.f32.mrb[0].mxu0
          %4918 = vdwg.mxu0
          %4919 = vst [vmem:[%s354] sm:$0x1] %v4916
        $region60: #{cnn_forward.1} parent=51 // pred_fallthru
          _
        %p4920 = scmp.lt.s32.totalorder %s28, 1
        %s4921 = scalar_select %p4920, %s28, 1
        %s4922 = smul.addr %s4921, 2
        %s4923 = scalar_lea.vmem %s8, %s4922
        %s4924 = sand.u32 %s245, 1
        %s4925 = scalar_lea.sflag [#allocation4], %s4924
        %s4926 = sand.u32 %s245, 1
        %s4927 = scalar_lea.vmem [#allocation3], %s4926
        // Predicated region
        $region61: #{cnn_forward.1} parent=51 // pred_check
          %p4928 = pneg %p229
        $region62: #{cnn_forward.1} parent=51 // pred_check_branch
          %4930 = sbr.rel (%p4928) target = $region64
        $region63: #{cnn_forward.1} parent=51 // pred_region
          _
        $region64: #{cnn_forward.1} parent=51 // pred_fallthru
          _
        // Predicated region
        $region65: #{cnn_forward.1} parent=51 // pred_check
          %p4931 = pneg %p255
        $region66: #{cnn_forward.1} parent=51 // pred_check_branch
          %4933 = sbr.rel (%p4931) target = $region68
        $region67: #{cnn_forward.1} parent=51 // pred_region
          %s4935 = ssub.s32 16, 16
          %4936 = vsyncadd %s4925, %s4935
          %s4937 = smul.addr %s28, 16
          %s4938 = scalar_lea.hbm %s9, %s4937
          %s4940 = sshll.u32 %s4927, 4
          %s4941 = int_to_ptr.vmem [resolvable:$true] %s4940
          %4943 = dma.vmem_to_hbm [thread:$0]  %s4941, 16, %s4938, %s4925
        $region68: #{cnn_forward.1} parent=51 // pred_fallthru
          _
      $region52: #{cnn_forward.1} parent=5 // pred_fallthru
        _
      %p4944 = scmp.le.s32.totalorder 2, %s19
      // Predicated region
      $region69: #{cnn_forward.1} parent=5 // pred_check
        %p4945 = pneg %p4944
      $region70: #{cnn_forward.1} parent=5 // pred_check_branch
        %4947 = sbr.rel (%p4945) target = $region72
      $region71: #{cnn_forward.1} parent=5 // pred_region
        %s4948 = ssub.s32 %s19, 2
        // Predicated region
        $region73: #{cnn_forward.1} parent=71 // pred_check
          %p4949 = pneg %p235
        $region74: #{cnn_forward.1} parent=71 // pred_check_branch
          %4951 = sbr.rel (%p4949) target = $region76
        $region75: #{cnn_forward.1} parent=71 // pred_region
          %p4952 = scmp.lt.s32.totalorder %s30, 1
          %s4953 = scalar_select %p4952, %s30, 1
          %s4954 = smul.addr %s4953, 2
          %s4955 = scalar_lea.vmem %s8, %s4954
        $region76: #{cnn_forward.1} parent=71 // pred_fallthru
          _
        // Predicated region
        $region77: #{cnn_forward.1} parent=71 // pred_check
          %p4956 = pneg %p261
        $region78: #{cnn_forward.1} parent=71 // pred_check_branch
          %4958 = sbr.rel (%p4956) target = $region80
        $region79: #{cnn_forward.1} parent=71 // pred_region
          %s4959 = sand.u32 %s246, 1
          %s4960 = scalar_lea.sflag [#allocation4], %s4959
          %s4961 = sand.u32 %s246, 1
          %s4962 = scalar_lea.vmem [#allocation3], %s4961
          %4963 = dma.done %s4960, 16
        $region80: #{cnn_forward.1} parent=71 // pred_fallthru
          _
      $region72: #{cnn_forward.1} parent=5 // pred_fallthru
        _
    $region6: #{cnn_forward.1} parent=1 // loop_footer
      %s23 = sadd.s32 1, %s19
    $region7: #{cnn_forward.1} parent=1 // loop_footer_branch
      %18 = sbr.rel target = $region3
    $region8: #{cnn_forward.1} parent=1 // loop_exit
      _
    %4964 = vsyncpa [#allocation4], 1
    %s4965 = scalar_lea.sflag [#allocation4], 1
    %4966 = vsyncpa %s4965, 1

</llo_original>
